<compile_context>
chip_gen: v7x
topology: tpu7x:2x2x1
jax: 0.10.0
libtpu: 0.0.40
codegen_flags: <defaults>
</compile_context>

<pallas_src>
import numpy as np
import jax
import jax.numpy as jnp
from jax import lax
from jax.experimental import pallas as pl
from jax.experimental.pallas import tpu as pltpu

_EPS = 1e-5


def _dft_matrices(T: int):
    """rfft / irfft as dense matrices, in transposed layout so the kernel never
    needs an explicit transpose; the 3-tap conv1d (padding=1) frequency shift is
    folded into the rfft matrices."""
    Tf = T // 2 + 1
    t = np.arange(T)
    k = np.arange(Tf)
    ang = 2.0 * np.pi * np.outer(k, t) / T            # [Tf, T]
    CrT = np.cos(ang)                                  # Re X[k] = CrT @ x
    CiT = -np.sin(ang)                                 # Im X[k] = CiT @ x
    CrT_taps = np.zeros((3, Tf, T))
    CiT_taps = np.zeros((3, Tf, T))
    for j in range(3):
        for kk in range(Tf):
            m = kk + j - 1                             # conv1d padding=1 shift
            if 0 <= m < Tf:
                CrT_taps[j, kk] = CrT[m]
                CiT_taps[j, kk] = CiT[m]
    # irfft (backward norm):
    # x[t] = (1/T)[ReX0 + 2*sum_{0<k<T/2}(ReX cos - ImX sin) + ReX_{T/2}(-1)^t]
    IRrT = np.zeros((T, Tf))
    IRiT = np.zeros((T, Tf))
    for kk in range(Tf):
        c = np.cos(2.0 * np.pi * kk * t / T)
        s = np.sin(2.0 * np.pi * kk * t / T)
        if kk == 0:
            IRrT[:, kk] = 1.0 / T
        elif (T % 2 == 0) and kk == T // 2:
            IRrT[:, kk] = c / T
        else:
            IRrT[:, kk] = 2.0 * c / T
            IRiT[:, kk] = -2.0 * s / T
    return (CrT_taps.astype(np.float32), CiT_taps.astype(np.float32),
            IRrT.astype(np.float32), IRiT.astype(np.float32))


def stemgnn_block_pallas(x, params):
    B, N, T, F = x.shape
    H = params["num_heads"]
    Dh = F // H
    Tf = T // 2 + 1
    NF = N * F
    f32 = jnp.float32

    # ---------------- host-side constant packing (layout plumbing only) ------
    CrT_taps, CiT_taps, IRrT, IRiT = _dft_matrices(T)
    fftc = jnp.asarray(np.stack([CrT_taps, CiT_taps], axis=0))   # [2,3,Tf,T]
    irc = jnp.asarray(np.stack([IRrT, IRiT], axis=0))            # [2,T,Tf]

    eyeN = jnp.eye(N, dtype=f32)

    def kron_n(w):                 # [F, Fo] -> block-diag [N*F, N*Fo]
        return jnp.kron(eyeN, w.astype(f32))

    def tile_n(v):                 # [F] -> [N*F]
        return jnp.tile(v.astype(f32), N)

    W = params["spec_w"].astype(f32)                             # [2F, F, 3]
    wck = jnp.stack([
        jnp.stack([kron_n(W[:F, :, j].T) for j in range(3)], axis=0),
        jnp.stack([kron_n(W[F:, :, j].T) for j in range(3)], axis=0)],
        axis=0)                                                  # [2,3,NF,NF]
    bcv = params["spec_b"].astype(f32)
    bct = jnp.stack([tile_n(bcv[:F]), tile_n(bcv[F:])], axis=0)  # [2,NF]

    lngt = jnp.stack([tile_n(params["ln_spec_g"]), tile_n(params["ln_attn_g"]),
                      tile_n(params["ln_out_g"])], axis=0)       # [3,NF]
    lnbt = jnp.stack([tile_n(params["ln_spec_b"]), tile_n(params["ln_attn_b"]),
                      tile_n(params["ln_out_b"])], axis=0)       # [3,NF]

    mavg = jnp.kron(eyeN, jnp.full((F, F), 1.0 / F, f32))        # [NF,NF]

    temp = params["temperature"]                                  # scalar
    wqk = jnp.stack([params["wq"].astype(f32).T / temp,
                     params["wk"].astype(f32).T], axis=0)        # [2,F,F]
    bqk = jnp.stack([params["bq"].astype(f32) / temp,
                     params["bk"].astype(f32)], axis=0)          # [2,F]

    # attention packing constants
    tile_mat = np.zeros((H * N, N), np.float32)                  # row replicate
    mstack = np.zeros((H * N, F), np.float32)                    # head masks
    rsum = np.zeros((N, H * N), np.float32)                      # head average
    for h in range(H):
        for n in range(N):
            tile_mat[h * N + n, n] = 1.0
            mstack[h * N + n, h * Dh:(h + 1) * Dh] = 1.0
            rsum[n, h * N + n] = 1.0 / H
    tile_mat = jnp.asarray(tile_mat)
    mstack = jnp.asarray(mstack)
    rsum = jnp.asarray(rsum)

    el = jnp.kron(eyeN, jnp.ones((F, 1), f32))                   # [NF,N]
    er = jnp.kron(eyeN, jnp.ones((1, F), f32))                   # [N,NF]
    ikf = jnp.kron(jnp.ones((N, N), f32), jnp.eye(F, dtype=f32)) # [NF,NF]

    sshift = np.zeros((3, T, T), np.float32)                     # time shifts
    for j in range(3):
        for t in range(T):
            src = t + j - 1
            if 0 <= src < T:
                sshift[j, t, src] = 1.0
    sshift = jnp.asarray(sshift)

    wdw = params["tconv_w"].astype(f32)[:, 0, :]                 # [F,3]
    wdwt = jnp.stack([tile_n(wdw[:, j]) for j in range(3)], axis=0)  # [3,NF]
    bdwt = tile_n(params["tconv_b"])[None, :]                        # [1,NF]

    wgT = params["glu_w"].astype(f32).T                          # [F,2F]
    wgk = jnp.stack([kron_n(wgT[:, :F]), kron_n(wgT[:, F:])], axis=0)  # [2,NF,NF]
    bg = params["glu_b"].astype(f32)
    bgt = jnp.stack([tile_n(bg[:F]), tile_n(bg[F:])], axis=0)    # [2,NF]

    consts = [fftc, irc, wck, bct, lngt, lnbt, mavg, wqk, bqk,
              tile_mat, mstack, rsum, el, er, ikf,
              sshift, wdwt, bdwt, wgk, bgt]

    # ---------------- kernel ----------------
    def kernel(x_ref, fftc_r, irc_r, wck_r, bct_r, lngt_r, lnbt_r, mavg_r,
               wqk_r, bqk_r, tmat_r, mstk_r, rsum_r, el_r, er_r, ikf_r,
               sshift_r, wdwt_r, bdwt_r, wgk_r, bgt_r,
               out_ref, adj_ref):
        xin = x_ref[0]                                   # [T, NF] lane-dense
        mavg_v = mavg_r[...]

        def ln_blk(v, idx):
            # per-node LayerNorm over F via block-averaging matmul
            g = lngt_r[idx:idx + 1, :]
            b = lnbt_r[idx:idx + 1, :]
            mu = jnp.dot(v, mavg_v, preferred_element_type=jnp.float32)
            d = v - mu
            var = jnp.dot(d * d, mavg_v, preferred_element_type=jnp.float32)
            return d * lax.rsqrt(var + _EPS) * g + b

        def gelu(z):
            # tanh-approx GELU -> transcendental goes to EUP
            c = 0.7978845608028654
            return 0.5 * z * (1.0 + jnp.tanh(c * (z + 0.044715 * z * z * z)))

        # -- SpectralConv: rfft (tap-shifted) -> block-diag conv -> GELU -> irfft -> LN
        acc_r = jnp.zeros((Tf, NF), jnp.float32)
        acc_i = jnp.zeros((Tf, NF), jnp.float32)
        for j in range(3):
            xr = jnp.dot(fftc_r[0, j], xin, preferred_element_type=jnp.float32)
            xi = jnp.dot(fftc_r[1, j], xin, preferred_element_type=jnp.float32)
            acc_r = acc_r + jnp.dot(xr, wck_r[0, j],
                                    preferred_element_type=jnp.float32)
            acc_i = acc_i + jnp.dot(xi, wck_r[1, j],
                                    preferred_element_type=jnp.float32)
        gr = gelu(acc_r + bct_r[0:1, :])
        gi = gelu(acc_i + bct_r[1:2, :])
        xs = (jnp.dot(irc_r[0], gr, preferred_element_type=jnp.float32)
              + jnp.dot(irc_r[1], gi, preferred_element_type=jnp.float32))  # [T,NF]
        xs = ln_blk(xs, 0)

        # -- GraphAttention adjacency (time-averaged features) --
        xm_p = jnp.mean(xs, axis=0, keepdims=True)                # [1, NF]
        xm = jnp.concatenate([xm_p[:, n * F:(n + 1) * F] for n in range(N)],
                             axis=0)                              # [N, F]
        q = jnp.dot(xm, wqk_r[0], preferred_element_type=jnp.float32) + bqk_r[0:1, :]
        k = jnp.dot(xm, wqk_r[1], preferred_element_type=jnp.float32) + bqk_r[1:2, :]
        qs = jnp.dot(tmat_r[...], q,
                     preferred_element_type=jnp.float32) * mstk_r[...]      # [HN,F]
        s = lax.dot_general(qs, k, (((1,), (1,)), ((), ())),
                            preferred_element_type=jnp.float32)             # [HN,N]
        s = s - jnp.max(s, axis=-1, keepdims=True)
        e = jnp.exp(s)
        a = e * pl.reciprocal(jnp.sum(e, axis=-1, keepdims=True), approx=True)
        adj = jnp.dot(rsum_r[...], a, preferred_element_type=jnp.float32)   # [N,N]
        adj_ref[0] = adj

        # -- attend over nodes (xs @ kron(adj^T, I_F)) + residual LN --
        adj_e = lax.dot_general(el_r[...], adj, (((1,), (1,)), ((), ())),
                                preferred_element_type=jnp.float32)         # [NF,N]
        akr = jnp.dot(adj_e, er_r[...],
                      preferred_element_type=jnp.float32) * ikf_r[...]      # [NF,NF]
        att = jnp.dot(xs, akr, preferred_element_type=jnp.float32)          # [T,NF]
        xg = ln_blk(xs + att, 1)

        # -- depthwise temporal conv (k=3, pad=1) via shift matmuls + GLU + LN --
        conv = jnp.zeros((T, NF), jnp.float32)
        for j in range(3):
            conv = conv + jnp.dot(sshift_r[j], xg,
                                  preferred_element_type=jnp.float32) * wdwt_r[j:j + 1, :]
        conv = conv + bdwt_r[0:1, :]
        left = jnp.dot(conv, wgk_r[0], preferred_element_type=jnp.float32) + bgt_r[0:1, :]
        right = jnp.dot(conv, wgk_r[1], preferred_element_type=jnp.float32) + bgt_r[1:2, :]
        glu = left * jax.nn.sigmoid(right)

        # single full-width [T, NF] store
        out_ref[0] = ln_blk(xin + glu, 2)

    def const_spec(a):
        nd = a.ndim
        return pl.BlockSpec(a.shape, lambda b, _nd=nd: (0,) * _nd)

    # lane-dense packing: [B, N, T, F] -> [B, T, N*F]
    x_packed = jnp.transpose(x.astype(f32), (0, 2, 1, 3)).reshape(B, T, NF)

    out_packed, adj = pl.pallas_call(
        kernel,
        out_shape=(jax.ShapeDtypeStruct((B, T, NF), f32),
                   jax.ShapeDtypeStruct((B, N, N), f32)),
        grid=(B,),
        in_specs=[pl.BlockSpec((1, T, NF), lambda b: (b, 0, 0))]
                 + [const_spec(a) for a in consts],
        out_specs=(pl.BlockSpec((1, T, NF), lambda b: (b, 0, 0)),
                   pl.BlockSpec((1, N, N), lambda b: (b, 0, 0))),
        compiler_params=pltpu.CompilerParams(dimension_semantics=("parallel",)),
    )(x_packed, *consts)

    out = jnp.transpose(out_packed.reshape(B, T, N, F), (0, 2, 1, 3))
    return out, adj


def stemgnn_block_reference(x, params):
    """Pure-JAX reference mirroring the PyTorch forward (eval mode)."""
    B, N, T, F = x.shape
    H = params["num_heads"]
    Dh = F // H
    Tf = T // 2 + 1

    def layer_norm(v, g, b):
        mu = jnp.mean(v, axis=-1, keepdims=True)
        var = jnp.mean((v - mu) ** 2, axis=-1, keepdims=True)
        return (v - mu) / jnp.sqrt(var + _EPS) * g + b

    with jax.default_matmul_precision("float32"):
        # SpectralConvLayer (acts on [B,N,F,T])
        xs = jnp.transpose(x, (0, 1, 3, 2)).reshape(B * N, F, T)
        xf = jnp.fft.rfft(xs, axis=-1)
        W = params["spec_w"]
        bcv = params["spec_b"]

        def gconv(inp, w, bb):                     # inp [BN,F,Tf]
            ip = jnp.pad(inp, ((0, 0), (0, 0), (1, 1)))
            out = bb[None, :, None]
            for j in range(3):
                out = out + jnp.einsum('bct,oc->bot', ip[:, :, j:j + Tf], w[:, :, j])
            return out

        conv_r = jax.nn.gelu(gconv(xf.real, W[:F], bcv[:F]), approximate=False)
        conv_i = jax.nn.gelu(gconv(xf.imag, W[F:], bcv[F:]), approximate=False)
        x_ifft = jnp.fft.irfft(conv_r + 1j * conv_i, n=T, axis=-1)     # [BN,F,T]
        x_spec = jnp.transpose(x_ifft.reshape(B, N, F, T), (0, 1, 3, 2))
        x_spec = layer_norm(x_spec, params["ln_spec_g"], params["ln_spec_b"])

        # GraphAttention
        xm = jnp.mean(x_spec, axis=2)
        q = xm @ params["wq"].T + params["bq"]
        k = xm @ params["wk"].T + params["bk"]
        qh = q.reshape(B, N, H, Dh)
        kh = k.reshape(B, N, H, Dh)
        scores = jnp.einsum('bnhd,bmhd->bhnm', qh, kh) / params["temperature"]
        attw = jax.nn.softmax(scores, axis=-1)
        adj = jnp.mean(attw, axis=1)
        att = jnp.einsum('bnm,bmk->bnk', adj,
                         x_spec.reshape(B, N, T * F)).reshape(B, N, T, F)
        x_graph = layer_norm(x_spec + att, params["ln_attn_g"], params["ln_attn_b"])

        # depthwise temporal conv (k=3, pad=1, groups=F)
        wt = params["tconv_w"]
        bt = params["tconv_b"]
        xp = jnp.pad(x_graph, ((0, 0), (0, 0), (1, 1), (0, 0)))
        xtc = bt[None, None, None, :]
        for j in range(3):
            xtc = xtc + wt[:, 0, j][None, None, None, :] * xp[:, :, j:j + T, :]

        # GLU + residual LayerNorm (dropout = identity)
        gate = xtc @ params["glu_w"].T + params["glu_b"]
        glu = gate[..., :F] * jax.nn.sigmoid(gate[..., F:])
        out = layer_norm(x + glu, params["ln_out_g"], params["ln_out_b"])
    return out, adj


if __name__ == "__main__":
    B, N, T, F, H = 2, 4, 8, 32, 8
    f32 = jnp.float32
    ks = jax.random.split(jax.random.PRNGKey(0), 17)
    params = {
        "num_heads": H,
        "spec_w": 0.2 * jax.random.normal(ks[0], (2 * F, F, 3), f32),
        "spec_b": 0.1 * jax.random.normal(ks[1], (2 * F,), f32),
        "ln_spec_g": 1.0 + 0.1 * jax.random.normal(ks[2], (F,), f32),
        "ln_spec_b": 0.1 * jax.random.normal(ks[3], (F,), f32),
        "wq": 0.2 * jax.random.normal(ks[4], (F, F), f32),
        "bq": 0.1 * jax.random.normal(ks[5], (F,), f32),
        "wk": 0.2 * jax.random.normal(ks[6], (F, F), f32),
        "bk": 0.1 * jax.random.normal(ks[7], (F,), f32),
        "temperature": float(np.sqrt(F // H)),      # ones(1) * head_dim ** 0.5
        "ln_attn_g": 1.0 + 0.1 * jax.random.normal(ks[8], (F,), f32),
        "ln_attn_b": 0.1 * jax.random.normal(ks[9], (F,), f32),
        "tconv_w": 0.3 * jax.random.normal(ks[10], (F, 1, 3), f32),
        "tconv_b": 0.1 * jax.random.normal(ks[11], (F,), f32),
        "glu_w": 0.2 * jax.random.normal(ks[12], (2 * F, F), f32),
        "glu_b": 0.1 * jax.random.normal(ks[13], (2 * F,), f32),
        "ln_out_g": 1.0 + 0.1 * jax.random.normal(ks[14], (F,), f32),
        "ln_out_b": 0.1 * jax.random.normal(ks[15], (F,), f32),
    }
    x = jax.random.normal(ks[16], (B, N, T, F), f32)

    out, adj = stemgnn_block_pallas(x, params)
    jax.block_until_ready((out, adj))

    out_ref, adj_ref = stemgnn_block_reference(x, params)
    jax.block_until_ready((out_ref, adj_ref))

    assert out.shape == (B, N, T, F) and adj.shape == (B, N, N)
    err_o = float(jnp.max(jnp.abs(out - out_ref)))
    err_a = float(jnp.max(jnp.abs(adj - adj_ref)))
    assert err_o < 1e-2 and err_a < 1e-2, (err_o, err_a)
    print("KERNEL_OK")
</pallas_src>

<mosaic_0001>
module attributes {stable_mosaic.version = 11 : i64} {
  func.func @kernel(%arg0: i32, %arg1: memref<1x8x128xf32, #tpu.memory_space<vmem>>, %arg2: memref<2x3x5x8xf32, #tpu.memory_space<vmem>>, %arg3: memref<2x8x5xf32, #tpu.memory_space<vmem>>, %arg4: memref<2x3x128x128xf32, #tpu.memory_space<vmem>>, %arg5: memref<2x128xf32, #tpu.memory_space<vmem>>, %arg6: memref<3x128xf32, #tpu.memory_space<vmem>>, %arg7: memref<3x128xf32, #tpu.memory_space<vmem>>, %arg8: memref<128x128xf32, #tpu.memory_space<vmem>>, %arg9: memref<2x32x32xf32, #tpu.memory_space<vmem>>, %arg10: memref<2x32xf32, #tpu.memory_space<vmem>>, %arg11: memref<32x4xf32, #tpu.memory_space<vmem>>, %arg12: memref<32x32xf32, #tpu.memory_space<vmem>>, %arg13: memref<4x32xf32, #tpu.memory_space<vmem>>, %arg14: memref<128x4xf32, #tpu.memory_space<vmem>>, %arg15: memref<4x128xf32, #tpu.memory_space<vmem>>, %arg16: memref<128x128xf32, #tpu.memory_space<vmem>>, %arg17: memref<3x8x8xf32, #tpu.memory_space<vmem>>, %arg18: memref<3x128xf32, #tpu.memory_space<vmem>>, %arg19: memref<1x128xf32, #tpu.memory_space<vmem>>, %arg20: memref<2x128x128xf32, #tpu.memory_space<vmem>>, %arg21: memref<2x128xf32, #tpu.memory_space<vmem>>, %arg22: memref<1x8x128xf32, #tpu.memory_space<vmem>>, %arg23: memref<1x4x4xf32, #tpu.memory_space<vmem>>) attributes {dimension_semantics = [#tpu.dimension_semantics<parallel>], iteration_bounds = array<i64: 2>, scalar_prefetch = 0 : i64, scratch_operands = 0 : i64, tpu.core_type = #tpu.core_type<tc>, window_params = [{transform_indices = @transform_0, window_bounds = array<i64: 1, 8, 128>}, {pipeline_mode = #tpu.pipeline_mode<synchronous>, transform_indices = @transform_1, window_bounds = array<i64: 2, 3, 5, 8>}, {pipeline_mode = #tpu.pipeline_mode<synchronous>, transform_indices = @transform_2, window_bounds = array<i64: 2, 8, 5>}, {pipeline_mode = #tpu.pipeline_mode<synchronous>, transform_indices = @transform_3, window_bounds = array<i64: 2, 3, 128, 128>}, {pipeline_mode = #tpu.pipeline_mode<synchronous>, transform_indices = @transform_4, window_bounds = array<i64: 2, 128>}, {pipeline_mode = #tpu.pipeline_mode<synchronous>, transform_indices = @transform_5, window_bounds = array<i64: 3, 128>}, {pipeline_mode = #tpu.pipeline_mode<synchronous>, transform_indices = @transform_6, window_bounds = array<i64: 3, 128>}, {pipeline_mode = #tpu.pipeline_mode<synchronous>, transform_indices = @transform_7, window_bounds = array<i64: 128, 128>}, {pipeline_mode = #tpu.pipeline_mode<synchronous>, transform_indices = @transform_8, window_bounds = array<i64: 2, 32, 32>}, {pipeline_mode = #tpu.pipeline_mode<synchronous>, transform_indices = @transform_9, window_bounds = array<i64: 2, 32>}, {pipeline_mode = #tpu.pipeline_mode<synchronous>, transform_indices = @transform_10, window_bounds = array<i64: 32, 4>}, {pipeline_mode = #tpu.pipeline_mode<synchronous>, transform_indices = @transform_11, window_bounds = array<i64: 32, 32>}, {pipeline_mode = #tpu.pipeline_mode<synchronous>, transform_indices = @transform_12, window_bounds = array<i64: 4, 32>}, {pipeline_mode = #tpu.pipeline_mode<synchronous>, transform_indices = @transform_13, window_bounds = array<i64: 128, 4>}, {pipeline_mode = #tpu.pipeline_mode<synchronous>, transform_indices = @transform_14, window_bounds = array<i64: 4, 128>}, {pipeline_mode = #tpu.pipeline_mode<synchronous>, transform_indices = @transform_15, window_bounds = array<i64: 128, 128>}, {pipeline_mode = #tpu.pipeline_mode<synchronous>, transform_indices = @transform_16, window_bounds = array<i64: 3, 8, 8>}, {pipeline_mode = #tpu.pipeline_mode<synchronous>, transform_indices = @transform_17, window_bounds = array<i64: 3, 128>}, {pipeline_mode = #tpu.pipeline_mode<synchronous>, transform_indices = @transform_18, window_bounds = array<i64: 1, 128>}, {pipeline_mode = #tpu.pipeline_mode<synchronous>, transform_indices = @transform_19, window_bounds = array<i64: 2, 128, 128>}, {pipeline_mode = #tpu.pipeline_mode<synchronous>, transform_indices = @transform_20, window_bounds = array<i64: 2, 128>}, {transform_indices = @transform_21, window_bounds = array<i64: 1, 8, 128>}, {transform_indices = @transform_22, window_bounds = array<i64: 1, 4, 4>}]} {
    %c0 = arith.constant 0 : index
    %c0_0 = arith.constant 0 : index
    %c0_1 = arith.constant 0 : index
    %0 = vector.load %arg1[%c0, %c0_0, %c0_1] : memref<1x8x128xf32, #tpu.memory_space<vmem>>, vector<1x8x128xf32>
    %1 = vector.shape_cast %0 : vector<1x8x128xf32> to vector<8x128xf32>
    %c0_2 = arith.constant 0 : index
    %c0_3 = arith.constant 0 : index
    %2 = vector.load %arg8[%c0_2, %c0_3] : memref<128x128xf32, #tpu.memory_space<vmem>>, vector<128x128xf32>
    %cst = arith.constant 0.000000e+00 : f32
    %3 = vector.broadcast %cst : f32 to vector<5x128xf32>
    %cst_4 = arith.constant 0.000000e+00 : f32
    %4 = vector.broadcast %cst_4 : f32 to vector<5x128xf32>
    %c0_5 = arith.constant 0 : index
    %c0_6 = arith.constant 0 : index
    %c0_7 = arith.constant 0 : index
    %c0_8 = arith.constant 0 : index
    %5 = vector.load %arg2[%c0_5, %c0_6, %c0_7, %c0_8] : memref<2x3x5x8xf32, #tpu.memory_space<vmem>>, vector<1x1x5x8xf32>
    %6 = vector.shape_cast %5 : vector<1x1x5x8xf32> to vector<5x8xf32>
    %cst_9 = arith.constant dense<0.000000e+00> : vector<5x128xf32>
    %7 = tpu.matmul %6, %1, %cst_9 {dimension_numbers = #tpu.dot_dimension_numbers<[1], [0], [0], [1], [0, 0, 1, 1], [], []>} : vector<5x8xf32>, vector<8x128xf32>, vector<5x128xf32> -> vector<5x128xf32>
    %c1 = arith.constant 1 : index
    %c0_10 = arith.constant 0 : index
    %c0_11 = arith.constant 0 : index
    %c0_12 = arith.constant 0 : index
    %8 = vector.load %arg2[%c1, %c0_10, %c0_11, %c0_12] : memref<2x3x5x8xf32, #tpu.memory_space<vmem>>, vector<1x1x5x8xf32>
    %9 = vector.shape_cast %8 : vector<1x1x5x8xf32> to vector<5x8xf32>
    %cst_13 = arith.constant dense<0.000000e+00> : vector<5x128xf32>
    %10 = tpu.matmul %9, %1, %cst_13 {dimension_numbers = #tpu.dot_dimension_numbers<[1], [0], [0], [1], [0, 0, 1, 1], [], []>} : vector<5x8xf32>, vector<8x128xf32>, vector<5x128xf32> -> vector<5x128xf32>
    %c0_14 = arith.constant 0 : index
    %c0_15 = arith.constant 0 : index
    %c0_16 = arith.constant 0 : index
    %c0_17 = arith.constant 0 : index
    %11 = vector.load %arg4[%c0_14, %c0_15, %c0_16, %c0_17] : memref<2x3x128x128xf32, #tpu.memory_space<vmem>>, vector<1x1x128x128xf32>
    %12 = vector.shape_cast %11 : vector<1x1x128x128xf32> to vector<128x128xf32>
    %cst_18 = arith.constant dense<0.000000e+00> : vector<5x128xf32>
    %13 = tpu.matmul %7, %12, %cst_18 {dimension_numbers = #tpu.dot_dimension_numbers<[1], [0], [0], [1], [0, 0, 1, 1], [], []>} : vector<5x128xf32>, vector<128x128xf32>, vector<5x128xf32> -> vector<5x128xf32>
    %14 = arith.addf %3, %13 : vector<5x128xf32>
    %c1_19 = arith.constant 1 : index
    %c0_20 = arith.constant 0 : index
    %c0_21 = arith.constant 0 : index
    %c0_22 = arith.constant 0 : index
    %15 = vector.load %arg4[%c1_19, %c0_20, %c0_21, %c0_22] : memref<2x3x128x128xf32, #tpu.memory_space<vmem>>, vector<1x1x128x128xf32>
    %16 = vector.shape_cast %15 : vector<1x1x128x128xf32> to vector<128x128xf32>
    %cst_23 = arith.constant dense<0.000000e+00> : vector<5x128xf32>
    %17 = tpu.matmul %10, %16, %cst_23 {dimension_numbers = #tpu.dot_dimension_numbers<[1], [0], [0], [1], [0, 0, 1, 1], [], []>} : vector<5x128xf32>, vector<128x128xf32>, vector<5x128xf32> -> vector<5x128xf32>
    %18 = arith.addf %4, %17 : vector<5x128xf32>
    %c0_24 = arith.constant 0 : index
    %c1_25 = arith.constant 1 : index
    %c0_26 = arith.constant 0 : index
    %c0_27 = arith.constant 0 : index
    %19 = vector.load %arg2[%c0_24, %c1_25, %c0_26, %c0_27] : memref<2x3x5x8xf32, #tpu.memory_space<vmem>>, vector<1x1x5x8xf32>
    %20 = vector.shape_cast %19 : vector<1x1x5x8xf32> to vector<5x8xf32>
    %cst_28 = arith.constant dense<0.000000e+00> : vector<5x128xf32>
    %21 = tpu.matmul %20, %1, %cst_28 {dimension_numbers = #tpu.dot_dimension_numbers<[1], [0], [0], [1], [0, 0, 1, 1], [], []>} : vector<5x8xf32>, vector<8x128xf32>, vector<5x128xf32> -> vector<5x128xf32>
    %c1_29 = arith.constant 1 : index
    %c1_30 = arith.constant 1 : index
    %c0_31 = arith.constant 0 : index
    %c0_32 = arith.constant 0 : index
    %22 = vector.load %arg2[%c1_29, %c1_30, %c0_31, %c0_32] : memref<2x3x5x8xf32, #tpu.memory_space<vmem>>, vector<1x1x5x8xf32>
    %23 = vector.shape_cast %22 : vector<1x1x5x8xf32> to vector<5x8xf32>
    %cst_33 = arith.constant dense<0.000000e+00> : vector<5x128xf32>
    %24 = tpu.matmul %23, %1, %cst_33 {dimension_numbers = #tpu.dot_dimension_numbers<[1], [0], [0], [1], [0, 0, 1, 1], [], []>} : vector<5x8xf32>, vector<8x128xf32>, vector<5x128xf32> -> vector<5x128xf32>
    %c0_34 = arith.constant 0 : index
    %c1_35 = arith.constant 1 : index
    %c0_36 = arith.constant 0 : index
    %c0_37 = arith.constant 0 : index
    %25 = vector.load %arg4[%c0_34, %c1_35, %c0_36, %c0_37] : memref<2x3x128x128xf32, #tpu.memory_space<vmem>>, vector<1x1x128x128xf32>
    %26 = vector.shape_cast %25 : vector<1x1x128x128xf32> to vector<128x128xf32>
    %cst_38 = arith.constant dense<0.000000e+00> : vector<5x128xf32>
    %27 = tpu.matmul %21, %26, %cst_38 {dimension_numbers = #tpu.dot_dimension_numbers<[1], [0], [0], [1], [0, 0, 1, 1], [], []>} : vector<5x128xf32>, vector<128x128xf32>, vector<5x128xf32> -> vector<5x128xf32>
    %28 = arith.addf %14, %27 : vector<5x128xf32>
    %c1_39 = arith.constant 1 : index
    %c1_40 = arith.constant 1 : index
    %c0_41 = arith.constant 0 : index
    %c0_42 = arith.constant 0 : index
    %29 = vector.load %arg4[%c1_39, %c1_40, %c0_41, %c0_42] : memref<2x3x128x128xf32, #tpu.memory_space<vmem>>, vector<1x1x128x128xf32>
    %30 = vector.shape_cast %29 : vector<1x1x128x128xf32> to vector<128x128xf32>
    %cst_43 = arith.constant dense<0.000000e+00> : vector<5x128xf32>
    %31 = tpu.matmul %24, %30, %cst_43 {dimension_numbers = #tpu.dot_dimension_numbers<[1], [0], [0], [1], [0, 0, 1, 1], [], []>} : vector<5x128xf32>, vector<128x128xf32>, vector<5x128xf32> -> vector<5x128xf32>
    %32 = arith.addf %18, %31 : vector<5x128xf32>
    %c0_44 = arith.constant 0 : index
    %c2 = arith.constant 2 : index
    %c0_45 = arith.constant 0 : index
    %c0_46 = arith.constant 0 : index
    %33 = vector.load %arg2[%c0_44, %c2, %c0_45, %c0_46] : memref<2x3x5x8xf32, #tpu.memory_space<vmem>>, vector<1x1x5x8xf32>
    %34 = vector.shape_cast %33 : vector<1x1x5x8xf32> to vector<5x8xf32>
    %cst_47 = arith.constant dense<0.000000e+00> : vector<5x128xf32>
    %35 = tpu.matmul %34, %1, %cst_47 {dimension_numbers = #tpu.dot_dimension_numbers<[1], [0], [0], [1], [0, 0, 1, 1], [], []>} : vector<5x8xf32>, vector<8x128xf32>, vector<5x128xf32> -> vector<5x128xf32>
    %c1_48 = arith.constant 1 : index
    %c2_49 = arith.constant 2 : index
    %c0_50 = arith.constant 0 : index
    %c0_51 = arith.constant 0 : index
    %36 = vector.load %arg2[%c1_48, %c2_49, %c0_50, %c0_51] : memref<2x3x5x8xf32, #tpu.memory_space<vmem>>, vector<1x1x5x8xf32>
    %37 = vector.shape_cast %36 : vector<1x1x5x8xf32> to vector<5x8xf32>
    %cst_52 = arith.constant dense<0.000000e+00> : vector<5x128xf32>
    %38 = tpu.matmul %37, %1, %cst_52 {dimension_numbers = #tpu.dot_dimension_numbers<[1], [0], [0], [1], [0, 0, 1, 1], [], []>} : vector<5x8xf32>, vector<8x128xf32>, vector<5x128xf32> -> vector<5x128xf32>
    %c0_53 = arith.constant 0 : index
    %c2_54 = arith.constant 2 : index
    %c0_55 = arith.constant 0 : index
    %c0_56 = arith.constant 0 : index
    %39 = vector.load %arg4[%c0_53, %c2_54, %c0_55, %c0_56] : memref<2x3x128x128xf32, #tpu.memory_space<vmem>>, vector<1x1x128x128xf32>
    %40 = vector.shape_cast %39 : vector<1x1x128x128xf32> to vector<128x128xf32>
    %cst_57 = arith.constant dense<0.000000e+00> : vector<5x128xf32>
    %41 = tpu.matmul %35, %40, %cst_57 {dimension_numbers = #tpu.dot_dimension_numbers<[1], [0], [0], [1], [0, 0, 1, 1], [], []>} : vector<5x128xf32>, vector<128x128xf32>, vector<5x128xf32> -> vector<5x128xf32>
    %42 = arith.addf %28, %41 : vector<5x128xf32>
    %c1_58 = arith.constant 1 : index
    %c2_59 = arith.constant 2 : index
    %c0_60 = arith.constant 0 : index
    %c0_61 = arith.constant 0 : index
    %43 = vector.load %arg4[%c1_58, %c2_59, %c0_60, %c0_61] : memref<2x3x128x128xf32, #tpu.memory_space<vmem>>, vector<1x1x128x128xf32>
    %44 = vector.shape_cast %43 : vector<1x1x128x128xf32> to vector<128x128xf32>
    %cst_62 = arith.constant dense<0.000000e+00> : vector<5x128xf32>
    %45 = tpu.matmul %38, %44, %cst_62 {dimension_numbers = #tpu.dot_dimension_numbers<[1], [0], [0], [1], [0, 0, 1, 1], [], []>} : vector<5x128xf32>, vector<128x128xf32>, vector<5x128xf32> -> vector<5x128xf32>
    %46 = arith.addf %32, %45 : vector<5x128xf32>
    %c0_63 = arith.constant 0 : index
    %c0_64 = arith.constant 0 : index
    %47 = vector.load %arg5[%c0_63, %c0_64] : memref<2x128xf32, #tpu.memory_space<vmem>>, vector<1x128xf32>
    %48 = vector.broadcast %47 : vector<1x128xf32> to vector<5x128xf32>
    %49 = arith.addf %42, %48 : vector<5x128xf32>
    %cst_65 = arith.constant 5.000000e-01 : f32
    %50 = vector.broadcast %cst_65 : f32 to vector<5x128xf32>
    %51 = arith.mulf %50, %49 : vector<5x128xf32>
    %cst_66 = arith.constant 4.471500e-02 : f32
    %52 = vector.broadcast %cst_66 : f32 to vector<5x128xf32>
    %53 = arith.mulf %52, %49 : vector<5x128xf32>
    %54 = arith.mulf %53, %49 : vector<5x128xf32>
    %55 = arith.mulf %54, %49 : vector<5x128xf32>
    %56 = arith.addf %49, %55 : vector<5x128xf32>
    %cst_67 = arith.constant 0.797884583 : f32
    %57 = vector.broadcast %cst_67 : f32 to vector<5x128xf32>
    %58 = arith.mulf %57, %56 : vector<5x128xf32>
    %59 = math.tanh %58 : vector<5x128xf32>
    %cst_68 = arith.constant 1.000000e+00 : f32
    %60 = vector.broadcast %cst_68 : f32 to vector<5x128xf32>
    %61 = arith.addf %60, %59 : vector<5x128xf32>
    %62 = arith.mulf %51, %61 : vector<5x128xf32>
    %c1_69 = arith.constant 1 : index
    %c0_70 = arith.constant 0 : index
    %63 = vector.load %arg5[%c1_69, %c0_70] : memref<2x128xf32, #tpu.memory_space<vmem>>, vector<1x128xf32>
    %64 = vector.broadcast %63 : vector<1x128xf32> to vector<5x128xf32>
    %65 = arith.addf %46, %64 : vector<5x128xf32>
    %cst_71 = arith.constant 5.000000e-01 : f32
    %66 = vector.broadcast %cst_71 : f32 to vector<5x128xf32>
    %67 = arith.mulf %66, %65 : vector<5x128xf32>
    %cst_72 = arith.constant 4.471500e-02 : f32
    %68 = vector.broadcast %cst_72 : f32 to vector<5x128xf32>
    %69 = arith.mulf %68, %65 : vector<5x128xf32>
    %70 = arith.mulf %69, %65 : vector<5x128xf32>
    %71 = arith.mulf %70, %65 : vector<5x128xf32>
    %72 = arith.addf %65, %71 : vector<5x128xf32>
    %cst_73 = arith.constant 0.797884583 : f32
    %73 = vector.broadcast %cst_73 : f32 to vector<5x128xf32>
    %74 = arith.mulf %73, %72 : vector<5x128xf32>
    %75 = math.tanh %74 : vector<5x128xf32>
    %cst_74 = arith.constant 1.000000e+00 : f32
    %76 = vector.broadcast %cst_74 : f32 to vector<5x128xf32>
    %77 = arith.addf %76, %75 : vector<5x128xf32>
    %78 = arith.mulf %67, %77 : vector<5x128xf32>
    %c0_75 = arith.constant 0 : index
    %c0_76 = arith.constant 0 : index
    %c0_77 = arith.constant 0 : index
    %79 = vector.load %arg3[%c0_75, %c0_76, %c0_77] : memref<2x8x5xf32, #tpu.memory_space<vmem>>, vector<1x8x5xf32>
    %80 = vector.shape_cast %79 : vector<1x8x5xf32> to vector<8x5xf32>
    %cst_78 = arith.constant dense<0.000000e+00> : vector<8x128xf32>
    %81 = tpu.matmul %80, %62, %cst_78 {dimension_numbers = #tpu.dot_dimension_numbers<[1], [0], [0], [1], [0, 0, 1, 1], [], []>} : vector<8x5xf32>, vector<5x128xf32>, vector<8x128xf32> -> vector<8x128xf32>
    %c1_79 = arith.constant 1 : index
    %c0_80 = arith.constant 0 : index
    %c0_81 = arith.constant 0 : index
    %82 = vector.load %arg3[%c1_79, %c0_80, %c0_81] : memref<2x8x5xf32, #tpu.memory_space<vmem>>, vector<1x8x5xf32>
    %83 = vector.shape_cast %82 : vector<1x8x5xf32> to vector<8x5xf32>
    %cst_82 = arith.constant dense<0.000000e+00> : vector<8x128xf32>
    %84 = tpu.matmul %83, %78, %cst_82 {dimension_numbers = #tpu.dot_dimension_numbers<[1], [0], [0], [1], [0, 0, 1, 1], [], []>} : vector<8x5xf32>, vector<5x128xf32>, vector<8x128xf32> -> vector<8x128xf32>
    %85 = arith.addf %81, %84 : vector<8x128xf32>
    %c0_83 = arith.constant 0 : index
    %c0_84 = arith.constant 0 : index
    %86 = vector.load %arg6[%c0_83, %c0_84] : memref<3x128xf32, #tpu.memory_space<vmem>>, vector<1x128xf32>
    %c0_85 = arith.constant 0 : index
    %c0_86 = arith.constant 0 : index
    %87 = vector.load %arg7[%c0_85, %c0_86] : memref<3x128xf32, #tpu.memory_space<vmem>>, vector<1x128xf32>
    %cst_87 = arith.constant dense<0.000000e+00> : vector<8x128xf32>
    %88 = tpu.matmul %85, %2, %cst_87 {dimension_numbers = #tpu.dot_dimension_numbers<[1], [0], [0], [1], [0, 0, 1, 1], [], []>} : vector<8x128xf32>, vector<128x128xf32>, vector<8x128xf32> -> vector<8x128xf32>
    %89 = arith.subf %85, %88 : vector<8x128xf32>
    %90 = arith.mulf %89, %89 : vector<8x128xf32>
    %cst_88 = arith.constant dense<0.000000e+00> : vector<8x128xf32>
    %91 = tpu.matmul %90, %2, %cst_88 {dimension_numbers = #tpu.dot_dimension_numbers<[1], [0], [0], [1], [0, 0, 1, 1], [], []>} : vector<8x128xf32>, vector<128x128xf32>, vector<8x128xf32> -> vector<8x128xf32>
    %cst_89 = arith.constant 9.99999974E-6 : f32
    %92 = vector.broadcast %cst_89 : f32 to vector<8x128xf32>
    %93 = arith.addf %91, %92 : vector<8x128xf32>
    %94 = math.rsqrt %93 : vector<8x128xf32>
    %95 = arith.mulf %89, %94 : vector<8x128xf32>
    %96 = vector.broadcast %86 : vector<1x128xf32> to vector<8x128xf32>
    %97 = arith.mulf %95, %96 : vector<8x128xf32>
    %98 = vector.broadcast %87 : vector<1x128xf32> to vector<8x128xf32>
    %99 = arith.addf %97, %98 : vector<8x128xf32>
    %cst_90 = arith.constant dense<0.000000e+00> : vector<128xf32>
    %100 = vector.multi_reduction <add>, %99, %cst_90 [0] : vector<8x128xf32> to vector<128xf32>
    %101 = vector.shape_cast %100 : vector<128xf32> to vector<1x128xf32>
    %cst_91 = arith.constant 8.000000e+00 : f32
    %102 = vector.broadcast %cst_91 : f32 to vector<1x128xf32>
    %103 = arith.divf %101, %102 : vector<1x128xf32>
    %104 = vector.extract_strided_slice %103 {offsets = [0, 0], sizes = [1, 32], strides = [1, 1]} : vector<1x128xf32> to vector<1x32xf32>
    %105 = vector.extract_strided_slice %103 {offsets = [0, 32], sizes = [1, 32], strides = [1, 1]} : vector<1x128xf32> to vector<1x32xf32>
    %106 = vector.extract_strided_slice %103 {offsets = [0, 64], sizes = [1, 32], strides = [1, 1]} : vector<1x128xf32> to vector<1x32xf32>
    %107 = vector.extract_strided_slice %103 {offsets = [0, 96], sizes = [1, 32], strides = [1, 1]} : vector<1x128xf32> to vector<1x32xf32>
    %108 = tpu.concatenate %104, %105, %106, %107 in 0 : vector<1x32xf32>, vector<1x32xf32>, vector<1x32xf32>, vector<1x32xf32> -> vector<4x32xf32>
    %c0_92 = arith.constant 0 : index
    %c0_93 = arith.constant 0 : index
    %c0_94 = arith.constant 0 : index
    %109 = vector.load %arg9[%c0_92, %c0_93, %c0_94] : memref<2x32x32xf32, #tpu.memory_space<vmem>>, vector<1x32x32xf32>
    %110 = vector.shape_cast %109 : vector<1x32x32xf32> to vector<32x32xf32>
    %cst_95 = arith.constant dense<0.000000e+00> : vector<4x32xf32>
    %111 = tpu.matmul %108, %110, %cst_95 {dimension_numbers = #tpu.dot_dimension_numbers<[1], [0], [0], [1], [0, 0, 1, 1], [], []>} : vector<4x32xf32>, vector<32x32xf32>, vector<4x32xf32> -> vector<4x32xf32>
    %c0_96 = arith.constant 0 : index
    %c0_97 = arith.constant 0 : index
    %112 = vector.load %arg10[%c0_96, %c0_97] : memref<2x32xf32, #tpu.memory_space<vmem>>, vector<1x32xf32>
    %113 = vector.broadcast %112 : vector<1x32xf32> to vector<4x32xf32>
    %114 = arith.addf %111, %113 : vector<4x32xf32>
    %c1_98 = arith.constant 1 : index
    %c0_99 = arith.constant 0 : index
    %c0_100 = arith.constant 0 : index
    %115 = vector.load %arg9[%c1_98, %c0_99, %c0_100] : memref<2x32x32xf32, #tpu.memory_space<vmem>>, vector<1x32x32xf32>
    %116 = vector.shape_cast %115 : vector<1x32x32xf32> to vector<32x32xf32>
    %cst_101 = arith.constant dense<0.000000e+00> : vector<4x32xf32>
    %117 = tpu.matmul %108, %116, %cst_101 {dimension_numbers = #tpu.dot_dimension_numbers<[1], [0], [0], [1], [0, 0, 1, 1], [], []>} : vector<4x32xf32>, vector<32x32xf32>, vector<4x32xf32> -> vector<4x32xf32>
    %c1_102 = arith.constant 1 : index
    %c0_103 = arith.constant 0 : index
    %118 = vector.load %arg10[%c1_102, %c0_103] : memref<2x32xf32, #tpu.memory_space<vmem>>, vector<1x32xf32>
    %119 = vector.broadcast %118 : vector<1x32xf32> to vector<4x32xf32>
    %120 = arith.addf %117, %119 : vector<4x32xf32>
    %c0_104 = arith.constant 0 : index
    %c0_105 = arith.constant 0 : index
    %121 = vector.load %arg11[%c0_104, %c0_105] : memref<32x4xf32, #tpu.memory_space<vmem>>, vector<32x4xf32>
    %cst_106 = arith.constant dense<0.000000e+00> : vector<32x32xf32>
    %122 = tpu.matmul %121, %114, %cst_106 {dimension_numbers = #tpu.dot_dimension_numbers<[1], [0], [0], [1], [0, 0, 1, 1], [], []>} : vector<32x4xf32>, vector<4x32xf32>, vector<32x32xf32> -> vector<32x32xf32>
    %c0_107 = arith.constant 0 : index
    %c0_108 = arith.constant 0 : index
    %123 = vector.load %arg12[%c0_107, %c0_108] : memref<32x32xf32, #tpu.memory_space<vmem>>, vector<32x32xf32>
    %124 = arith.mulf %122, %123 : vector<32x32xf32>
    %cst_109 = arith.constant dense<0.000000e+00> : vector<32x4xf32>
    %125 = tpu.matmul %124, %120, %cst_109 {dimension_numbers = #tpu.dot_dimension_numbers<[1], [1], [0], [0], [0, 0, 1, 0], [], []>} : vector<32x32xf32>, vector<4x32xf32>, vector<32x4xf32> -> vector<32x4xf32>
    %cst_110 = arith.constant dense<0xFF800000> : vector<32xf32>
    %126 = vector.multi_reduction <maximumf>, %125, %cst_110 [1] : vector<32x4xf32> to vector<32xf32>
    %127 = vector.shape_cast %126 : vector<32xf32> to vector<32x1xf32>
    %128 = vector.broadcast %127 : vector<32x1xf32> to vector<32x4xf32>
    %129 = arith.subf %125, %128 : vector<32x4xf32>
    %130 = math.exp %129 : vector<32x4xf32>
    %cst_111 = arith.constant dense<0.000000e+00> : vector<32xf32>
    %131 = vector.multi_reduction <add>, %130, %cst_111 [1] : vector<32x4xf32> to vector<32xf32>
    %132 = vector.shape_cast %131 : vector<32xf32> to vector<32x1xf32>
    %133 = tpu.reciprocal %132 {approx = true} : vector<32x1xf32> -> vector<32x1xf32>
    %134 = vector.broadcast %133 : vector<32x1xf32> to vector<32x4xf32>
    %135 = arith.mulf %130, %134 : vector<32x4xf32>
    %c0_112 = arith.constant 0 : index
    %c0_113 = arith.constant 0 : index
    %136 = vector.load %arg13[%c0_112, %c0_113] : memref<4x32xf32, #tpu.memory_space<vmem>>, vector<4x32xf32>
    %cst_114 = arith.constant dense<0.000000e+00> : vector<4x4xf32>
    %137 = tpu.matmul %136, %135, %cst_114 {dimension_numbers = #tpu.dot_dimension_numbers<[1], [0], [0], [1], [0, 0, 1, 1], [], []>} : vector<4x32xf32>, vector<32x4xf32>, vector<4x4xf32> -> vector<4x4xf32>
    %c0_115 = arith.constant 0 : index
    %c0_116 = arith.constant 0 : index
    %c0_117 = arith.constant 0 : index
    %138 = vector.load %arg23[%c0_115, %c0_116, %c0_117] : memref<1x4x4xf32, #tpu.memory_space<vmem>>, vector<1x4x4xf32>
    %139 = vector.shape_cast %138 : vector<1x4x4xf32> to vector<4x4xf32>
    %140 = vector.shape_cast %137 : vector<4x4xf32> to vector<1x4x4xf32>
    tpu.vector_store %arg23[%c0_115, %c0_116, %c0_117], %140 {strides = array<i32>} : memref<1x4x4xf32, #tpu.memory_space<vmem>>, vector<1x4x4xf32>,
    %c0_118 = arith.constant 0 : index
    %c0_119 = arith.constant 0 : index
    %141 = vector.load %arg14[%c0_118, %c0_119] : memref<128x4xf32, #tpu.memory_space<vmem>>, vector<128x4xf32>
    %cst_120 = arith.constant dense<0.000000e+00> : vector<128x4xf32>
    %142 = tpu.matmul %141, %137, %cst_120 {dimension_numbers = #tpu.dot_dimension_numbers<[1], [1], [0], [0], [0, 0, 1, 0], [], []>} : vector<128x4xf32>, vector<4x4xf32>, vector<128x4xf32> -> vector<128x4xf32>
    %c0_121 = arith.constant 0 : index
    %c0_122 = arith.constant 0 : index
    %143 = vector.load %arg15[%c0_121, %c0_122] : memref<4x128xf32, #tpu.memory_space<vmem>>, vector<4x128xf32>
    %cst_123 = arith.constant dense<0.000000e+00> : vector<128x128xf32>
    %144 = tpu.matmul %142, %143, %cst_123 {dimension_numbers = #tpu.dot_dimension_numbers<[1], [0], [0], [1], [0, 0, 1, 1], [], []>} : vector<128x4xf32>, vector<4x128xf32>, vector<128x128xf32> -> vector<128x128xf32>
    %c0_124 = arith.constant 0 : index
    %c0_125 = arith.constant 0 : index
    %145 = vector.load %arg16[%c0_124, %c0_125] : memref<128x128xf32, #tpu.memory_space<vmem>>, vector<128x128xf32>
    %146 = arith.mulf %144, %145 : vector<128x128xf32>
    %cst_126 = arith.constant dense<0.000000e+00> : vector<8x128xf32>
    %147 = tpu.matmul %99, %146, %cst_126 {dimension_numbers = #tpu.dot_dimension_numbers<[1], [0], [0], [1], [0, 0, 1, 1], [], []>} : vector<8x128xf32>, vector<128x128xf32>, vector<8x128xf32> -> vector<8x128xf32>
    %148 = arith.addf %99, %147 : vector<8x128xf32>
    %c1_127 = arith.constant 1 : index
    %c0_128 = arith.constant 0 : index
    %149 = vector.load %arg6[%c1_127, %c0_128] : memref<3x128xf32, #tpu.memory_space<vmem>>, vector<1x128xf32>
    %c1_129 = arith.constant 1 : index
    %c0_130 = arith.constant 0 : index
    %150 = vector.load %arg7[%c1_129, %c0_130] : memref<3x128xf32, #tpu.memory_space<vmem>>, vector<1x128xf32>
    %cst_131 = arith.constant dense<0.000000e+00> : vector<8x128xf32>
    %151 = tpu.matmul %148, %2, %cst_131 {dimension_numbers = #tpu.dot_dimension_numbers<[1], [0], [0], [1], [0, 0, 1, 1], [], []>} : vector<8x128xf32>, vector<128x128xf32>, vector<8x128xf32> -> vector<8x128xf32>
    %152 = arith.subf %148, %151 : vector<8x128xf32>
    %153 = arith.mulf %152, %152 : vector<8x128xf32>
    %cst_132 = arith.constant dense<0.000000e+00> : vector<8x128xf32>
    %154 = tpu.matmul %153, %2, %cst_132 {dimension_numbers = #tpu.dot_dimension_numbers<[1], [0], [0], [1], [0, 0, 1, 1], [], []>} : vector<8x128xf32>, vector<128x128xf32>, vector<8x128xf32> -> vector<8x128xf32>
    %cst_133 = arith.constant 9.99999974E-6 : f32
    %155 = vector.broadcast %cst_133 : f32 to vector<8x128xf32>
    %156 = arith.addf %154, %155 : vector<8x128xf32>
    %157 = math.rsqrt %156 : vector<8x128xf32>
    %158 = arith.mulf %152, %157 : vector<8x128xf32>
    %159 = vector.broadcast %149 : vector<1x128xf32> to vector<8x128xf32>
    %160 = arith.mulf %158, %159 : vector<8x128xf32>
    %161 = vector.broadcast %150 : vector<1x128xf32> to vector<8x128xf32>
    %162 = arith.addf %160, %161 : vector<8x128xf32>
    %cst_134 = arith.constant 0.000000e+00 : f32
    %163 = vector.broadcast %cst_134 : f32 to vector<8x128xf32>
    %c0_135 = arith.constant 0 : index
    %c0_136 = arith.constant 0 : index
    %c0_137 = arith.constant 0 : index
    %164 = vector.load %arg17[%c0_135, %c0_136, %c0_137] : memref<3x8x8xf32, #tpu.memory_space<vmem>>, vector<1x8x8xf32>
    %165 = vector.shape_cast %164 : vector<1x8x8xf32> to vector<8x8xf32>
    %cst_138 = arith.constant dense<0.000000e+00> : vector<8x128xf32>
    %166 = tpu.matmul %165, %162, %cst_138 {dimension_numbers = #tpu.dot_dimension_numbers<[1], [0], [0], [1], [0, 0, 1, 1], [], []>} : vector<8x8xf32>, vector<8x128xf32>, vector<8x128xf32> -> vector<8x128xf32>
    %c0_139 = arith.constant 0 : index
    %c0_140 = arith.constant 0 : index
    %167 = vector.load %arg18[%c0_139, %c0_140] : memref<3x128xf32, #tpu.memory_space<vmem>>, vector<1x128xf32>
    %168 = vector.broadcast %167 : vector<1x128xf32> to vector<8x128xf32>
    %169 = arith.mulf %166, %168 : vector<8x128xf32>
    %170 = arith.addf %163, %169 : vector<8x128xf32>
    %c1_141 = arith.constant 1 : index
    %c0_142 = arith.constant 0 : index
    %c0_143 = arith.constant 0 : index
    %171 = vector.load %arg17[%c1_141, %c0_142, %c0_143] : memref<3x8x8xf32, #tpu.memory_space<vmem>>, vector<1x8x8xf32>
    %172 = vector.shape_cast %171 : vector<1x8x8xf32> to vector<8x8xf32>
    %cst_144 = arith.constant dense<0.000000e+00> : vector<8x128xf32>
    %173 = tpu.matmul %172, %162, %cst_144 {dimension_numbers = #tpu.dot_dimension_numbers<[1], [0], [0], [1], [0, 0, 1, 1], [], []>} : vector<8x8xf32>, vector<8x128xf32>, vector<8x128xf32> -> vector<8x128xf32>
    %c1_145 = arith.constant 1 : index
    %c0_146 = arith.constant 0 : index
    %174 = vector.load %arg18[%c1_145, %c0_146] : memref<3x128xf32, #tpu.memory_space<vmem>>, vector<1x128xf32>
    %175 = vector.broadcast %174 : vector<1x128xf32> to vector<8x128xf32>
    %176 = arith.mulf %173, %175 : vector<8x128xf32>
    %177 = arith.addf %170, %176 : vector<8x128xf32>
    %c2_147 = arith.constant 2 : index
    %c0_148 = arith.constant 0 : index
    %c0_149 = arith.constant 0 : index
    %178 = vector.load %arg17[%c2_147, %c0_148, %c0_149] : memref<3x8x8xf32, #tpu.memory_space<vmem>>, vector<1x8x8xf32>
    %179 = vector.shape_cast %178 : vector<1x8x8xf32> to vector<8x8xf32>
    %cst_150 = arith.constant dense<0.000000e+00> : vector<8x128xf32>
    %180 = tpu.matmul %179, %162, %cst_150 {dimension_numbers = #tpu.dot_dimension_numbers<[1], [0], [0], [1], [0, 0, 1, 1], [], []>} : vector<8x8xf32>, vector<8x128xf32>, vector<8x128xf32> -> vector<8x128xf32>
    %c2_151 = arith.constant 2 : index
    %c0_152 = arith.constant 0 : index
    %181 = vector.load %arg18[%c2_151, %c0_152] : memref<3x128xf32, #tpu.memory_space<vmem>>, vector<1x128xf32>
    %182 = vector.broadcast %181 : vector<1x128xf32> to vector<8x128xf32>
    %183 = arith.mulf %180, %182 : vector<8x128xf32>
    %184 = arith.addf %177, %183 : vector<8x128xf32>
    %c0_153 = arith.constant 0 : index
    %c0_154 = arith.constant 0 : index
    %185 = vector.load %arg19[%c0_153, %c0_154] : memref<1x128xf32, #tpu.memory_space<vmem>>, vector<1x128xf32>
    %186 = vector.broadcast %185 : vector<1x128xf32> to vector<8x128xf32>
    %187 = arith.addf %184, %186 : vector<8x128xf32>
    %c0_155 = arith.constant 0 : index
    %c0_156 = arith.constant 0 : index
    %c0_157 = arith.constant 0 : index
    %188 = vector.load %arg20[%c0_155, %c0_156, %c0_157] : memref<2x128x128xf32, #tpu.memory_space<vmem>>, vector<1x128x128xf32>
    %189 = vector.shape_cast %188 : vector<1x128x128xf32> to vector<128x128xf32>
    %cst_158 = arith.constant dense<0.000000e+00> : vector<8x128xf32>
    %190 = tpu.matmul %187, %189, %cst_158 {dimension_numbers = #tpu.dot_dimension_numbers<[1], [0], [0], [1], [0, 0, 1, 1], [], []>} : vector<8x128xf32>, vector<128x128xf32>, vector<8x128xf32> -> vector<8x128xf32>
    %c0_159 = arith.constant 0 : index
    %c0_160 = arith.constant 0 : index
    %191 = vector.load %arg21[%c0_159, %c0_160] : memref<2x128xf32, #tpu.memory_space<vmem>>, vector<1x128xf32>
    %192 = vector.broadcast %191 : vector<1x128xf32> to vector<8x128xf32>
    %193 = arith.addf %190, %192 : vector<8x128xf32>
    %c1_161 = arith.constant 1 : index
    %c0_162 = arith.constant 0 : index
    %c0_163 = arith.constant 0 : index
    %194 = vector.load %arg20[%c1_161, %c0_162, %c0_163] : memref<2x128x128xf32, #tpu.memory_space<vmem>>, vector<1x128x128xf32>
    %195 = vector.shape_cast %194 : vector<1x128x128xf32> to vector<128x128xf32>
    %cst_164 = arith.constant dense<0.000000e+00> : vector<8x128xf32>
    %196 = tpu.matmul %187, %195, %cst_164 {dimension_numbers = #tpu.dot_dimension_numbers<[1], [0], [0], [1], [0, 0, 1, 1], [], []>} : vector<8x128xf32>, vector<128x128xf32>, vector<8x128xf32> -> vector<8x128xf32>
    %c1_165 = arith.constant 1 : index
    %c0_166 = arith.constant 0 : index
    %197 = vector.load %arg21[%c1_165, %c0_166] : memref<2x128xf32, #tpu.memory_space<vmem>>, vector<1x128xf32>
    %198 = vector.broadcast %197 : vector<1x128xf32> to vector<8x128xf32>
    %199 = arith.addf %196, %198 : vector<8x128xf32>
    %200 = arith.negf %199 : vector<8x128xf32>
    %201 = math.exp %200 : vector<8x128xf32>
    %cst_167 = arith.constant 1.000000e+00 : f32
    %202 = vector.broadcast %cst_167 : f32 to vector<8x128xf32>
    %203 = arith.addf %202, %201 : vector<8x128xf32>
    %204 = arith.divf %202, %203 : vector<8x128xf32>
    %205 = arith.mulf %193, %204 : vector<8x128xf32>
    %206 = arith.addf %1, %205 : vector<8x128xf32>
    %c2_168 = arith.constant 2 : index
    %c0_169 = arith.constant 0 : index
    %207 = vector.load %arg6[%c2_168, %c0_169] : memref<3x128xf32, #tpu.memory_space<vmem>>, vector<1x128xf32>
    %c2_170 = arith.constant 2 : index
    %c0_171 = arith.constant 0 : index
    %208 = vector.load %arg7[%c2_170, %c0_171] : memref<3x128xf32, #tpu.memory_space<vmem>>, vector<1x128xf32>
    %cst_172 = arith.constant dense<0.000000e+00> : vector<8x128xf32>
    %209 = tpu.matmul %206, %2, %cst_172 {dimension_numbers = #tpu.dot_dimension_numbers<[1], [0], [0], [1], [0, 0, 1, 1], [], []>} : vector<8x128xf32>, vector<128x128xf32>, vector<8x128xf32> -> vector<8x128xf32>
    %210 = arith.subf %206, %209 : vector<8x128xf32>
    %211 = arith.mulf %210, %210 : vector<8x128xf32>
    %cst_173 = arith.constant dense<0.000000e+00> : vector<8x128xf32>
    %212 = tpu.matmul %211, %2, %cst_173 {dimension_numbers = #tpu.dot_dimension_numbers<[1], [0], [0], [1], [0, 0, 1, 1], [], []>} : vector<8x128xf32>, vector<128x128xf32>, vector<8x128xf32> -> vector<8x128xf32>
    %cst_174 = arith.constant 9.99999974E-6 : f32
    %213 = vector.broadcast %cst_174 : f32 to vector<8x128xf32>
    %214 = arith.addf %212, %213 : vector<8x128xf32>
    %215 = math.rsqrt %214 : vector<8x128xf32>
    %216 = arith.mulf %210, %215 : vector<8x128xf32>
    %217 = vector.broadcast %207 : vector<1x128xf32> to vector<8x128xf32>
    %218 = arith.mulf %216, %217 : vector<8x128xf32>
    %219 = vector.broadcast %208 : vector<1x128xf32> to vector<8x128xf32>
    %220 = arith.addf %218, %219 : vector<8x128xf32>
    %c0_175 = arith.constant 0 : index
    %c0_176 = arith.constant 0 : index
    %c0_177 = arith.constant 0 : index
    %221 = vector.load %arg22[%c0_175, %c0_176, %c0_177] : memref<1x8x128xf32, #tpu.memory_space<vmem>>, vector<1x8x128xf32>
    %222 = vector.shape_cast %221 : vector<1x8x128xf32> to vector<8x128xf32>
    %223 = vector.shape_cast %220 : vector<8x128xf32> to vector<1x8x128xf32>
    tpu.vector_store %arg22[%c0_175, %c0_176, %c0_177], %223 {strides = array<i32>} : memref<1x8x128xf32, #tpu.memory_space<vmem>>, vector<1x8x128xf32>,
    return
  }
  func.func @transform_0(%arg0: i32) -> (i32, i32, i32) {
    %c0_i32 = arith.constant 0 : i32
    %c0_i32_0 = arith.constant 0 : i32
    %c0_i32_1 = arith.constant 0 : i32
    return %arg0, %c0_i32, %c0_i32_0 : i32, i32, i32
  }
  func.func @transform_1(%arg0: i32) -> (i32, i32, i32, i32) {
    %c0_i32 = arith.constant 0 : i32
    %c0_i32_0 = arith.constant 0 : i32
    %c0_i32_1 = arith.constant 0 : i32
    %c0_i32_2 = arith.constant 0 : i32
    %c0_i32_3 = arith.constant 0 : i32
    return %c0_i32, %c0_i32_0, %c0_i32_1, %c0_i32_2 : i32, i32, i32, i32
  }
  func.func @transform_2(%arg0: i32) -> (i32, i32, i32) {
    %c0_i32 = arith.constant 0 : i32
    %c0_i32_0 = arith.constant 0 : i32
    %c0_i32_1 = arith.constant 0 : i32
    %c0_i32_2 = arith.constant 0 : i32
    return %c0_i32, %c0_i32_0, %c0_i32_1 : i32, i32, i32
  }
  func.func @transform_3(%arg0: i32) -> (i32, i32, i32, i32) {
    %c0_i32 = arith.constant 0 : i32
    %c0_i32_0 = arith.constant 0 : i32
    %c0_i32_1 = arith.constant 0 : i32
    %c0_i32_2 = arith.constant 0 : i32
    %c0_i32_3 = arith.constant 0 : i32
    return %c0_i32, %c0_i32_0, %c0_i32_1, %c0_i32_2 : i32, i32, i32, i32
  }
  func.func @transform_4(%arg0: i32) -> (i32, i32) {
    %c0_i32 = arith.constant 0 : i32
    %c0_i32_0 = arith.constant 0 : i32
    %c0_i32_1 = arith.constant 0 : i32
    return %c0_i32, %c0_i32_0 : i32, i32
  }
  func.func @transform_5(%arg0: i32) -> (i32, i32) {
    %c0_i32 = arith.constant 0 : i32
    %c0_i32_0 = arith.constant 0 : i32
    %c0_i32_1 = arith.constant 0 : i32
    return %c0_i32, %c0_i32_0 : i32, i32
  }
  func.func @transform_6(%arg0: i32) -> (i32, i32) {
    %c0_i32 = arith.constant 0 : i32
    %c0_i32_0 = arith.constant 0 : i32
    %c0_i32_1 = arith.constant 0 : i32
    return %c0_i32, %c0_i32_0 : i32, i32
  }
  func.func @transform_7(%arg0: i32) -> (i32, i32) {
    %c0_i32 = arith.constant 0 : i32
    %c0_i32_0 = arith.constant 0 : i32
    %c0_i32_1 = arith.constant 0 : i32
    return %c0_i32, %c0_i32_0 : i32, i32
  }
  func.func @transform_8(%arg0: i32) -> (i32, i32, i32) {
    %c0_i32 = arith.constant 0 : i32
    %c0_i32_0 = arith.constant 0 : i32
    %c0_i32_1 = arith.constant 0 : i32
    %c0_i32_2 = arith.constant 0 : i32
    return %c0_i32, %c0_i32_0, %c0_i32_1 : i32, i32, i32
  }
  func.func @transform_9(%arg0: i32) -> (i32, i32) {
    %c0_i32 = arith.constant 0 : i32
    %c0_i32_0 = arith.constant 0 : i32
    %c0_i32_1 = arith.constant 0 : i32
    return %c0_i32, %c0_i32_0 : i32, i32
  }
  func.func @transform_10(%arg0: i32) -> (i32, i32) {
    %c0_i32 = arith.constant 0 : i32
    %c0_i32_0 = arith.constant 0 : i32
    %c0_i32_1 = arith.constant 0 : i32
    return %c0_i32, %c0_i32_0 : i32, i32
  }
  func.func @transform_11(%arg0: i32) -> (i32, i32) {
    %c0_i32 = arith.constant 0 : i32
    %c0_i32_0 = arith.constant 0 : i32
    %c0_i32_1 = arith.constant 0 : i32
    return %c0_i32, %c0_i32_0 : i32, i32
  }
  func.func @transform_12(%arg0: i32) -> (i32, i32) {
    %c0_i32 = arith.constant 0 : i32
    %c0_i32_0 = arith.constant 0 : i32
    %c0_i32_1 = arith.constant 0 : i32
    return %c0_i32, %c0_i32_0 : i32, i32
  }
  func.func @transform_13(%arg0: i32) -> (i32, i32) {
    %c0_i32 = arith.constant 0 : i32
    %c0_i32_0 = arith.constant 0 : i32
    %c0_i32_1 = arith.constant 0 : i32
    return %c0_i32, %c0_i32_0 : i32, i32
  }
  func.func @transform_14(%arg0: i32) -> (i32, i32) {
    %c0_i32 = arith.constant 0 : i32
    %c0_i32_0 = arith.constant 0 : i32
    %c0_i32_1 = arith.constant 0 : i32
    return %c0_i32, %c0_i32_0 : i32, i32
  }
  func.func @transform_15(%arg0: i32) -> (i32, i32) {
    %c0_i32 = arith.constant 0 : i32
    %c0_i32_0 = arith.constant 0 : i32
    %c0_i32_1 = arith.constant 0 : i32
    return %c0_i32, %c0_i32_0 : i32, i32
  }
  func.func @transform_16(%arg0: i32) -> (i32, i32, i32) {
    %c0_i32 = arith.constant 0 : i32
    %c0_i32_0 = arith.constant 0 : i32
    %c0_i32_1 = arith.constant 0 : i32
    %c0_i32_2 = arith.constant 0 : i32
    return %c0_i32, %c0_i32_0, %c0_i32_1 : i32, i32, i32
  }
  func.func @transform_17(%arg0: i32) -> (i32, i32) {
    %c0_i32 = arith.constant 0 : i32
    %c0_i32_0 = arith.constant 0 : i32
    %c0_i32_1 = arith.constant 0 : i32
    return %c0_i32, %c0_i32_0 : i32, i32
  }
  func.func @transform_18(%arg0: i32) -> (i32, i32) {
    %c0_i32 = arith.constant 0 : i32
    %c0_i32_0 = arith.constant 0 : i32
    %c0_i32_1 = arith.constant 0 : i32
    return %c0_i32, %c0_i32_0 : i32, i32
  }
  func.func @transform_19(%arg0: i32) -> (i32, i32, i32) {
    %c0_i32 = arith.constant 0 : i32
    %c0_i32_0 = arith.constant 0 : i32
    %c0_i32_1 = arith.constant 0 : i32
    %c0_i32_2 = arith.constant 0 : i32
    return %c0_i32, %c0_i32_0, %c0_i32_1 : i32, i32, i32
  }
  func.func @transform_20(%arg0: i32) -> (i32, i32) {
    %c0_i32 = arith.constant 0 : i32
    %c0_i32_0 = arith.constant 0 : i32
    %c0_i32_1 = arith.constant 0 : i32
    return %c0_i32, %c0_i32_0 : i32, i32
  }
  func.func @transform_21(%arg0: i32) -> (i32, i32, i32) {
    %c0_i32 = arith.constant 0 : i32
    %c0_i32_0 = arith.constant 0 : i32
    %c0_i32_1 = arith.constant 0 : i32
    return %arg0, %c0_i32, %c0_i32_0 : i32, i32, i32
  }
  func.func @transform_22(%arg0: i32) -> (i32, i32, i32) {
    %c0_i32 = arith.constant 0 : i32
    %c0_i32_0 = arith.constant 0 : i32
    %c0_i32_1 = arith.constant 0 : i32
    return %arg0, %c0_i32, %c0_i32_0 : i32, i32, i32
  }
}

</mosaic_0001>

<llo_original>
// kernel: tpu_custom_call.1
$region0: #{tpu_custom_call.1}
  #allocation0 [shape = 'u32[]', space=smem, size = 0x4, offset = 0x4, fixed_abs, tag = 'smem constant byte address 0x4 - core index']
  #allocation1 [shape = 'u32[144,128]{1,0:T(1,128)}', space=vmem, size = 0x12000, scoped, tag = 'internal scratch']
  %s0 = inlined_call_operand.vmem [shape: f32[2,8,128], index: 0, kind: input, shape index: {}]
  %s1 = inlined_call_operand.vmem [shape: f32[2,3,5,8], index: 1, kind: input, shape index: {}]
  %s2 = inlined_call_operand.vmem [shape: f32[2,8,5], index: 2, kind: input, shape index: {}]
  %s3 = inlined_call_operand.hbm [shape: f32[2,3,128,128], index: 3, kind: input, shape index: {}]
  %s4 = inlined_call_operand.vmem [shape: f32[2,128], index: 4, kind: input, shape index: {}]
  %s5 = inlined_call_operand.vmem [shape: f32[3,128], index: 5, kind: input, shape index: {}]
  %s6 = inlined_call_operand.hbm [shape: f32[3,128], index: 6, kind: input, shape index: {}]
  %s7 = inlined_call_operand.hbm [shape: f32[128,128], index: 7, kind: input, shape index: {}]
  %s8 = inlined_call_operand.vmem [shape: f32[2,32,32], index: 8, kind: input, shape index: {}]
  %s9 = inlined_call_operand.hbm [shape: f32[2,32], index: 9, kind: input, shape index: {}]
  %s10 = inlined_call_operand.vmem [shape: f32[32,4], index: 10, kind: input, shape index: {}]
  %s11 = inlined_call_operand.hbm [shape: f32[32,32], index: 11, kind: input, shape index: {}]
  %s12 = inlined_call_operand.hbm [shape: f32[4,32], index: 12, kind: input, shape index: {}]
  %s13 = inlined_call_operand.vmem [shape: f32[128,4], index: 13, kind: input, shape index: {}]
  %s14 = inlined_call_operand.hbm [shape: f32[4,128], index: 14, kind: input, shape index: {}]
  %s15 = inlined_call_operand.hbm [shape: f32[128,128], index: 15, kind: input, shape index: {}]
  %s16 = inlined_call_operand.hbm [shape: f32[3,8,8], index: 16, kind: input, shape index: {}]
  %s17 = inlined_call_operand.hbm [shape: f32[3,128], index: 17, kind: input, shape index: {}]
  %s18 = inlined_call_operand.vmem [shape: f32[1,128], index: 18, kind: input, shape index: {}]
  %s19 = inlined_call_operand.vmem [shape: f32[2,128,128], index: 19, kind: input, shape index: {}]
  %s20 = inlined_call_operand.vmem [shape: f32[2,128], index: 20, kind: input, shape index: {}]
  %s21 = inlined_call_operand.hbm [shape: f32[2,8,128], index: 21, kind: output, shape index: {0}]
  %s22 = inlined_call_operand.hbm [shape: f32[2,4,4], index: 22, kind: output, shape index: {1}]
  %23 = xla_tuple %s21, %s22
  %s24 = sld [smem:[#allocation0]]
  $region165: #{tpu_custom_call.1} parent=0
    _
  %s26 = ssub.s32 1, %s24
  %s27 = scalar_select 0, %s26, %s24
  $region1: #{tpu_custom_call.1} parent=0
    #allocation2 [shape = 'u8[393216]{0}', space=vmem, size = 0x60000, scoped, tag = 'input window, operand 3, single buffered']
    #allocation3 [shape = 's32[2]{0}', space=sflag, size = 0x8, scoped, tag = 'scoped memory for tpu_custom_call.1']
    #allocation4 [shape = 's32[2]{0}', space=sflag, size = 0x8, scoped, tag = 'scoped memory for tpu_custom_call.1']
    #allocation5 [shape = 'u8[2048]{0}', space=vmem, size = 0x800, scoped, tag = 'input window, operand 6, single buffered']
    #allocation6 [shape = 's32[1]{0}', space=sflag, size = 0x4, scoped, tag = 'scoped memory for tpu_custom_call.1']
    #allocation7 [shape = 'u8[65536]{0}', space=vmem, size = 0x10000, scoped, tag = 'input window, operand 7, single buffered']
    #allocation8 [shape = 'u8[1024]{0}', space=vmem, size = 0x400, scoped, tag = 'input window, operand 9, single buffered']
    #allocation9 [shape = 's32[1]{0}', space=sflag, size = 0x4, scoped, tag = 'scoped memory for tpu_custom_call.1']
    #allocation10 [shape = 'u8[16384]{0}', space=vmem, size = 0x4000, scoped, tag = 'input window, operand 11, single buffered']
    #allocation11 [shape = 'u8[2048]{0}', space=vmem, size = 0x800, scoped, tag = 'input window, operand 12, single buffered']
    #allocation12 [shape = 's32[1]{0}', space=sflag, size = 0x4, scoped, tag = 'scoped memory for tpu_custom_call.1']
    #allocation13 [shape = 'u8[2048]{0}', space=vmem, size = 0x800, scoped, tag = 'input window, operand 14, single buffered']
    #allocation14 [shape = 'u8[65536]{0}', space=vmem, size = 0x10000, scoped, tag = 'input window, operand 15, single buffered']
    #allocation15 [shape = 's32[1]{0}', space=sflag, size = 0x4, scoped, tag = 'scoped memory for tpu_custom_call.1']
    #allocation16 [shape = 'u8[12288]{0}', space=vmem, size = 0x3000, scoped, tag = 'input window, operand 16, single buffered']
    #allocation17 [shape = 'u8[2048]{0}', space=vmem, size = 0x800, scoped, tag = 'input window, operand 17, single buffered']
    #allocation18 [shape = 's32[1]{0}', space=sflag, size = 0x4, scoped, tag = 'scoped memory for tpu_custom_call.1']
    #allocation19 [shape = 'u8[8192]{0}', space=vmem, size = 0x2000, scoped, tag = 'output window, operand 0']
    #allocation20 [shape = 'u8[4096]{0}', space=vmem, size = 0x1000, scoped, tag = 'output window, operand 1']
    #allocation21 [shape = 's32[2]{0}', space=sflag, size = 0x8, scoped, tag = 'scoped memory for tpu_custom_call.1']
    %28 = vsyncpa [#allocation3], 0
    %29 = vsyncpa [#allocation6], 0
    %30 = vsyncpa [#allocation9], 0
    %31 = vsyncpa [#allocation12], 0
    %32 = vsyncpa [#allocation15], 0
    %33 = vsyncpa [#allocation18], 0
    %34 = vsyncpa [#allocation4], 0
    %s35 = scalar_lea.sflag [#allocation4], 1
    %36 = vsyncpa %s35, 0
    %37 = vsyncpa [#allocation21], 0
    %s38 = scalar_lea.sflag [#allocation21], 1
    %39 = vsyncpa %s38, 0
    loop: start=0, step=1, limit=4
    $region2: #{tpu_custom_call.1} parent=1 // loop_pre_header
      _
    $region3: #{tpu_custom_call.1} parent=1 // loop_header
      %s41 = sphi 0, %s45
      %p42 = scmp.ge.s32.totalorder %s41, 4
      %s51 = sphi 0, %s53
      %s54 = sphi 0, %s51
      %s55 = sphi 0, %s54
      %s71 = sphi 0, %s55
      %s75 = sphi 0, %s75
      %s77 = sphi 0, %s75
      %s78 = sphi 0, %s77
      %s92 = sphi 0, %s78
      %s96 = sphi 0, %s96
      %s98 = sphi 0, %s96
      %s99 = sphi 0, %s98
      %s113 = sphi 0, %s99
      %s117 = sphi 0, %s117
      %s119 = sphi 0, %s117
      %s120 = sphi 0, %s119
      %s134 = sphi 0, %s120
      %s138 = sphi 0, %s138
      %s140 = sphi 0, %s138
      %s141 = sphi 0, %s140
      %s155 = sphi 0, %s141
      %s159 = sphi 0, %s159
      %s161 = sphi 0, %s159
      %s162 = sphi 0, %s161
      %s176 = sphi 0, %s162
      %s180 = sphi 0, %s180
      %s182 = sphi 0, %s180
      %s183 = sphi 0, %s182
      %s197 = sphi 0, %s183
      %s201 = sphi 0, %s201
      %s203 = sphi 0, %s201
      %s204 = sphi 0, %s203
      %s218 = sphi 0, %s204
      %s222 = sphi 0, %s222
      %s224 = sphi 0, %s222
      %s225 = sphi 0, %s224
      %s239 = sphi 0, %s225
      %s243 = sphi 0, %s243
      %s245 = sphi 0, %s243
      %s246 = sphi 0, %s245
      %s260 = sphi 0, %s246
      %s264 = sphi 0, %s264
      %s266 = sphi 0, %s264
      %s267 = sphi 0, %s266
      %s281 = sphi 0, %s267
      %s285 = sphi 0, %s285
      %s287 = sphi 0, %s285
      %s288 = sphi 0, %s287
      %s302 = sphi 0, %s288
      %s306 = sphi 0, %s306
      %s308 = sphi 0, %s306
      %s309 = sphi 0, %s308
      %s323 = sphi 0, %s309
      %s327 = sphi 0, %s327
      %s329 = sphi 0, %s327
      %s330 = sphi 0, %s329
      %s344 = sphi 0, %s330
      %s348 = sphi 0, %s348
      %s350 = sphi 0, %s348
      %s351 = sphi 0, %s350
      %s365 = sphi 0, %s351
      %s369 = sphi 0, %s369
      %s371 = sphi 0, %s369
      %s372 = sphi 0, %s371
      %s386 = sphi 0, %s372
      %s390 = sphi 0, %s390
      %s392 = sphi 0, %s390
      %s393 = sphi 0, %s392
      %s407 = sphi 0, %s393
      %s411 = sphi 0, %s411
      %s413 = sphi 0, %s411
      %s414 = sphi 0, %s413
      %s428 = sphi 0, %s414
      %s432 = sphi 0, %s432
      %s434 = sphi 0, %s432
      %s435 = sphi 0, %s434
      %s449 = sphi 0, %s435
      %s453 = sphi 0, %s453
      %s455 = sphi 0, %s453
      %s456 = sphi 0, %s455
      %s470 = sphi 0, %s456
      %s474 = sphi 0, %s474
      %s476 = sphi 0, %s474
      %s477 = sphi 0, %s476
      %s491 = sphi 0, %s477
      %s497 = sphi 0, %s499
      %s500 = sphi 0, %s497
      %s501 = sphi 0, %s500
      %s517 = sphi 0, %s501
      %s523 = sphi 0, %s525
      %s526 = sphi 0, %s523
      %s527 = sphi 0, %s526
      %s543 = sphi 0, %s527
    $region4: #{tpu_custom_call.1} parent=1 // loop_header_branch
      %44 = sbr.rel (%p42) target = $region8
    $region5: #{tpu_custom_call.1} parent=1 // loop_body
      %s46 = ssub.s32 %s41, 1
      %s47 = ssub.s32 %s41, 2
      %s48 = sadd.s32 %s41, 1
      %s49 = ssub.s32 %s41, %s48
      %p50 = scmp.eq.s32.totalorder %s49, 0
      %s52 = sadd.s32 %s51, 1
      %s53 = scalar_select %p50, %s51, %s52
      %p56 = pneg %p50
      %p57 = scmp.eq.s32.totalorder %s41, 1
      %p58 = por %p56, %p57
      %p59 = scmp.ne.s32.totalorder %s51, %s54
      %p60 = scmp.eq.s32.totalorder %s41, 0
      %p61 = por %p59, %p60
      %p62 = scmp.ne.s32.totalorder %s51, %s54
      %p63 = scmp.eq.s32.totalorder %s46, 1
      %p64 = por %p62, %p63
      %p65 = scmp.ne.s32.totalorder %s54, %s55
      %p66 = scmp.eq.s32.totalorder %s46, 0
      %p67 = por %p65, %p66
      %p68 = scmp.ne.s32.totalorder %s54, %s55
      %p69 = scmp.eq.s32.totalorder %s47, 1
      %p70 = por %p68, %p69
      %p72 = scmp.ne.s32.totalorder %s55, %s71
      %p73 = scmp.eq.s32.totalorder %s47, 0
      %p74 = por %p72, %p73
      %s76 = sadd.s32 %s75, 1
      %p79 = scmp.eq.s32.totalorder %s41, 1
      %p80 = scmp.ne.s32.totalorder %s75, %s77
      %p81 = scmp.eq.s32.totalorder %s41, 0
      %p82 = por %p80, %p81
      %p83 = scmp.ne.s32.totalorder %s75, %s77
      %p84 = scmp.eq.s32.totalorder %s46, 1
      %p85 = por %p83, %p84
      %p86 = scmp.ne.s32.totalorder %s77, %s78
      %p87 = scmp.eq.s32.totalorder %s46, 0
      %p88 = por %p86, %p87
      %p89 = scmp.ne.s32.totalorder %s77, %s78
      %p90 = scmp.eq.s32.totalorder %s47, 1
      %p91 = por %p89, %p90
      %p93 = scmp.ne.s32.totalorder %s78, %s92
      %p94 = scmp.eq.s32.totalorder %s47, 0
      %p95 = por %p93, %p94
      %s97 = sadd.s32 %s96, 1
      %p100 = scmp.eq.s32.totalorder %s41, 1
      %p101 = scmp.ne.s32.totalorder %s96, %s98
      %p102 = scmp.eq.s32.totalorder %s41, 0
      %p103 = por %p101, %p102
      %p104 = scmp.ne.s32.totalorder %s96, %s98
      %p105 = scmp.eq.s32.totalorder %s46, 1
      %p106 = por %p104, %p105
      %p107 = scmp.ne.s32.totalorder %s98, %s99
      %p108 = scmp.eq.s32.totalorder %s46, 0
      %p109 = por %p107, %p108
      %p110 = scmp.ne.s32.totalorder %s98, %s99
      %p111 = scmp.eq.s32.totalorder %s47, 1
      %p112 = por %p110, %p111
      %p114 = scmp.ne.s32.totalorder %s99, %s113
      %p115 = scmp.eq.s32.totalorder %s47, 0
      %p116 = por %p114, %p115
      %s118 = sadd.s32 %s117, 1
      %p121 = scmp.eq.s32.totalorder %s41, 1
      %p122 = scmp.ne.s32.totalorder %s117, %s119
      %p123 = scmp.eq.s32.totalorder %s41, 0
      %p124 = por %p122, %p123
      %p125 = scmp.ne.s32.totalorder %s117, %s119
      %p126 = scmp.eq.s32.totalorder %s46, 1
      %p127 = por %p125, %p126
      %p128 = scmp.ne.s32.totalorder %s119, %s120
      %p129 = scmp.eq.s32.totalorder %s46, 0
      %p130 = por %p128, %p129
      %p131 = scmp.ne.s32.totalorder %s119, %s120
      %p132 = scmp.eq.s32.totalorder %s47, 1
      %p133 = por %p131, %p132
      %p135 = scmp.ne.s32.totalorder %s120, %s134
      %p136 = scmp.eq.s32.totalorder %s47, 0
      %p137 = por %p135, %p136
      %s139 = sadd.s32 %s138, 1
      %p142 = scmp.eq.s32.totalorder %s41, 1
      %p143 = scmp.ne.s32.totalorder %s138, %s140
      %p144 = scmp.eq.s32.totalorder %s41, 0
      %p145 = por %p143, %p144
      %p146 = scmp.ne.s32.totalorder %s138, %s140
      %p147 = scmp.eq.s32.totalorder %s46, 1
      %p148 = por %p146, %p147
      %p149 = scmp.ne.s32.totalorder %s140, %s141
      %p150 = scmp.eq.s32.totalorder %s46, 0
      %p151 = por %p149, %p150
      %p152 = scmp.ne.s32.totalorder %s140, %s141
      %p153 = scmp.eq.s32.totalorder %s47, 1
      %p154 = por %p152, %p153
      %p156 = scmp.ne.s32.totalorder %s141, %s155
      %p157 = scmp.eq.s32.totalorder %s47, 0
      %p158 = por %p156, %p157
      %s160 = sadd.s32 %s159, 1
      %p163 = scmp.eq.s32.totalorder %s41, 1
      %p164 = scmp.ne.s32.totalorder %s159, %s161
      %p165 = scmp.eq.s32.totalorder %s41, 0
      %p166 = por %p164, %p165
      %p167 = scmp.ne.s32.totalorder %s159, %s161
      %p168 = scmp.eq.s32.totalorder %s46, 1
      %p169 = por %p167, %p168
      %p170 = scmp.ne.s32.totalorder %s161, %s162
      %p171 = scmp.eq.s32.totalorder %s46, 0
      %p172 = por %p170, %p171
      %p173 = scmp.ne.s32.totalorder %s161, %s162
      %p174 = scmp.eq.s32.totalorder %s47, 1
      %p175 = por %p173, %p174
      %p177 = scmp.ne.s32.totalorder %s162, %s176
      %p178 = scmp.eq.s32.totalorder %s47, 0
      %p179 = por %p177, %p178
      %s181 = sadd.s32 %s180, 1
      %p184 = scmp.eq.s32.totalorder %s41, 1
      %p185 = scmp.ne.s32.totalorder %s180, %s182
      %p186 = scmp.eq.s32.totalorder %s41, 0
      %p187 = por %p185, %p186
      %p188 = scmp.ne.s32.totalorder %s180, %s182
      %p189 = scmp.eq.s32.totalorder %s46, 1
      %p190 = por %p188, %p189
      %p191 = scmp.ne.s32.totalorder %s182, %s183
      %p192 = scmp.eq.s32.totalorder %s46, 0
      %p193 = por %p191, %p192
      %p194 = scmp.ne.s32.totalorder %s182, %s183
      %p195 = scmp.eq.s32.totalorder %s47, 1
      %p196 = por %p194, %p195
      %p198 = scmp.ne.s32.totalorder %s183, %s197
      %p199 = scmp.eq.s32.totalorder %s47, 0
      %p200 = por %p198, %p199
      %s202 = sadd.s32 %s201, 1
      %p205 = scmp.eq.s32.totalorder %s41, 1
      %p206 = scmp.ne.s32.totalorder %s201, %s203
      %p207 = scmp.eq.s32.totalorder %s41, 0
      %p208 = por %p206, %p207
      %p209 = scmp.ne.s32.totalorder %s201, %s203
      %p210 = scmp.eq.s32.totalorder %s46, 1
      %p211 = por %p209, %p210
      %p212 = scmp.ne.s32.totalorder %s203, %s204
      %p213 = scmp.eq.s32.totalorder %s46, 0
      %p214 = por %p212, %p213
      %p215 = scmp.ne.s32.totalorder %s203, %s204
      %p216 = scmp.eq.s32.totalorder %s47, 1
      %p217 = por %p215, %p216
      %p219 = scmp.ne.s32.totalorder %s204, %s218
      %p220 = scmp.eq.s32.totalorder %s47, 0
      %p221 = por %p219, %p220
      %s223 = sadd.s32 %s222, 1
      %p226 = scmp.eq.s32.totalorder %s41, 1
      %p227 = scmp.ne.s32.totalorder %s222, %s224
      %p228 = scmp.eq.s32.totalorder %s41, 0
      %p229 = por %p227, %p228
      %p230 = scmp.ne.s32.totalorder %s222, %s224
      %p231 = scmp.eq.s32.totalorder %s46, 1
      %p232 = por %p230, %p231
      %p233 = scmp.ne.s32.totalorder %s224, %s225
      %p234 = scmp.eq.s32.totalorder %s46, 0
      %p235 = por %p233, %p234
      %p236 = scmp.ne.s32.totalorder %s224, %s225
      %p237 = scmp.eq.s32.totalorder %s47, 1
      %p238 = por %p236, %p237
      %p240 = scmp.ne.s32.totalorder %s225, %s239
      %p241 = scmp.eq.s32.totalorder %s47, 0
      %p242 = por %p240, %p241
      %s244 = sadd.s32 %s243, 1
      %p247 = scmp.eq.s32.totalorder %s41, 1
      %p248 = scmp.ne.s32.totalorder %s243, %s245
      %p249 = scmp.eq.s32.totalorder %s41, 0
      %p250 = por %p248, %p249
      %p251 = scmp.ne.s32.totalorder %s243, %s245
      %p252 = scmp.eq.s32.totalorder %s46, 1
      %p253 = por %p251, %p252
      %p254 = scmp.ne.s32.totalorder %s245, %s246
      %p255 = scmp.eq.s32.totalorder %s46, 0
      %p256 = por %p254, %p255
      %p257 = scmp.ne.s32.totalorder %s245, %s246
      %p258 = scmp.eq.s32.totalorder %s47, 1
      %p259 = por %p257, %p258
      %p261 = scmp.ne.s32.totalorder %s246, %s260
      %p262 = scmp.eq.s32.totalorder %s47, 0
      %p263 = por %p261, %p262
      %s265 = sadd.s32 %s264, 1
      %p268 = scmp.eq.s32.totalorder %s41, 1
      %p269 = scmp.ne.s32.totalorder %s264, %s266
      %p270 = scmp.eq.s32.totalorder %s41, 0
      %p271 = por %p269, %p270
      %p272 = scmp.ne.s32.totalorder %s264, %s266
      %p273 = scmp.eq.s32.totalorder %s46, 1
      %p274 = por %p272, %p273
      %p275 = scmp.ne.s32.totalorder %s266, %s267
      %p276 = scmp.eq.s32.totalorder %s46, 0
      %p277 = por %p275, %p276
      %p278 = scmp.ne.s32.totalorder %s266, %s267
      %p279 = scmp.eq.s32.totalorder %s47, 1
      %p280 = por %p278, %p279
      %p282 = scmp.ne.s32.totalorder %s267, %s281
      %p283 = scmp.eq.s32.totalorder %s47, 0
      %p284 = por %p282, %p283
      %s286 = sadd.s32 %s285, 1
      %p289 = scmp.eq.s32.totalorder %s41, 1
      %p290 = scmp.ne.s32.totalorder %s285, %s287
      %p291 = scmp.eq.s32.totalorder %s41, 0
      %p292 = por %p290, %p291
      %p293 = scmp.ne.s32.totalorder %s285, %s287
      %p294 = scmp.eq.s32.totalorder %s46, 1
      %p295 = por %p293, %p294
      %p296 = scmp.ne.s32.totalorder %s287, %s288
      %p297 = scmp.eq.s32.totalorder %s46, 0
      %p298 = por %p296, %p297
      %p299 = scmp.ne.s32.totalorder %s287, %s288
      %p300 = scmp.eq.s32.totalorder %s47, 1
      %p301 = por %p299, %p300
      %p303 = scmp.ne.s32.totalorder %s288, %s302
      %p304 = scmp.eq.s32.totalorder %s47, 0
      %p305 = por %p303, %p304
      %s307 = sadd.s32 %s306, 1
      %p310 = scmp.eq.s32.totalorder %s41, 1
      %p311 = scmp.ne.s32.totalorder %s306, %s308
      %p312 = scmp.eq.s32.totalorder %s41, 0
      %p313 = por %p311, %p312
      %p314 = scmp.ne.s32.totalorder %s306, %s308
      %p315 = scmp.eq.s32.totalorder %s46, 1
      %p316 = por %p314, %p315
      %p317 = scmp.ne.s32.totalorder %s308, %s309
      %p318 = scmp.eq.s32.totalorder %s46, 0
      %p319 = por %p317, %p318
      %p320 = scmp.ne.s32.totalorder %s308, %s309
      %p321 = scmp.eq.s32.totalorder %s47, 1
      %p322 = por %p320, %p321
      %p324 = scmp.ne.s32.totalorder %s309, %s323
      %p325 = scmp.eq.s32.totalorder %s47, 0
      %p326 = por %p324, %p325
      %s328 = sadd.s32 %s327, 1
      %p331 = scmp.eq.s32.totalorder %s41, 1
      %p332 = scmp.ne.s32.totalorder %s327, %s329
      %p333 = scmp.eq.s32.totalorder %s41, 0
      %p334 = por %p332, %p333
      %p335 = scmp.ne.s32.totalorder %s327, %s329
      %p336 = scmp.eq.s32.totalorder %s46, 1
      %p337 = por %p335, %p336
      %p338 = scmp.ne.s32.totalorder %s329, %s330
      %p339 = scmp.eq.s32.totalorder %s46, 0
      %p340 = por %p338, %p339
      %p341 = scmp.ne.s32.totalorder %s329, %s330
      %p342 = scmp.eq.s32.totalorder %s47, 1
      %p343 = por %p341, %p342
      %p345 = scmp.ne.s32.totalorder %s330, %s344
      %p346 = scmp.eq.s32.totalorder %s47, 0
      %p347 = por %p345, %p346
      %s349 = sadd.s32 %s348, 1
      %p352 = scmp.eq.s32.totalorder %s41, 1
      %p353 = scmp.ne.s32.totalorder %s348, %s350
      %p354 = scmp.eq.s32.totalorder %s41, 0
      %p355 = por %p353, %p354
      %p356 = scmp.ne.s32.totalorder %s348, %s350
      %p357 = scmp.eq.s32.totalorder %s46, 1
      %p358 = por %p356, %p357
      %p359 = scmp.ne.s32.totalorder %s350, %s351
      %p360 = scmp.eq.s32.totalorder %s46, 0
      %p361 = por %p359, %p360
      %p362 = scmp.ne.s32.totalorder %s350, %s351
      %p363 = scmp.eq.s32.totalorder %s47, 1
      %p364 = por %p362, %p363
      %p366 = scmp.ne.s32.totalorder %s351, %s365
      %p367 = scmp.eq.s32.totalorder %s47, 0
      %p368 = por %p366, %p367
      %s370 = sadd.s32 %s369, 1
      %p373 = scmp.eq.s32.totalorder %s41, 1
      %p374 = scmp.ne.s32.totalorder %s369, %s371
      %p375 = scmp.eq.s32.totalorder %s41, 0
      %p376 = por %p374, %p375
      %p377 = scmp.ne.s32.totalorder %s369, %s371
      %p378 = scmp.eq.s32.totalorder %s46, 1
      %p379 = por %p377, %p378
      %p380 = scmp.ne.s32.totalorder %s371, %s372
      %p381 = scmp.eq.s32.totalorder %s46, 0
      %p382 = por %p380, %p381
      %p383 = scmp.ne.s32.totalorder %s371, %s372
      %p384 = scmp.eq.s32.totalorder %s47, 1
      %p385 = por %p383, %p384
      %p387 = scmp.ne.s32.totalorder %s372, %s386
      %p388 = scmp.eq.s32.totalorder %s47, 0
      %p389 = por %p387, %p388
      %s391 = sadd.s32 %s390, 1
      %p394 = scmp.eq.s32.totalorder %s41, 1
      %p395 = scmp.ne.s32.totalorder %s390, %s392
      %p396 = scmp.eq.s32.totalorder %s41, 0
      %p397 = por %p395, %p396
      %p398 = scmp.ne.s32.totalorder %s390, %s392
      %p399 = scmp.eq.s32.totalorder %s46, 1
      %p400 = por %p398, %p399
      %p401 = scmp.ne.s32.totalorder %s392, %s393
      %p402 = scmp.eq.s32.totalorder %s46, 0
      %p403 = por %p401, %p402
      %p404 = scmp.ne.s32.totalorder %s392, %s393
      %p405 = scmp.eq.s32.totalorder %s47, 1
      %p406 = por %p404, %p405
      %p408 = scmp.ne.s32.totalorder %s393, %s407
      %p409 = scmp.eq.s32.totalorder %s47, 0
      %p410 = por %p408, %p409
      %s412 = sadd.s32 %s411, 1
      %p415 = scmp.eq.s32.totalorder %s41, 1
      %p416 = scmp.ne.s32.totalorder %s411, %s413
      %p417 = scmp.eq.s32.totalorder %s41, 0
      %p418 = por %p416, %p417
      %p419 = scmp.ne.s32.totalorder %s411, %s413
      %p420 = scmp.eq.s32.totalorder %s46, 1
      %p421 = por %p419, %p420
      %p422 = scmp.ne.s32.totalorder %s413, %s414
      %p423 = scmp.eq.s32.totalorder %s46, 0
      %p424 = por %p422, %p423
      %p425 = scmp.ne.s32.totalorder %s413, %s414
      %p426 = scmp.eq.s32.totalorder %s47, 1
      %p427 = por %p425, %p426
      %p429 = scmp.ne.s32.totalorder %s414, %s428
      %p430 = scmp.eq.s32.totalorder %s47, 0
      %p431 = por %p429, %p430
      %s433 = sadd.s32 %s432, 1
      %p436 = scmp.eq.s32.totalorder %s41, 1
      %p437 = scmp.ne.s32.totalorder %s432, %s434
      %p438 = scmp.eq.s32.totalorder %s41, 0
      %p439 = por %p437, %p438
      %p440 = scmp.ne.s32.totalorder %s432, %s434
      %p441 = scmp.eq.s32.totalorder %s46, 1
      %p442 = por %p440, %p441
      %p443 = scmp.ne.s32.totalorder %s434, %s435
      %p444 = scmp.eq.s32.totalorder %s46, 0
      %p445 = por %p443, %p444
      %p446 = scmp.ne.s32.totalorder %s434, %s435
      %p447 = scmp.eq.s32.totalorder %s47, 1
      %p448 = por %p446, %p447
      %p450 = scmp.ne.s32.totalorder %s435, %s449
      %p451 = scmp.eq.s32.totalorder %s47, 0
      %p452 = por %p450, %p451
      %s454 = sadd.s32 %s453, 1
      %p457 = scmp.eq.s32.totalorder %s41, 1
      %p458 = scmp.ne.s32.totalorder %s453, %s455
      %p459 = scmp.eq.s32.totalorder %s41, 0
      %p460 = por %p458, %p459
      %p461 = scmp.ne.s32.totalorder %s453, %s455
      %p462 = scmp.eq.s32.totalorder %s46, 1
      %p463 = por %p461, %p462
      %p464 = scmp.ne.s32.totalorder %s455, %s456
      %p465 = scmp.eq.s32.totalorder %s46, 0
      %p466 = por %p464, %p465
      %p467 = scmp.ne.s32.totalorder %s455, %s456
      %p468 = scmp.eq.s32.totalorder %s47, 1
      %p469 = por %p467, %p468
      %p471 = scmp.ne.s32.totalorder %s456, %s470
      %p472 = scmp.eq.s32.totalorder %s47, 0
      %p473 = por %p471, %p472
      %s475 = sadd.s32 %s474, 1
      %p478 = scmp.eq.s32.totalorder %s41, 1
      %p479 = scmp.ne.s32.totalorder %s474, %s476
      %p480 = scmp.eq.s32.totalorder %s41, 0
      %p481 = por %p479, %p480
      %p482 = scmp.ne.s32.totalorder %s474, %s476
      %p483 = scmp.eq.s32.totalorder %s46, 1
      %p484 = por %p482, %p483
      %p485 = scmp.ne.s32.totalorder %s476, %s477
      %p486 = scmp.eq.s32.totalorder %s46, 0
      %p487 = por %p485, %p486
      %p488 = scmp.ne.s32.totalorder %s476, %s477
      %p489 = scmp.eq.s32.totalorder %s47, 1
      %p490 = por %p488, %p489
      %p492 = scmp.ne.s32.totalorder %s477, %s491
      %p493 = scmp.eq.s32.totalorder %s47, 0
      %p494 = por %p492, %p493
      %s495 = ssub.s32 %s41, %s48
      %p496 = scmp.eq.s32.totalorder %s495, 0
      %s498 = sadd.s32 %s497, 1
      %s499 = scalar_select %p496, %s497, %s498
      %p502 = pneg %p496
      %p503 = scmp.eq.s32.totalorder %s41, 1
      %p504 = por %p502, %p503
      %p505 = scmp.ne.s32.totalorder %s497, %s500
      %p506 = scmp.eq.s32.totalorder %s41, 0
      %p507 = por %p505, %p506
      %p508 = scmp.ne.s32.totalorder %s497, %s500
      %p509 = scmp.eq.s32.totalorder %s46, 1
      %p510 = por %p508, %p509
      %p511 = scmp.ne.s32.totalorder %s500, %s501
      %p512 = scmp.eq.s32.totalorder %s46, 0
      %p513 = por %p511, %p512
      %p514 = scmp.ne.s32.totalorder %s500, %s501
      %p515 = scmp.eq.s32.totalorder %s47, 1
      %p516 = por %p514, %p515
      %p518 = scmp.ne.s32.totalorder %s501, %s517
      %p519 = scmp.eq.s32.totalorder %s47, 0
      %p520 = por %p518, %p519
      %s521 = ssub.s32 %s41, %s48
      %p522 = scmp.eq.s32.totalorder %s521, 0
      %s524 = sadd.s32 %s523, 1
      %s525 = scalar_select %p522, %s523, %s524
      %p528 = pneg %p522
      %p529 = scmp.eq.s32.totalorder %s41, 1
      %p530 = por %p528, %p529
      %p531 = scmp.ne.s32.totalorder %s523, %s526
      %p532 = scmp.eq.s32.totalorder %s41, 0
      %p533 = por %p531, %p532
      %p534 = scmp.ne.s32.totalorder %s523, %s526
      %p535 = scmp.eq.s32.totalorder %s46, 1
      %p536 = por %p534, %p535
      %p537 = scmp.ne.s32.totalorder %s526, %s527
      %p538 = scmp.eq.s32.totalorder %s46, 0
      %p539 = por %p537, %p538
      %p540 = scmp.ne.s32.totalorder %s526, %s527
      %p541 = scmp.eq.s32.totalorder %s47, 1
      %p542 = por %p540, %p541
      %p544 = scmp.ne.s32.totalorder %s527, %s543
      %p545 = scmp.eq.s32.totalorder %s47, 0
      %p546 = por %p544, %p545
      %p547 = scmp.le.s32.totalorder 1, %s41
      %p548 = scmp.lt.s32.totalorder %s41, 3
      %p549 = pnand %p547, %p548
      %p550 = pneg %p549
      // Predicated region
      $region9: #{tpu_custom_call.1} parent=5 // pred_check
        _
      $region10: #{tpu_custom_call.1} parent=5 // pred_check_branch
        %552 = sbr.rel (%p549) target = $region12
      $region11: #{tpu_custom_call.1} parent=5 // pred_region
        %s553 = ssub.s32 %s41, 1
        // Predicated region
        $region13: #{tpu_custom_call.1} parent=11 // pred_check
          %p554 = pneg %p88
        $region14: #{tpu_custom_call.1} parent=11 // pred_check_branch
          %556 = sbr.rel (%p554) target = $region16
        $region15: #{tpu_custom_call.1} parent=11 // pred_region
          _
        $region16: #{tpu_custom_call.1} parent=11 // pred_fallthru
          _
        // Predicated region
        $region17: #{tpu_custom_call.1} parent=11 // pred_check
          %p557 = pneg %p109
        $region18: #{tpu_custom_call.1} parent=11 // pred_check_branch
          %559 = sbr.rel (%p557) target = $region20
        $region19: #{tpu_custom_call.1} parent=11 // pred_region
          _
        $region20: #{tpu_custom_call.1} parent=11 // pred_fallthru
          _
        // Predicated region
        $region21: #{tpu_custom_call.1} parent=11 // pred_check
          %p560 = pneg %p130
        $region22: #{tpu_custom_call.1} parent=11 // pred_check_branch
          %562 = sbr.rel (%p560) target = $region24
        $region23: #{tpu_custom_call.1} parent=11 // pred_region
          %s564 = ssub.s32 12288, 12288
          %565 = vsyncadd [#allocation3], %s564
          %s566 = sshll.u32 [#allocation2], 4
          %s567 = int_to_ptr.vmem [resolvable:$true] %s566
          %572 = dma.hbm_to_vmem [thread:$0]  %s3, 12288, %s567, [#allocation3], 128, 128, 8
        $region24: #{tpu_custom_call.1} parent=11 // pred_fallthru
          _
        // Predicated region
        $region25: #{tpu_custom_call.1} parent=11 // pred_check
          %p573 = pneg %p151
        $region26: #{tpu_custom_call.1} parent=11 // pred_check_branch
          %575 = sbr.rel (%p573) target = $region28
        $region27: #{tpu_custom_call.1} parent=11 // pred_region
          _
        $region28: #{tpu_custom_call.1} parent=11 // pred_fallthru
          _
        // Predicated region
        $region29: #{tpu_custom_call.1} parent=11 // pred_check
          %p576 = pneg %p172
        $region30: #{tpu_custom_call.1} parent=11 // pred_check_branch
          %578 = sbr.rel (%p576) target = $region32
        $region31: #{tpu_custom_call.1} parent=11 // pred_region
          _
        $region32: #{tpu_custom_call.1} parent=11 // pred_fallthru
          _
        // Predicated region
        $region33: #{tpu_custom_call.1} parent=11 // pred_check
          %p579 = pneg %p193
        $region34: #{tpu_custom_call.1} parent=11 // pred_check_branch
          %581 = sbr.rel (%p579) target = $region36
        $region35: #{tpu_custom_call.1} parent=11 // pred_region
          %s583 = ssub.s32 64, 64
          %584 = vsyncadd [#allocation6], %s583
          %s586 = sshll.u32 [#allocation5], 4
          %s587 = int_to_ptr.vmem [resolvable:$true] %s586
          %589 = dma.hbm_to_vmem [thread:$0]  %s6, 64, %s587, [#allocation6]
        $region36: #{tpu_custom_call.1} parent=11 // pred_fallthru
          _
        // Predicated region
        $region37: #{tpu_custom_call.1} parent=11 // pred_check
          %p590 = pneg %p214
        $region38: #{tpu_custom_call.1} parent=11 // pred_check_branch
          %592 = sbr.rel (%p590) target = $region40
        $region39: #{tpu_custom_call.1} parent=11 // pred_region
          %s594 = ssub.s32 2048, 2048
          %595 = vsyncadd [#allocation6], %s594
          %s596 = sshll.u32 [#allocation7], 4
          %s597 = int_to_ptr.vmem [resolvable:$true] %s596
          %602 = dma.hbm_to_vmem [thread:$0]  %s7, 2048, %s597, [#allocation6], 128, 128, 8
        $region40: #{tpu_custom_call.1} parent=11 // pred_fallthru
          _
        // Predicated region
        $region41: #{tpu_custom_call.1} parent=11 // pred_check
          %p603 = pneg %p235
        $region42: #{tpu_custom_call.1} parent=11 // pred_check_branch
          %605 = sbr.rel (%p603) target = $region44
        $region43: #{tpu_custom_call.1} parent=11 // pred_region
          _
        $region44: #{tpu_custom_call.1} parent=11 // pred_fallthru
          _
        // Predicated region
        $region45: #{tpu_custom_call.1} parent=11 // pred_check
          %p606 = pneg %p256
        $region46: #{tpu_custom_call.1} parent=11 // pred_check_branch
          %608 = sbr.rel (%p606) target = $region48
        $region47: #{tpu_custom_call.1} parent=11 // pred_region
          %s610 = ssub.s32 32, 32
          %611 = vsyncadd [#allocation9], %s610
          %s613 = sshll.u32 [#allocation8], 4
          %s614 = int_to_ptr.vmem [resolvable:$true] %s613
          %616 = dma.hbm_to_vmem [thread:$0]  %s9, 32, %s614, [#allocation9]
        $region48: #{tpu_custom_call.1} parent=11 // pred_fallthru
          _
        // Predicated region
        $region49: #{tpu_custom_call.1} parent=11 // pred_check
          %p617 = pneg %p277
        $region50: #{tpu_custom_call.1} parent=11 // pred_check_branch
          %619 = sbr.rel (%p617) target = $region52
        $region51: #{tpu_custom_call.1} parent=11 // pred_region
          _
        $region52: #{tpu_custom_call.1} parent=11 // pred_fallthru
          _
        // Predicated region
        $region53: #{tpu_custom_call.1} parent=11 // pred_check
          %p620 = pneg %p298
        $region54: #{tpu_custom_call.1} parent=11 // pred_check_branch
          %622 = sbr.rel (%p620) target = $region56
        $region55: #{tpu_custom_call.1} parent=11 // pred_region
          %s624 = ssub.s32 512, 512
          %625 = vsyncadd [#allocation9], %s624
          %s626 = sshll.u32 [#allocation10], 4
          %s627 = int_to_ptr.vmem [resolvable:$true] %s626
          %632 = dma.hbm_to_vmem [thread:$0]  %s11, 512, %s627, [#allocation9], 128, 128, 8
        $region56: #{tpu_custom_call.1} parent=11 // pred_fallthru
          _
        // Predicated region
        $region57: #{tpu_custom_call.1} parent=11 // pred_check
          %p633 = pneg %p319
        $region58: #{tpu_custom_call.1} parent=11 // pred_check_branch
          %635 = sbr.rel (%p633) target = $region60
        $region59: #{tpu_custom_call.1} parent=11 // pred_region
          %s637 = ssub.s32 64, 64
          %638 = vsyncadd [#allocation12], %s637
          %s640 = sshll.u32 [#allocation11], 4
          %s641 = int_to_ptr.vmem [resolvable:$true] %s640
          %643 = dma.hbm_to_vmem [thread:$0]  %s12, 64, %s641, [#allocation12]
        $region60: #{tpu_custom_call.1} parent=11 // pred_fallthru
          _
        // Predicated region
        $region61: #{tpu_custom_call.1} parent=11 // pred_check
          %p644 = pneg %p340
        $region62: #{tpu_custom_call.1} parent=11 // pred_check_branch
          %646 = sbr.rel (%p644) target = $region64
        $region63: #{tpu_custom_call.1} parent=11 // pred_region
          _
        $region64: #{tpu_custom_call.1} parent=11 // pred_fallthru
          _
        // Predicated region
        $region65: #{tpu_custom_call.1} parent=11 // pred_check
          %p647 = pneg %p361
        $region66: #{tpu_custom_call.1} parent=11 // pred_check_branch
          %649 = sbr.rel (%p647) target = $region68
        $region67: #{tpu_custom_call.1} parent=11 // pred_region
          %s651 = ssub.s32 64, 64
          %652 = vsyncadd [#allocation12], %s651
          %s654 = sshll.u32 [#allocation13], 4
          %s655 = int_to_ptr.vmem [resolvable:$true] %s654
          %657 = dma.hbm_to_vmem [thread:$0]  %s14, 64, %s655, [#allocation12]
        $region68: #{tpu_custom_call.1} parent=11 // pred_fallthru
          _
        // Predicated region
        $region69: #{tpu_custom_call.1} parent=11 // pred_check
          %p658 = pneg %p382
        $region70: #{tpu_custom_call.1} parent=11 // pred_check_branch
          %660 = sbr.rel (%p658) target = $region72
        $region71: #{tpu_custom_call.1} parent=11 // pred_region
          %s662 = ssub.s32 2048, 2048
          %663 = vsyncadd [#allocation15], %s662
          %s664 = sshll.u32 [#allocation14], 4
          %s665 = int_to_ptr.vmem [resolvable:$true] %s664
          %670 = dma.hbm_to_vmem [thread:$0]  %s15, 2048, %s665, [#allocation15], 128, 128, 8
        $region72: #{tpu_custom_call.1} parent=11 // pred_fallthru
          _
        // Predicated region
        $region73: #{tpu_custom_call.1} parent=11 // pred_check
          %p671 = pneg %p403
        $region74: #{tpu_custom_call.1} parent=11 // pred_check_branch
          %673 = sbr.rel (%p671) target = $region76
        $region75: #{tpu_custom_call.1} parent=11 // pred_region
          %s675 = ssub.s32 384, 384
          %676 = vsyncadd [#allocation15], %s675
          %s677 = sshll.u32 [#allocation16], 4
          %s678 = int_to_ptr.vmem [resolvable:$true] %s677
          %683 = dma.hbm_to_vmem [thread:$0]  %s16, 384, %s678, [#allocation15], 128, 128, 8
        $region76: #{tpu_custom_call.1} parent=11 // pred_fallthru
          _
        // Predicated region
        $region77: #{tpu_custom_call.1} parent=11 // pred_check
          %p684 = pneg %p424
        $region78: #{tpu_custom_call.1} parent=11 // pred_check_branch
          %686 = sbr.rel (%p684) target = $region80
        $region79: #{tpu_custom_call.1} parent=11 // pred_region
          %s688 = ssub.s32 64, 64
          %689 = vsyncadd [#allocation18], %s688
          %s691 = sshll.u32 [#allocation17], 4
          %s692 = int_to_ptr.vmem [resolvable:$true] %s691
          %694 = dma.hbm_to_vmem [thread:$0]  %s17, 64, %s692, [#allocation18]
        $region80: #{tpu_custom_call.1} parent=11 // pred_fallthru
          _
        // Predicated region
        $region81: #{tpu_custom_call.1} parent=11 // pred_check
          %p695 = pneg %p445
        $region82: #{tpu_custom_call.1} parent=11 // pred_check_branch
          %697 = sbr.rel (%p695) target = $region84
        $region83: #{tpu_custom_call.1} parent=11 // pred_region
          _
        $region84: #{tpu_custom_call.1} parent=11 // pred_fallthru
          _
        // Predicated region
        $region85: #{tpu_custom_call.1} parent=11 // pred_check
          %p698 = pneg %p466
        $region86: #{tpu_custom_call.1} parent=11 // pred_check_branch
          %700 = sbr.rel (%p698) target = $region88
        $region87: #{tpu_custom_call.1} parent=11 // pred_region
          _
        $region88: #{tpu_custom_call.1} parent=11 // pred_fallthru
          _
        // Predicated region
        $region89: #{tpu_custom_call.1} parent=11 // pred_check
          %p701 = pneg %p487
        $region90: #{tpu_custom_call.1} parent=11 // pred_check_branch
          %703 = sbr.rel (%p701) target = $region92
        $region91: #{tpu_custom_call.1} parent=11 // pred_region
          _
        $region92: #{tpu_custom_call.1} parent=11 // pred_fallthru
          _
      $region12: #{tpu_custom_call.1} parent=5 // pred_fallthru
        _
      %p704 = scmp.lt.s32.totalorder %s41, 2
      // Predicated region
      $region93: #{tpu_custom_call.1} parent=5 // pred_check
        %p705 = pneg %p704
      $region94: #{tpu_custom_call.1} parent=5 // pred_check_branch
        %707 = sbr.rel (%p705) target = $region96
      $region95: #{tpu_custom_call.1} parent=5 // pred_region
        // Predicated region
        $region97: #{tpu_custom_call.1} parent=95 // pred_check
          %p708 = pneg %p61
        $region98: #{tpu_custom_call.1} parent=95 // pred_check_branch
          %710 = sbr.rel (%p708) target = $region100
        $region99: #{tpu_custom_call.1} parent=95 // pred_region
          %p711 = scmp.lt.s32.totalorder %s41, 1
          %s712 = scalar_select %p711, %s41, 1
          %s713 = smul.addr %s712, 8
          %s714 = scalar_lea.vmem %s0, %s713
        $region100: #{tpu_custom_call.1} parent=95 // pred_fallthru
          _
      $region96: #{tpu_custom_call.1} parent=5 // pred_fallthru
        _
      %p715 = scmp.le.s32.totalorder 1, %s41
      %p716 = scmp.lt.s32.totalorder %s41, 3
      %p717 = pnand %p715, %p716
      %p718 = pneg %p717
      // Predicated region
      $region101: #{tpu_custom_call.1} parent=5 // pred_check
        _
      $region102: #{tpu_custom_call.1} parent=5 // pred_check_branch
        %720 = sbr.rel (%p717) target = $region104
      $region103: #{tpu_custom_call.1} parent=5 // pred_region
        %s721 = ssub.s32 %s41, 1
        // Predicated region
        $region105: #{tpu_custom_call.1} parent=103 // pred_check
          %p722 = pneg %p130
        $region106: #{tpu_custom_call.1} parent=103 // pred_check_branch
          %724 = sbr.rel (%p722) target = $region108
        $region107: #{tpu_custom_call.1} parent=103 // pred_region
          %725 = dma.done [#allocation3], 12288
        $region108: #{tpu_custom_call.1} parent=103 // pred_fallthru
          _
        // Predicated region
        $region109: #{tpu_custom_call.1} parent=103 // pred_check
          %p726 = pneg %p193
        $region110: #{tpu_custom_call.1} parent=103 // pred_check_branch
          %728 = sbr.rel (%p726) target = $region112
        $region111: #{tpu_custom_call.1} parent=103 // pred_region
          %729 = dma.done [#allocation6], 64
        $region112: #{tpu_custom_call.1} parent=103 // pred_fallthru
          _
        // Predicated region
        $region113: #{tpu_custom_call.1} parent=103 // pred_check
          %p730 = pneg %p214
        $region114: #{tpu_custom_call.1} parent=103 // pred_check_branch
          %732 = sbr.rel (%p730) target = $region116
        $region115: #{tpu_custom_call.1} parent=103 // pred_region
          %733 = dma.done [#allocation6], 2048
        $region116: #{tpu_custom_call.1} parent=103 // pred_fallthru
          _
        // Predicated region
        $region117: #{tpu_custom_call.1} parent=103 // pred_check
          %p734 = pneg %p256
        $region118: #{tpu_custom_call.1} parent=103 // pred_check_branch
          %736 = sbr.rel (%p734) target = $region120
        $region119: #{tpu_custom_call.1} parent=103 // pred_region
          %737 = dma.done [#allocation9], 32
        $region120: #{tpu_custom_call.1} parent=103 // pred_fallthru
          _
        // Predicated region
        $region121: #{tpu_custom_call.1} parent=103 // pred_check
          %p738 = pneg %p298
        $region122: #{tpu_custom_call.1} parent=103 // pred_check_branch
          %740 = sbr.rel (%p738) target = $region124
        $region123: #{tpu_custom_call.1} parent=103 // pred_region
          %741 = dma.done [#allocation9], 512
        $region124: #{tpu_custom_call.1} parent=103 // pred_fallthru
          _
        // Predicated region
        $region125: #{tpu_custom_call.1} parent=103 // pred_check
          %p742 = pneg %p319
        $region126: #{tpu_custom_call.1} parent=103 // pred_check_branch
          %744 = sbr.rel (%p742) target = $region128
        $region127: #{tpu_custom_call.1} parent=103 // pred_region
          %745 = dma.done [#allocation12], 64
        $region128: #{tpu_custom_call.1} parent=103 // pred_fallthru
          _
        // Predicated region
        $region129: #{tpu_custom_call.1} parent=103 // pred_check
          %p746 = pneg %p361
        $region130: #{tpu_custom_call.1} parent=103 // pred_check_branch
          %748 = sbr.rel (%p746) target = $region132
        $region131: #{tpu_custom_call.1} parent=103 // pred_region
          %749 = dma.done [#allocation12], 64
        $region132: #{tpu_custom_call.1} parent=103 // pred_fallthru
          _
        // Predicated region
        $region133: #{tpu_custom_call.1} parent=103 // pred_check
          %p750 = pneg %p382
        $region134: #{tpu_custom_call.1} parent=103 // pred_check_branch
          %752 = sbr.rel (%p750) target = $region136
        $region135: #{tpu_custom_call.1} parent=103 // pred_region
          %753 = dma.done [#allocation15], 2048
        $region136: #{tpu_custom_call.1} parent=103 // pred_fallthru
          _
        // Predicated region
        $region137: #{tpu_custom_call.1} parent=103 // pred_check
          %p754 = pneg %p403
        $region138: #{tpu_custom_call.1} parent=103 // pred_check_branch
          %756 = sbr.rel (%p754) target = $region140
        $region139: #{tpu_custom_call.1} parent=103 // pred_region
          %757 = dma.done [#allocation15], 384
        $region140: #{tpu_custom_call.1} parent=103 // pred_fallthru
          _
        // Predicated region
        $region141: #{tpu_custom_call.1} parent=103 // pred_check
          %p758 = pneg %p424
        $region142: #{tpu_custom_call.1} parent=103 // pred_check_branch
          %760 = sbr.rel (%p758) target = $region144
        $region143: #{tpu_custom_call.1} parent=103 // pred_region
          %761 = dma.done [#allocation18], 64
        $region144: #{tpu_custom_call.1} parent=103 // pred_fallthru
          _
        %p762 = scmp.lt.s32.totalorder %s46, 1
        %s763 = scalar_select %p762, %s46, 1
        %s764 = smul.addr %s763, 8
        %s765 = scalar_lea.vmem %s0, %s764
        %p766 = pneg %p67
        %p767 = pneg %p64
        %p768 = pneg %p88
        %p769 = pneg %p85
        %p770 = pneg %p109
        %p771 = pneg %p106
        %p772 = pneg %p130
        %p773 = pneg %p127
        %p774 = pneg %p151
        %p775 = pneg %p148
        %p776 = pneg %p172
        %p777 = pneg %p169
        %p778 = pneg %p193
        %p779 = pneg %p190
        %p780 = pneg %p214
        %p781 = pneg %p211
        %p782 = pneg %p235
        %p783 = pneg %p232
        %p784 = pneg %p256
        %p785 = pneg %p253
        %p786 = pneg %p277
        %p787 = pneg %p274
        %p788 = pneg %p298
        %p789 = pneg %p295
        %p790 = pneg %p319
        %p791 = pneg %p316
        %p792 = pneg %p340
        %p793 = pneg %p337
        %p794 = pneg %p361
        %p795 = pneg %p358
        %p796 = pneg %p382
        %p797 = pneg %p379
        %p798 = pneg %p403
        %p799 = pneg %p400
        %p800 = pneg %p424
        %p801 = pneg %p421
        %p802 = pneg %p445
        %p803 = pneg %p442
        %p804 = pneg %p466
        %p805 = pneg %p463
        %p806 = pneg %p487
        %p807 = pneg %p484
        %p808 = pneg %p513
        %p809 = pneg %p510
        %s810 = sand.u32 %s500, 1
        %s811 = scalar_lea.sflag [#allocation4], %s810
        %s812 = sand.u32 %s500, 1
        %s813 = smul.addr %s812, 8
        %s814 = scalar_lea.vmem [#allocation19], %s813
        %p815 = pneg %p539
        %p816 = pneg %p536
        %s817 = sand.u32 %s526, 1
        %s818 = scalar_lea.sflag [#allocation21], %s817
        %s819 = sand.u32 %s526, 1
        %s820 = smul.addr %s819, 4
        %s821 = scalar_lea.vmem [#allocation20], %s820
        %p822 = scmp.lt.s32.totalorder %s46, 1
        %s823 = scalar_select %p822, %s46, 1
        %s824 = smul.addr %s823, 8
        %s825 = scalar_lea.vmem %s0, %s824
        %v826 = vld [vmem:[%s825] sm:$0xff]
        %v827 = vld [vmem:[#allocation7] sm:$0xff]
        %v828 = vld [vmem:[#allocation7 + $0x8] sm:$0xff]
        %v829 = vld [vmem:[#allocation7 + $0x10] sm:$0xff]
        %v830 = vld [vmem:[#allocation7 + $0x18] sm:$0xff]
        %v831 = vld [vmem:[#allocation7 + $0x20] sm:$0xff]
        %v832 = vld [vmem:[#allocation7 + $0x28] sm:$0xff]
        %v833 = vld [vmem:[#allocation7 + $0x30] sm:$0xff]
        %v834 = vld [vmem:[#allocation7 + $0x38] sm:$0xff]
        %v835 = vld [vmem:[#allocation7 + $0x40] sm:$0xff]
        %v836 = vld [vmem:[#allocation7 + $0x48] sm:$0xff]
        %v837 = vld [vmem:[#allocation7 + $0x50] sm:$0xff]
        %v838 = vld [vmem:[#allocation7 + $0x58] sm:$0xff]
        %v839 = vld [vmem:[#allocation7 + $0x60] sm:$0xff]
        %v840 = vld [vmem:[#allocation7 + $0x68] sm:$0xff]
        %v841 = vld [vmem:[#allocation7 + $0x70] sm:$0xff]
        %v842 = vld [vmem:[#allocation7 + $0x78] sm:$0xff]
        %v843 = vld [vmem:[%s1] sm:$0x1f]
        %vm844 = vcmask 64512
        %v846 = vsel %vm844, %v843, 0
        %848 = vmatprep.subr.mxu0 0.0
        %849 = vmatpush1.msra.mxu0 %v826
        %850 = vmatprep.subr.mxu0 0.0
        %851 = vmatpush1.msra.mxu0 0.0
        %852 = vmatprep.subr.mxu0 0.0
        %853 = vmatpush1.msra.mxu0 0.0
        %854 = vmatprep.subr.mxu0 0.0
        %855 = vmatpush1.msra.mxu0 0.0
        %856 = vmatprep.subr.mxu0 0.0
        %857 = vmatpush1.msra.mxu0 0.0
        %858 = vmatprep.subr.mxu0 0.0
        %859 = vmatpush1.msra.mxu0 0.0
        %860 = vmatprep.subr.mxu0 0.0
        %861 = vmatpush1.msra.mxu0 0.0
        %862 = vmatprep.subr.mxu0 0.0
        %863 = vmatpush1.msra.mxu0 0.0
        %864 = vmatprep.subr.mxu0 0.0
        %865 = vmatpush1.msra.mxu0 0.0
        %866 = vmatprep.subr.mxu0 0.0
        %867 = vmatpush1.msra.mxu0 0.0
        %868 = vmatprep.subr.mxu0 0.0
        %869 = vmatpush1.msra.mxu0 0.0
        %870 = vmatprep.subr.mxu0 0.0
        %871 = vmatpush1.msra.mxu0 0.0
        %872 = vmatprep.subr.mxu0 0.0
        %873 = vmatpush1.msra.mxu0 0.0
        %874 = vmatprep.subr.mxu0 0.0
        %875 = vmatpush1.msra.mxu0 0.0
        %876 = vmatprep.subr.mxu0 0.0
        %877 = vmatpush1.msra.mxu0 0.0
        %878 = vmatprep.subr.mxu0 0.0
        %879 = vmatpush1.msra.mxu0 0.0
        %880 = vmatprep.subr.mxu0 0.0
        %881 = vmatpush1.msra.mxu0 0.0
        %882 = vmatprep.subr.mxu0 0.0
        %883 = vmatpush1.msra.mxu0 0.0
        %884 = vmatprep.subr.mxu0 0.0
        %885 = vmatpush1.msra.mxu0 0.0
        %886 = vmatprep.subr.mxu0 0.0
        %887 = vmatpush1.msra.mxu0 0.0
        %888 = vmatprep.subr.mxu0 0.0
        %889 = vmatpush1.msra.mxu0 0.0
        %890 = vmatprep.subr.mxu0 0.0
        %891 = vmatpush1.msra.mxu0 0.0
        %892 = vmatprep.subr.mxu0 0.0
        %893 = vmatpush1.msra.mxu0 0.0
        %894 = vmatprep.subr.mxu0 0.0
        %895 = vmatpush1.msra.mxu0 0.0
        %896 = vmatprep.subr.mxu0 0.0
        %897 = vmatpush1.msra.mxu0 0.0
        %898 = vmatprep.subr.mxu0 0.0
        %899 = vmatpush1.msra.mxu0 0.0
        %900 = vmatprep.subr.mxu0 0.0
        %901 = vmatpush1.msra.mxu0 0.0
        %902 = vmatprep.subr.mxu0 0.0
        %903 = vmatpush1.msra.mxu0 0.0
        %904 = vmatprep.subr.mxu0 0.0
        %905 = vmatpush1.msra.mxu0 0.0
        %906 = vmatprep.subr.mxu0 0.0
        %907 = vmatpush1.msra.mxu0 0.0
        %908 = vmatprep.subr.mxu0 0.0
        %909 = vmatpush1.msra.mxu0 0.0
        %910 = vmatprep.subr.mxu0 0.0
        %911 = vmatpush1.msra.mxu0 0.0
        %912 = vmatprep.mubr.f32.mxu0 0.0
        %913 = vmatmul.mubr.f32.gmra.mrb[0].mxu0 %v846
        %v914 = vpop.f32.mrb[0].mxu0
        %v915 = vadd.f32 0.0, %v914
        %v916 = vpop.f32.mrb[0].mxu0
        %917 = vdwg.mxu0
        %s918 = scalar_lea.vmem %s1, 24
        %v919 = vld [vmem:[%s918] sm:$0x1f]
        %v921 = vsel %vm844, %v919, 0
        %923 = vmatprep.subr.mxu0 0.0
        %924 = vmatpush1.msra.mxu0 %v826
        %925 = vmatprep.subr.mxu0 0.0
        %926 = vmatpush1.msra.mxu0 0.0
        %927 = vmatprep.subr.mxu0 0.0
        %928 = vmatpush1.msra.mxu0 0.0
        %929 = vmatprep.subr.mxu0 0.0
        %930 = vmatpush1.msra.mxu0 0.0
        %931 = vmatprep.subr.mxu0 0.0
        %932 = vmatpush1.msra.mxu0 0.0
        %933 = vmatprep.subr.mxu0 0.0
        %934 = vmatpush1.msra.mxu0 0.0
        %935 = vmatprep.subr.mxu0 0.0
        %936 = vmatpush1.msra.mxu0 0.0
        %937 = vmatprep.subr.mxu0 0.0
        %938 = vmatpush1.msra.mxu0 0.0
        %939 = vmatprep.subr.mxu0 0.0
        %940 = vmatpush1.msra.mxu0 0.0
        %941 = vmatprep.subr.mxu0 0.0
        %942 = vmatpush1.msra.mxu0 0.0
        %943 = vmatprep.subr.mxu0 0.0
        %944 = vmatpush1.msra.mxu0 0.0
        %945 = vmatprep.subr.mxu0 0.0
        %946 = vmatpush1.msra.mxu0 0.0
        %947 = vmatprep.subr.mxu0 0.0
        %948 = vmatpush1.msra.mxu0 0.0
        %949 = vmatprep.subr.mxu0 0.0
        %950 = vmatpush1.msra.mxu0 0.0
        %951 = vmatprep.subr.mxu0 0.0
        %952 = vmatpush1.msra.mxu0 0.0
        %953 = vmatprep.subr.mxu0 0.0
        %954 = vmatpush1.msra.mxu0 0.0
        %955 = vmatprep.subr.mxu0 0.0
        %956 = vmatpush1.msra.mxu0 0.0
        %957 = vmatprep.subr.mxu0 0.0
        %958 = vmatpush1.msra.mxu0 0.0
        %959 = vmatprep.subr.mxu0 0.0
        %960 = vmatpush1.msra.mxu0 0.0
        %961 = vmatprep.subr.mxu0 0.0
        %962 = vmatpush1.msra.mxu0 0.0
        %963 = vmatprep.subr.mxu0 0.0
        %964 = vmatpush1.msra.mxu0 0.0
        %965 = vmatprep.subr.mxu0 0.0
        %966 = vmatpush1.msra.mxu0 0.0
        %967 = vmatprep.subr.mxu0 0.0
        %968 = vmatpush1.msra.mxu0 0.0
        %969 = vmatprep.subr.mxu0 0.0
        %970 = vmatpush1.msra.mxu0 0.0
        %971 = vmatprep.subr.mxu0 0.0
        %972 = vmatpush1.msra.mxu0 0.0
        %973 = vmatprep.subr.mxu0 0.0
        %974 = vmatpush1.msra.mxu0 0.0
        %975 = vmatprep.subr.mxu0 0.0
        %976 = vmatpush1.msra.mxu0 0.0
        %977 = vmatprep.subr.mxu0 0.0
        %978 = vmatpush1.msra.mxu0 0.0
        %979 = vmatprep.subr.mxu0 0.0
        %980 = vmatpush1.msra.mxu0 0.0
        %981 = vmatprep.subr.mxu0 0.0
        %982 = vmatpush1.msra.mxu0 0.0
        %983 = vmatprep.subr.mxu0 0.0
        %984 = vmatpush1.msra.mxu0 0.0
        %985 = vmatprep.subr.mxu0 0.0
        %986 = vmatpush1.msra.mxu0 0.0
        %987 = vmatprep.mubr.f32.mxu0 0.0
        %988 = vmatmul.mubr.f32.gmra.mrb[0].mxu0 %v921
        %v989 = vpop.f32.mrb[0].mxu0
        %v990 = vadd.f32 0.0, %v989
        %v991 = vpop.f32.mrb[0].mxu0
        %992 = vdwg.mxu0
        %v993 = vld [vmem:[#allocation2] sm:$0xff]
        %v994 = vld [vmem:[#allocation2 + $0x8] sm:$0xff]
        %v995 = vld [vmem:[#allocation2 + $0x10] sm:$0xff]
        %v996 = vld [vmem:[#allocation2 + $0x18] sm:$0xff]
        %v997 = vld [vmem:[#allocation2 + $0x20] sm:$0xff]
        %v998 = vld [vmem:[#allocation2 + $0x28] sm:$0xff]
        %v999 = vld [vmem:[#allocation2 + $0x30] sm:$0xff]
        %v1000 = vld [vmem:[#allocation2 + $0x38] sm:$0xff]
        %v1001 = vld [vmem:[#allocation2 + $0x40] sm:$0xff]
        %v1002 = vld [vmem:[#allocation2 + $0x48] sm:$0xff]
        %v1003 = vld [vmem:[#allocation2 + $0x50] sm:$0xff]
        %v1004 = vld [vmem:[#allocation2 + $0x58] sm:$0xff]
        %v1005 = vld [vmem:[#allocation2 + $0x60] sm:$0xff]
        %v1006 = vld [vmem:[#allocation2 + $0x68] sm:$0xff]
        %v1007 = vld [vmem:[#allocation2 + $0x70] sm:$0xff]
        %v1008 = vld [vmem:[#allocation2 + $0x78] sm:$0xff]
        %s1009 = scalar_lea.vmem [#allocation2], 384
        %v1010 = vld [vmem:[%s1009] sm:$0xff]
        %v1011 = vld [vmem:[%s1009 + $0x8] sm:$0xff]
        %v1012 = vld [vmem:[%s1009 + $0x10] sm:$0xff]
        %v1013 = vld [vmem:[%s1009 + $0x18] sm:$0xff]
        %v1014 = vld [vmem:[%s1009 + $0x20] sm:$0xff]
        %v1015 = vld [vmem:[%s1009 + $0x28] sm:$0xff]
        %v1016 = vld [vmem:[%s1009 + $0x30] sm:$0xff]
        %v1017 = vld [vmem:[%s1009 + $0x38] sm:$0xff]
        %v1018 = vld [vmem:[%s1009 + $0x40] sm:$0xff]
        %v1019 = vld [vmem:[%s1009 + $0x48] sm:$0xff]
        %v1020 = vld [vmem:[%s1009 + $0x50] sm:$0xff]
        %v1021 = vld [vmem:[%s1009 + $0x58] sm:$0xff]
        %v1022 = vld [vmem:[%s1009 + $0x60] sm:$0xff]
        %v1023 = vld [vmem:[%s1009 + $0x68] sm:$0xff]
        %v1024 = vld [vmem:[%s1009 + $0x70] sm:$0xff]
        %v1025 = vld [vmem:[%s1009 + $0x78] sm:$0xff]
        %s1026 = scalar_lea.vmem %s1, 8
        %v1027 = vld [vmem:[%s1026] sm:$0x1f]
        %v1029 = vsel %vm844, %v1027, 0
        %1031 = vmatprep.subr.mxu0 0.0
        %1032 = vmatpush1.msra.mxu0 %v826
        %1033 = vmatprep.subr.mxu0 0.0
        %1034 = vmatpush1.msra.mxu0 0.0
        %1035 = vmatprep.subr.mxu0 0.0
        %1036 = vmatpush1.msra.mxu0 0.0
        %1037 = vmatprep.subr.mxu0 0.0
        %1038 = vmatpush1.msra.mxu0 0.0
        %1039 = vmatprep.subr.mxu0 0.0
        %1040 = vmatpush1.msra.mxu0 0.0
        %1041 = vmatprep.subr.mxu0 0.0
        %1042 = vmatpush1.msra.mxu0 0.0
        %1043 = vmatprep.subr.mxu0 0.0
        %1044 = vmatpush1.msra.mxu0 0.0
        %1045 = vmatprep.subr.mxu0 0.0
        %1046 = vmatpush1.msra.mxu0 0.0
        %1047 = vmatprep.subr.mxu0 0.0
        %1048 = vmatpush1.msra.mxu0 0.0
        %1049 = vmatprep.subr.mxu0 0.0
        %1050 = vmatpush1.msra.mxu0 0.0
        %1051 = vmatprep.subr.mxu0 0.0
        %1052 = vmatpush1.msra.mxu0 0.0
        %1053 = vmatprep.subr.mxu0 0.0
        %1054 = vmatpush1.msra.mxu0 0.0
        %1055 = vmatprep.subr.mxu0 0.0
        %1056 = vmatpush1.msra.mxu0 0.0
        %1057 = vmatprep.subr.mxu0 0.0
        %1058 = vmatpush1.msra.mxu0 0.0
        %1059 = vmatprep.subr.mxu0 0.0
        %1060 = vmatpush1.msra.mxu0 0.0
        %1061 = vmatprep.subr.mxu0 0.0
        %1062 = vmatpush1.msra.mxu0 0.0
        %1063 = vmatprep.subr.mxu0 0.0
        %1064 = vmatpush1.msra.mxu0 0.0
        %1065 = vmatprep.subr.mxu0 0.0
        %1066 = vmatpush1.msra.mxu0 0.0
        %1067 = vmatprep.subr.mxu0 0.0
        %1068 = vmatpush1.msra.mxu0 0.0
        %1069 = vmatprep.subr.mxu0 0.0
        %1070 = vmatpush1.msra.mxu0 0.0
        %1071 = vmatprep.subr.mxu0 0.0
        %1072 = vmatpush1.msra.mxu0 0.0
        %1073 = vmatprep.subr.mxu0 0.0
        %1074 = vmatpush1.msra.mxu0 0.0
        %1075 = vmatprep.subr.mxu0 0.0
        %1076 = vmatpush1.msra.mxu0 0.0
        %1077 = vmatprep.subr.mxu0 0.0
        %1078 = vmatpush1.msra.mxu0 0.0
        %1079 = vmatprep.subr.mxu0 0.0
        %1080 = vmatpush1.msra.mxu0 0.0
        %1081 = vmatprep.subr.mxu0 0.0
        %1082 = vmatpush1.msra.mxu0 0.0
        %1083 = vmatprep.subr.mxu0 0.0
        %1084 = vmatpush1.msra.mxu0 0.0
        %1085 = vmatprep.subr.mxu0 0.0
        %1086 = vmatpush1.msra.mxu0 0.0
        %1087 = vmatprep.subr.mxu0 0.0
        %1088 = vmatpush1.msra.mxu0 0.0
        %1089 = vmatprep.subr.mxu0 0.0
        %1090 = vmatpush1.msra.mxu0 0.0
        %1091 = vmatprep.subr.mxu0 0.0
        %1092 = vmatpush1.msra.mxu0 0.0
        %1093 = vmatprep.subr.mxu0 0.0
        %1094 = vmatpush1.msra.mxu0 0.0
        %1095 = vmatprep.mubr.f32.mxu0 0.0
        %1096 = vmatmul.mubr.f32.gmra.mrb[0].mxu0 %v1029
        %v1097 = vpop.f32.mrb[0].mxu0
        %v1098 = vadd.f32 0.0, %v1097
        %v1099 = vpop.f32.mrb[0].mxu0
        %1100 = vdwg.mxu0
        %s1101 = scalar_lea.vmem %s1, 32
        %v1102 = vld [vmem:[%s1101] sm:$0x1f]
        %v1104 = vsel %vm844, %v1102, 0
        %1106 = vmatprep.subr.mxu0 0.0
        %1107 = vmatpush1.msra.mxu0 %v826
        %1108 = vmatprep.subr.mxu0 0.0
        %1109 = vmatpush1.msra.mxu0 0.0
        %1110 = vmatprep.subr.mxu0 0.0
        %1111 = vmatpush1.msra.mxu0 0.0
        %1112 = vmatprep.subr.mxu0 0.0
        %1113 = vmatpush1.msra.mxu0 0.0
        %1114 = vmatprep.subr.mxu0 0.0
        %1115 = vmatpush1.msra.mxu0 0.0
        %1116 = vmatprep.subr.mxu0 0.0
        %1117 = vmatpush1.msra.mxu0 0.0
        %1118 = vmatprep.subr.mxu0 0.0
        %1119 = vmatpush1.msra.mxu0 0.0
        %1120 = vmatprep.subr.mxu0 0.0
        %1121 = vmatpush1.msra.mxu0 0.0
        %1122 = vmatprep.subr.mxu0 0.0
        %1123 = vmatpush1.msra.mxu0 0.0
        %1124 = vmatprep.subr.mxu0 0.0
        %1125 = vmatpush1.msra.mxu0 0.0
        %1126 = vmatprep.subr.mxu0 0.0
        %1127 = vmatpush1.msra.mxu0 0.0
        %1128 = vmatprep.subr.mxu0 0.0
        %1129 = vmatpush1.msra.mxu0 0.0
        %1130 = vmatprep.subr.mxu0 0.0
        %1131 = vmatpush1.msra.mxu0 0.0
        %1132 = vmatprep.subr.mxu0 0.0
        %1133 = vmatpush1.msra.mxu0 0.0
        %1134 = vmatprep.subr.mxu0 0.0
        %1135 = vmatpush1.msra.mxu0 0.0
        %1136 = vmatprep.subr.mxu0 0.0
        %1137 = vmatpush1.msra.mxu0 0.0
        %1138 = vmatprep.subr.mxu0 0.0
        %1139 = vmatpush1.msra.mxu0 0.0
        %1140 = vmatprep.subr.mxu0 0.0
        %1141 = vmatpush1.msra.mxu0 0.0
        %1142 = vmatprep.subr.mxu0 0.0
        %1143 = vmatpush1.msra.mxu0 0.0
        %1144 = vmatprep.subr.mxu0 0.0
        %1145 = vmatpush1.msra.mxu0 0.0
        %1146 = vmatprep.subr.mxu0 0.0
        %1147 = vmatpush1.msra.mxu0 0.0
        %1148 = vmatprep.subr.mxu0 0.0
        %1149 = vmatpush1.msra.mxu0 0.0
        %1150 = vmatprep.subr.mxu0 0.0
        %1151 = vmatpush1.msra.mxu0 0.0
        %1152 = vmatprep.subr.mxu0 0.0
        %1153 = vmatpush1.msra.mxu0 0.0
        %1154 = vmatprep.subr.mxu0 0.0
        %1155 = vmatpush1.msra.mxu0 0.0
        %1156 = vmatprep.subr.mxu0 0.0
        %1157 = vmatpush1.msra.mxu0 0.0
        %1158 = vmatprep.subr.mxu0 0.0
        %1159 = vmatpush1.msra.mxu0 0.0
        %1160 = vmatprep.subr.mxu0 0.0
        %1161 = vmatpush1.msra.mxu0 0.0
        %1162 = vmatprep.subr.mxu0 0.0
        %1163 = vmatpush1.msra.mxu0 0.0
        %1164 = vmatprep.subr.mxu0 0.0
        %1165 = vmatpush1.msra.mxu0 0.0
        %1166 = vmatprep.subr.mxu0 0.0
        %1167 = vmatpush1.msra.mxu0 0.0
        %1168 = vmatprep.subr.mxu0 0.0
        %1169 = vmatpush1.msra.mxu0 0.0
        %1170 = vmatprep.mubr.f32.mxu0 0.0
        %1171 = vmatmul.mubr.f32.gmra.mrb[0].mxu0 %v1104
        %v1172 = vpop.f32.mrb[0].mxu0
        %v1173 = vadd.f32 0.0, %v1172
        %v1174 = vpop.f32.mrb[0].mxu0
        %1175 = vdwg.mxu0
        %s1176 = scalar_lea.vmem [#allocation2], 128
        %v1177 = vld [vmem:[%s1176] sm:$0xff]
        %v1178 = vld [vmem:[%s1176 + $0x8] sm:$0xff]
        %v1179 = vld [vmem:[%s1176 + $0x10] sm:$0xff]
        %v1180 = vld [vmem:[%s1176 + $0x18] sm:$0xff]
        %v1181 = vld [vmem:[%s1176 + $0x20] sm:$0xff]
        %v1182 = vld [vmem:[%s1176 + $0x28] sm:$0xff]
        %v1183 = vld [vmem:[%s1176 + $0x30] sm:$0xff]
        %v1184 = vld [vmem:[%s1176 + $0x38] sm:$0xff]
        %v1185 = vld [vmem:[%s1176 + $0x40] sm:$0xff]
        %v1186 = vld [vmem:[%s1176 + $0x48] sm:$0xff]
        %v1187 = vld [vmem:[%s1176 + $0x50] sm:$0xff]
        %v1188 = vld [vmem:[%s1176 + $0x58] sm:$0xff]
        %v1189 = vld [vmem:[%s1176 + $0x60] sm:$0xff]
        %v1190 = vld [vmem:[%s1176 + $0x68] sm:$0xff]
        %v1191 = vld [vmem:[%s1176 + $0x70] sm:$0xff]
        %v1192 = vld [vmem:[%s1176 + $0x78] sm:$0xff]
        %1193 = vmatprep.subr.mxu0 0.0
        %1194 = vmatpush1.msra.mxu0 %v1177
        %1195 = vmatprep.subr.mxu0 0.0
        %1196 = vmatpush1.msra.mxu0 %v1178
        %1197 = vmatprep.subr.mxu0 0.0
        %1198 = vmatpush1.msra.mxu0 %v1179
        %1199 = vmatprep.subr.mxu0 0.0
        %1200 = vmatpush1.msra.mxu0 %v1180
        %1201 = vmatprep.subr.mxu0 0.0
        %1202 = vmatpush1.msra.mxu0 %v1181
        %1203 = vmatprep.subr.mxu0 0.0
        %1204 = vmatpush1.msra.mxu0 %v1182
        %1205 = vmatprep.subr.mxu0 0.0
        %1206 = vmatpush1.msra.mxu0 %v1183
        %1207 = vmatprep.subr.mxu0 0.0
        %1208 = vmatpush1.msra.mxu0 %v1184
        %1209 = vmatprep.subr.mxu0 0.0
        %1210 = vmatpush1.msra.mxu0 %v1185
        %1211 = vmatprep.subr.mxu0 0.0
        %1212 = vmatpush1.msra.mxu0 %v1186
        %1213 = vmatprep.subr.mxu0 0.0
        %1214 = vmatpush1.msra.mxu0 %v1187
        %1215 = vmatprep.subr.mxu0 0.0
        %1216 = vmatpush1.msra.mxu0 %v1188
        %1217 = vmatprep.subr.mxu0 0.0
        %1218 = vmatpush1.msra.mxu0 %v1189
        %1219 = vmatprep.subr.mxu0 0.0
        %1220 = vmatpush1.msra.mxu0 %v1190
        %1221 = vmatprep.subr.mxu0 0.0
        %1222 = vmatpush1.msra.mxu0 %v1191
        %1223 = vmatprep.subr.mxu0 0.0
        %1224 = vmatpush1.msra.mxu0 %v1192
        %1225 = vmatprep.subr.mxu0 0.0
        %1226 = vmatpush1.msra.mxu0 0.0
        %1227 = vmatprep.subr.mxu0 0.0
        %1228 = vmatpush1.msra.mxu0 0.0
        %1229 = vmatprep.subr.mxu0 0.0
        %1230 = vmatpush1.msra.mxu0 0.0
        %1231 = vmatprep.subr.mxu0 0.0
        %1232 = vmatpush1.msra.mxu0 0.0
        %1233 = vmatprep.subr.mxu0 0.0
        %1234 = vmatpush1.msra.mxu0 0.0
        %1235 = vmatprep.subr.mxu0 0.0
        %1236 = vmatpush1.msra.mxu0 0.0
        %1237 = vmatprep.subr.mxu0 0.0
        %1238 = vmatpush1.msra.mxu0 0.0
        %1239 = vmatprep.subr.mxu0 0.0
        %1240 = vmatpush1.msra.mxu0 0.0
        %1241 = vmatprep.subr.mxu0 0.0
        %1242 = vmatpush1.msra.mxu0 0.0
        %1243 = vmatprep.subr.mxu0 0.0
        %1244 = vmatpush1.msra.mxu0 0.0
        %1245 = vmatprep.subr.mxu0 0.0
        %1246 = vmatpush1.msra.mxu0 0.0
        %1247 = vmatprep.subr.mxu0 0.0
        %1248 = vmatpush1.msra.mxu0 0.0
        %1249 = vmatprep.subr.mxu0 0.0
        %1250 = vmatpush1.msra.mxu0 0.0
        %1251 = vmatprep.subr.mxu0 0.0
        %1252 = vmatpush1.msra.mxu0 0.0
        %1253 = vmatprep.subr.mxu0 0.0
        %1254 = vmatpush1.msra.mxu0 0.0
        %1255 = vmatprep.subr.mxu0 0.0
        %1256 = vmatpush1.msra.mxu0 0.0
        %1257 = vmatprep.mubr.f32.mxu0 0.0
        %1258 = vmatmul.mubr.f32.gmra.mrb[0].mxu0 %v1098
        %v1259 = vpop.f32.mrb[0].mxu0
        %v1260 = vadd.f32 0.0, %v1259
        %v1261 = vpop.f32.mrb[0].mxu0
        %1262 = vdwg.mxu0
        %1263 = vmatprep.subr.mxu0 0.0
        %1264 = vmatpush1.msra.mxu0 %v993
        %1265 = vmatprep.subr.mxu0 0.0
        %1266 = vmatpush1.msra.mxu0 %v994
        %1267 = vmatprep.subr.mxu0 0.0
        %1268 = vmatpush1.msra.mxu0 %v995
        %1269 = vmatprep.subr.mxu0 0.0
        %1270 = vmatpush1.msra.mxu0 %v996
        %1271 = vmatprep.subr.mxu0 0.0
        %1272 = vmatpush1.msra.mxu0 %v997
        %1273 = vmatprep.subr.mxu0 0.0
        %1274 = vmatpush1.msra.mxu0 %v998
        %1275 = vmatprep.subr.mxu0 0.0
        %1276 = vmatpush1.msra.mxu0 %v999
        %1277 = vmatprep.subr.mxu0 0.0
        %1278 = vmatpush1.msra.mxu0 %v1000
        %1279 = vmatprep.subr.mxu0 0.0
        %1280 = vmatpush1.msra.mxu0 %v1001
        %1281 = vmatprep.subr.mxu0 0.0
        %1282 = vmatpush1.msra.mxu0 %v1002
        %1283 = vmatprep.subr.mxu0 0.0
        %1284 = vmatpush1.msra.mxu0 %v1003
        %1285 = vmatprep.subr.mxu0 0.0
        %1286 = vmatpush1.msra.mxu0 %v1004
        %1287 = vmatprep.subr.mxu0 0.0
        %1288 = vmatpush1.msra.mxu0 %v1005
        %1289 = vmatprep.subr.mxu0 0.0
        %1290 = vmatpush1.msra.mxu0 %v1006
        %1291 = vmatprep.subr.mxu0 0.0
        %1292 = vmatpush1.msra.mxu0 %v1007
        %1293 = vmatprep.subr.mxu0 0.0
        %1294 = vmatpush1.msra.mxu0 %v1008
        %1295 = vmatprep.subr.mxu0 0.0
        %1296 = vmatpush1.msra.mxu0 0.0
        %1297 = vmatprep.subr.mxu0 0.0
        %1298 = vmatpush1.msra.mxu0 0.0
        %1299 = vmatprep.subr.mxu0 0.0
        %1300 = vmatpush1.msra.mxu0 0.0
        %1301 = vmatprep.subr.mxu0 0.0
        %1302 = vmatpush1.msra.mxu0 0.0
        %1303 = vmatprep.subr.mxu0 0.0
        %1304 = vmatpush1.msra.mxu0 0.0
        %1305 = vmatprep.subr.mxu0 0.0
        %1306 = vmatpush1.msra.mxu0 0.0
        %1307 = vmatprep.subr.mxu0 0.0
        %1308 = vmatpush1.msra.mxu0 0.0
        %1309 = vmatprep.subr.mxu0 0.0
        %1310 = vmatpush1.msra.mxu0 0.0
        %1311 = vmatprep.subr.mxu0 0.0
        %1312 = vmatpush1.msra.mxu0 0.0
        %1313 = vmatprep.subr.mxu0 0.0
        %1314 = vmatpush1.msra.mxu0 0.0
        %1315 = vmatprep.subr.mxu0 0.0
        %1316 = vmatpush1.msra.mxu0 0.0
        %1317 = vmatprep.subr.mxu0 0.0
        %1318 = vmatpush1.msra.mxu0 0.0
        %1319 = vmatprep.subr.mxu0 0.0
        %1320 = vmatpush1.msra.mxu0 0.0
        %1321 = vmatprep.subr.mxu0 0.0
        %1322 = vmatpush1.msra.mxu0 0.0
        %1323 = vmatprep.subr.mxu0 0.0
        %1324 = vmatpush1.msra.mxu0 0.0
        %1325 = vmatprep.subr.mxu0 0.0
        %1326 = vmatpush1.msra.mxu0 0.0
        %1327 = vmatprep.mubr.f32.mxu0 0.0
        %1328 = vmatmul.mubr.f32.gmra.mrb[0].mxu0 %v915
        %v1329 = vpop.f32.mrb[0].mxu0
        %v1330 = vadd.f32 %v1260, %v1329
        %v1331 = vpop.f32.mrb[0].mxu0
        %1332 = vdwg.mxu0
        %s1333 = scalar_lea.vmem [#allocation2], 512
        %v1334 = vld [vmem:[%s1333] sm:$0xff]
        %v1335 = vld [vmem:[%s1333 + $0x8] sm:$0xff]
        %v1336 = vld [vmem:[%s1333 + $0x10] sm:$0xff]
        %v1337 = vld [vmem:[%s1333 + $0x18] sm:$0xff]
        %v1338 = vld [vmem:[%s1333 + $0x20] sm:$0xff]
        %v1339 = vld [vmem:[%s1333 + $0x28] sm:$0xff]
        %v1340 = vld [vmem:[%s1333 + $0x30] sm:$0xff]
        %v1341 = vld [vmem:[%s1333 + $0x38] sm:$0xff]
        %v1342 = vld [vmem:[%s1333 + $0x40] sm:$0xff]
        %v1343 = vld [vmem:[%s1333 + $0x48] sm:$0xff]
        %v1344 = vld [vmem:[%s1333 + $0x50] sm:$0xff]
        %v1345 = vld [vmem:[%s1333 + $0x58] sm:$0xff]
        %v1346 = vld [vmem:[%s1333 + $0x60] sm:$0xff]
        %v1347 = vld [vmem:[%s1333 + $0x68] sm:$0xff]
        %v1348 = vld [vmem:[%s1333 + $0x70] sm:$0xff]
        %v1349 = vld [vmem:[%s1333 + $0x78] sm:$0xff]
        %1350 = vmatprep.subr.mxu0 0.0
        %1351 = vmatpush1.msra.mxu0 %v1334
        %1352 = vmatprep.subr.mxu0 0.0
        %1353 = vmatpush1.msra.mxu0 %v1335
        %1354 = vmatprep.subr.mxu0 0.0
        %1355 = vmatpush1.msra.mxu0 %v1336
        %1356 = vmatprep.subr.mxu0 0.0
        %1357 = vmatpush1.msra.mxu0 %v1337
        %1358 = vmatprep.subr.mxu0 0.0
        %1359 = vmatpush1.msra.mxu0 %v1338
        %1360 = vmatprep.subr.mxu0 0.0
        %1361 = vmatpush1.msra.mxu0 %v1339
        %1362 = vmatprep.subr.mxu0 0.0
        %1363 = vmatpush1.msra.mxu0 %v1340
        %1364 = vmatprep.subr.mxu0 0.0
        %1365 = vmatpush1.msra.mxu0 %v1341
        %1366 = vmatprep.subr.mxu0 0.0
        %1367 = vmatpush1.msra.mxu0 %v1342
        %1368 = vmatprep.subr.mxu0 0.0
        %1369 = vmatpush1.msra.mxu0 %v1343
        %1370 = vmatprep.subr.mxu0 0.0
        %1371 = vmatpush1.msra.mxu0 %v1344
        %1372 = vmatprep.subr.mxu0 0.0
        %1373 = vmatpush1.msra.mxu0 %v1345
        %1374 = vmatprep.subr.mxu0 0.0
        %1375 = vmatpush1.msra.mxu0 %v1346
        %1376 = vmatprep.subr.mxu0 0.0
        %1377 = vmatpush1.msra.mxu0 %v1347
        %1378 = vmatprep.subr.mxu0 0.0
        %1379 = vmatpush1.msra.mxu0 %v1348
        %1380 = vmatprep.subr.mxu0 0.0
        %1381 = vmatpush1.msra.mxu0 %v1349
        %1382 = vmatprep.subr.mxu0 0.0
        %1383 = vmatpush1.msra.mxu0 0.0
        %1384 = vmatprep.subr.mxu0 0.0
        %1385 = vmatpush1.msra.mxu0 0.0
        %1386 = vmatprep.subr.mxu0 0.0
        %1387 = vmatpush1.msra.mxu0 0.0
        %1388 = vmatprep.subr.mxu0 0.0
        %1389 = vmatpush1.msra.mxu0 0.0
        %1390 = vmatprep.subr.mxu0 0.0
        %1391 = vmatpush1.msra.mxu0 0.0
        %1392 = vmatprep.subr.mxu0 0.0
        %1393 = vmatpush1.msra.mxu0 0.0
        %1394 = vmatprep.subr.mxu0 0.0
        %1395 = vmatpush1.msra.mxu0 0.0
        %1396 = vmatprep.subr.mxu0 0.0
        %1397 = vmatpush1.msra.mxu0 0.0
        %1398 = vmatprep.subr.mxu0 0.0
        %1399 = vmatpush1.msra.mxu0 0.0
        %1400 = vmatprep.subr.mxu0 0.0
        %1401 = vmatpush1.msra.mxu0 0.0
        %1402 = vmatprep.subr.mxu0 0.0
        %1403 = vmatpush1.msra.mxu0 0.0
        %1404 = vmatprep.subr.mxu0 0.0
        %1405 = vmatpush1.msra.mxu0 0.0
        %1406 = vmatprep.subr.mxu0 0.0
        %1407 = vmatpush1.msra.mxu0 0.0
        %1408 = vmatprep.subr.mxu0 0.0
        %1409 = vmatpush1.msra.mxu0 0.0
        %1410 = vmatprep.subr.mxu0 0.0
        %1411 = vmatpush1.msra.mxu0 0.0
        %1412 = vmatprep.subr.mxu0 0.0
        %1413 = vmatpush1.msra.mxu0 0.0
        %1414 = vmatprep.mubr.f32.mxu0 0.0
        %1415 = vmatmul.mubr.f32.gmra.mrb[0].mxu0 %v1173
        %v1416 = vpop.f32.mrb[0].mxu0
        %v1417 = vadd.f32 0.0, %v1416
        %v1418 = vpop.f32.mrb[0].mxu0
        %1419 = vdwg.mxu0
        %1420 = vmatprep.subr.mxu0 0.0
        %1421 = vmatpush1.msra.mxu0 %v1010
        %1422 = vmatprep.subr.mxu0 0.0
        %1423 = vmatpush1.msra.mxu0 %v1011
        %1424 = vmatprep.subr.mxu0 0.0
        %1425 = vmatpush1.msra.mxu0 %v1012
        %1426 = vmatprep.subr.mxu0 0.0
        %1427 = vmatpush1.msra.mxu0 %v1013
        %1428 = vmatprep.subr.mxu0 0.0
        %1429 = vmatpush1.msra.mxu0 %v1014
        %1430 = vmatprep.subr.mxu0 0.0
        %1431 = vmatpush1.msra.mxu0 %v1015
        %1432 = vmatprep.subr.mxu0 0.0
        %1433 = vmatpush1.msra.mxu0 %v1016
        %1434 = vmatprep.subr.mxu0 0.0
        %1435 = vmatpush1.msra.mxu0 %v1017
        %1436 = vmatprep.subr.mxu0 0.0
        %1437 = vmatpush1.msra.mxu0 %v1018
        %1438 = vmatprep.subr.mxu0 0.0
        %1439 = vmatpush1.msra.mxu0 %v1019
        %1440 = vmatprep.subr.mxu0 0.0
        %1441 = vmatpush1.msra.mxu0 %v1020
        %1442 = vmatprep.subr.mxu0 0.0
        %1443 = vmatpush1.msra.mxu0 %v1021
        %1444 = vmatprep.subr.mxu0 0.0
        %1445 = vmatpush1.msra.mxu0 %v1022
        %1446 = vmatprep.subr.mxu0 0.0
        %1447 = vmatpush1.msra.mxu0 %v1023
        %1448 = vmatprep.subr.mxu0 0.0
        %1449 = vmatpush1.msra.mxu0 %v1024
        %1450 = vmatprep.subr.mxu0 0.0
        %1451 = vmatpush1.msra.mxu0 %v1025
        %1452 = vmatprep.subr.mxu0 0.0
        %1453 = vmatpush1.msra.mxu0 0.0
        %1454 = vmatprep.subr.mxu0 0.0
        %1455 = vmatpush1.msra.mxu0 0.0
        %1456 = vmatprep.subr.mxu0 0.0
        %1457 = vmatpush1.msra.mxu0 0.0
        %1458 = vmatprep.subr.mxu0 0.0
        %1459 = vmatpush1.msra.mxu0 0.0
        %1460 = vmatprep.subr.mxu0 0.0
        %1461 = vmatpush1.msra.mxu0 0.0
        %1462 = vmatprep.subr.mxu0 0.0
        %1463 = vmatpush1.msra.mxu0 0.0
        %1464 = vmatprep.subr.mxu0 0.0
        %1465 = vmatpush1.msra.mxu0 0.0
        %1466 = vmatprep.subr.mxu0 0.0
        %1467 = vmatpush1.msra.mxu0 0.0
        %1468 = vmatprep.subr.mxu0 0.0
        %1469 = vmatpush1.msra.mxu0 0.0
        %1470 = vmatprep.subr.mxu0 0.0
        %1471 = vmatpush1.msra.mxu0 0.0
        %1472 = vmatprep.subr.mxu0 0.0
        %1473 = vmatpush1.msra.mxu0 0.0
        %1474 = vmatprep.subr.mxu0 0.0
        %1475 = vmatpush1.msra.mxu0 0.0
        %1476 = vmatprep.subr.mxu0 0.0
        %1477 = vmatpush1.msra.mxu0 0.0
        %1478 = vmatprep.subr.mxu0 0.0
        %1479 = vmatpush1.msra.mxu0 0.0
        %1480 = vmatprep.subr.mxu0 0.0
        %1481 = vmatpush1.msra.mxu0 0.0
        %1482 = vmatprep.subr.mxu0 0.0
        %1483 = vmatpush1.msra.mxu0 0.0
        %1484 = vmatprep.mubr.f32.mxu0 0.0
        %1485 = vmatmul.mubr.f32.gmra.mrb[0].mxu0 %v990
        %v1486 = vpop.f32.mrb[0].mxu0
        %v1487 = vadd.f32 %v1417, %v1486
        %v1488 = vpop.f32.mrb[0].mxu0
        %1489 = vdwg.mxu0
        %s1490 = scalar_lea.vmem %s1, 16
        %v1491 = vld [vmem:[%s1490] sm:$0x1f]
        %v1493 = vsel %vm844, %v1491, 0
        %1495 = vmatprep.subr.mxu0 0.0
        %1496 = vmatpush1.msra.mxu0 %v826
        %1497 = vmatprep.subr.mxu0 0.0
        %1498 = vmatpush1.msra.mxu0 0.0
        %1499 = vmatprep.subr.mxu0 0.0
        %1500 = vmatpush1.msra.mxu0 0.0
        %1501 = vmatprep.subr.mxu0 0.0
        %1502 = vmatpush1.msra.mxu0 0.0
        %1503 = vmatprep.subr.mxu0 0.0
        %1504 = vmatpush1.msra.mxu0 0.0
        %1505 = vmatprep.subr.mxu0 0.0
        %1506 = vmatpush1.msra.mxu0 0.0
        %1507 = vmatprep.subr.mxu0 0.0
        %1508 = vmatpush1.msra.mxu0 0.0
        %1509 = vmatprep.subr.mxu0 0.0
        %1510 = vmatpush1.msra.mxu0 0.0
        %1511 = vmatprep.subr.mxu0 0.0
        %1512 = vmatpush1.msra.mxu0 0.0
        %1513 = vmatprep.subr.mxu0 0.0
        %1514 = vmatpush1.msra.mxu0 0.0
        %1515 = vmatprep.subr.mxu0 0.0
        %1516 = vmatpush1.msra.mxu0 0.0
        %1517 = vmatprep.subr.mxu0 0.0
        %1518 = vmatpush1.msra.mxu0 0.0
        %1519 = vmatprep.subr.mxu0 0.0
        %1520 = vmatpush1.msra.mxu0 0.0
        %1521 = vmatprep.subr.mxu0 0.0
        %1522 = vmatpush1.msra.mxu0 0.0
        %1523 = vmatprep.subr.mxu0 0.0
        %1524 = vmatpush1.msra.mxu0 0.0
        %1525 = vmatprep.subr.mxu0 0.0
        %1526 = vmatpush1.msra.mxu0 0.0
        %1527 = vmatprep.subr.mxu0 0.0
        %1528 = vmatpush1.msra.mxu0 0.0
        %1529 = vmatprep.subr.mxu0 0.0
        %1530 = vmatpush1.msra.mxu0 0.0
        %1531 = vmatprep.subr.mxu0 0.0
        %1532 = vmatpush1.msra.mxu0 0.0
        %1533 = vmatprep.subr.mxu0 0.0
        %1534 = vmatpush1.msra.mxu0 0.0
        %1535 = vmatprep.subr.mxu0 0.0
        %1536 = vmatpush1.msra.mxu0 0.0
        %1537 = vmatprep.subr.mxu0 0.0
        %1538 = vmatpush1.msra.mxu0 0.0
        %1539 = vmatprep.subr.mxu0 0.0
        %1540 = vmatpush1.msra.mxu0 0.0
        %1541 = vmatprep.subr.mxu0 0.0
        %1542 = vmatpush1.msra.mxu0 0.0
        %1543 = vmatprep.subr.mxu0 0.0
        %1544 = vmatpush1.msra.mxu0 0.0
        %1545 = vmatprep.subr.mxu0 0.0
        %1546 = vmatpush1.msra.mxu0 0.0
        %1547 = vmatprep.subr.mxu0 0.0
        %1548 = vmatpush1.msra.mxu0 0.0
        %1549 = vmatprep.subr.mxu0 0.0
        %1550 = vmatpush1.msra.mxu0 0.0
        %1551 = vmatprep.subr.mxu0 0.0
        %1552 = vmatpush1.msra.mxu0 0.0
        %1553 = vmatprep.subr.mxu0 0.0
        %1554 = vmatpush1.msra.mxu0 0.0
        %1555 = vmatprep.subr.mxu0 0.0
        %1556 = vmatpush1.msra.mxu0 0.0
        %1557 = vmatprep.subr.mxu0 0.0
        %1558 = vmatpush1.msra.mxu0 0.0
        %1559 = vmatprep.mubr.f32.mxu0 0.0
        %1560 = vmatmul.mubr.f32.gmra.mrb[0].mxu0 %v1493
        %v1561 = vpop.f32.mrb[0].mxu0
        %v1562 = vadd.f32 0.0, %v1561
        %v1563 = vpop.f32.mrb[0].mxu0
        %1564 = vdwg.mxu0
        %s1565 = scalar_lea.vmem %s1, 40
        %v1566 = vld [vmem:[%s1565] sm:$0x1f]
        %v1568 = vsel %vm844, %v1566, 0
        %1570 = vmatprep.subr.mxu0 0.0
        %1571 = vmatpush1.msra.mxu0 %v826
        %1572 = vmatprep.subr.mxu0 0.0
        %1573 = vmatpush1.msra.mxu0 0.0
        %1574 = vmatprep.subr.mxu0 0.0
        %1575 = vmatpush1.msra.mxu0 0.0
        %1576 = vmatprep.subr.mxu0 0.0
        %1577 = vmatpush1.msra.mxu0 0.0
        %1578 = vmatprep.subr.mxu0 0.0
        %1579 = vmatpush1.msra.mxu0 0.0
        %1580 = vmatprep.subr.mxu0 0.0
        %1581 = vmatpush1.msra.mxu0 0.0
        %1582 = vmatprep.subr.mxu0 0.0
        %1583 = vmatpush1.msra.mxu0 0.0
        %1584 = vmatprep.subr.mxu0 0.0
        %1585 = vmatpush1.msra.mxu0 0.0
        %1586 = vmatprep.subr.mxu0 0.0
        %1587 = vmatpush1.msra.mxu0 0.0
        %1588 = vmatprep.subr.mxu0 0.0
        %1589 = vmatpush1.msra.mxu0 0.0
        %1590 = vmatprep.subr.mxu0 0.0
        %1591 = vmatpush1.msra.mxu0 0.0
        %1592 = vmatprep.subr.mxu0 0.0
        %1593 = vmatpush1.msra.mxu0 0.0
        %1594 = vmatprep.subr.mxu0 0.0
        %1595 = vmatpush1.msra.mxu0 0.0
        %1596 = vmatprep.subr.mxu0 0.0
        %1597 = vmatpush1.msra.mxu0 0.0
        %1598 = vmatprep.subr.mxu0 0.0
        %1599 = vmatpush1.msra.mxu0 0.0
        %1600 = vmatprep.subr.mxu0 0.0
        %1601 = vmatpush1.msra.mxu0 0.0
        %1602 = vmatprep.subr.mxu0 0.0
        %1603 = vmatpush1.msra.mxu0 0.0
        %1604 = vmatprep.subr.mxu0 0.0
        %1605 = vmatpush1.msra.mxu0 0.0
        %1606 = vmatprep.subr.mxu0 0.0
        %1607 = vmatpush1.msra.mxu0 0.0
        %1608 = vmatprep.subr.mxu0 0.0
        %1609 = vmatpush1.msra.mxu0 0.0
        %1610 = vmatprep.subr.mxu0 0.0
        %1611 = vmatpush1.msra.mxu0 0.0
        %1612 = vmatprep.subr.mxu0 0.0
        %1613 = vmatpush1.msra.mxu0 0.0
        %1614 = vmatprep.subr.mxu0 0.0
        %1615 = vmatpush1.msra.mxu0 0.0
        %1616 = vmatprep.subr.mxu0 0.0
        %1617 = vmatpush1.msra.mxu0 0.0
        %1618 = vmatprep.subr.mxu0 0.0
        %1619 = vmatpush1.msra.mxu0 0.0
        %1620 = vmatprep.subr.mxu0 0.0
        %1621 = vmatpush1.msra.mxu0 0.0
        %1622 = vmatprep.subr.mxu0 0.0
        %1623 = vmatpush1.msra.mxu0 0.0
        %1624 = vmatprep.subr.mxu0 0.0
        %1625 = vmatpush1.msra.mxu0 0.0
        %1626 = vmatprep.subr.mxu0 0.0
        %1627 = vmatpush1.msra.mxu0 0.0
        %1628 = vmatprep.subr.mxu0 0.0
        %1629 = vmatpush1.msra.mxu0 0.0
        %1630 = vmatprep.subr.mxu0 0.0
        %1631 = vmatpush1.msra.mxu0 0.0
        %1632 = vmatprep.subr.mxu0 0.0
        %1633 = vmatpush1.msra.mxu0 0.0
        %1634 = vmatprep.mubr.f32.mxu0 0.0
        %1635 = vmatmul.mubr.f32.gmra.mrb[0].mxu0 %v1568
        %v1636 = vpop.f32.mrb[0].mxu0
        %v1637 = vadd.f32 0.0, %v1636
        %v1638 = vpop.f32.mrb[0].mxu0
        %1639 = vdwg.mxu0
        %s1640 = scalar_lea.vmem [#allocation2], 256
        %v1641 = vld [vmem:[%s1640] sm:$0xff]
        %v1642 = vld [vmem:[%s1640 + $0x8] sm:$0xff]
        %v1643 = vld [vmem:[%s1640 + $0x10] sm:$0xff]
        %v1644 = vld [vmem:[%s1640 + $0x18] sm:$0xff]
        %v1645 = vld [vmem:[%s1640 + $0x20] sm:$0xff]
        %v1646 = vld [vmem:[%s1640 + $0x28] sm:$0xff]
        %v1647 = vld [vmem:[%s1640 + $0x30] sm:$0xff]
        %v1648 = vld [vmem:[%s1640 + $0x38] sm:$0xff]
        %v1649 = vld [vmem:[%s1640 + $0x40] sm:$0xff]
        %v1650 = vld [vmem:[%s1640 + $0x48] sm:$0xff]
        %v1651 = vld [vmem:[%s1640 + $0x50] sm:$0xff]
        %v1652 = vld [vmem:[%s1640 + $0x58] sm:$0xff]
        %v1653 = vld [vmem:[%s1640 + $0x60] sm:$0xff]
        %v1654 = vld [vmem:[%s1640 + $0x68] sm:$0xff]
        %v1655 = vld [vmem:[%s1640 + $0x70] sm:$0xff]
        %v1656 = vld [vmem:[%s1640 + $0x78] sm:$0xff]
        %1657 = vmatprep.subr.mxu0 0.0
        %1658 = vmatpush1.msra.mxu0 %v1641
        %1659 = vmatprep.subr.mxu0 0.0
        %1660 = vmatpush1.msra.mxu0 %v1642
        %1661 = vmatprep.subr.mxu0 0.0
        %1662 = vmatpush1.msra.mxu0 %v1643
        %1663 = vmatprep.subr.mxu0 0.0
        %1664 = vmatpush1.msra.mxu0 %v1644
        %1665 = vmatprep.subr.mxu0 0.0
        %1666 = vmatpush1.msra.mxu0 %v1645
        %1667 = vmatprep.subr.mxu0 0.0
        %1668 = vmatpush1.msra.mxu0 %v1646
        %1669 = vmatprep.subr.mxu0 0.0
        %1670 = vmatpush1.msra.mxu0 %v1647
        %1671 = vmatprep.subr.mxu0 0.0
        %1672 = vmatpush1.msra.mxu0 %v1648
        %1673 = vmatprep.subr.mxu0 0.0
        %1674 = vmatpush1.msra.mxu0 %v1649
        %1675 = vmatprep.subr.mxu0 0.0
        %1676 = vmatpush1.msra.mxu0 %v1650
        %1677 = vmatprep.subr.mxu0 0.0
        %1678 = vmatpush1.msra.mxu0 %v1651
        %1679 = vmatprep.subr.mxu0 0.0
        %1680 = vmatpush1.msra.mxu0 %v1652
        %1681 = vmatprep.subr.mxu0 0.0
        %1682 = vmatpush1.msra.mxu0 %v1653
        %1683 = vmatprep.subr.mxu0 0.0
        %1684 = vmatpush1.msra.mxu0 %v1654
        %1685 = vmatprep.subr.mxu0 0.0
        %1686 = vmatpush1.msra.mxu0 %v1655
        %1687 = vmatprep.subr.mxu0 0.0
        %1688 = vmatpush1.msra.mxu0 %v1656
        %1689 = vmatprep.subr.mxu0 0.0
        %1690 = vmatpush1.msra.mxu0 0.0
        %1691 = vmatprep.subr.mxu0 0.0
        %1692 = vmatpush1.msra.mxu0 0.0
        %1693 = vmatprep.subr.mxu0 0.0
        %1694 = vmatpush1.msra.mxu0 0.0
        %1695 = vmatprep.subr.mxu0 0.0
        %1696 = vmatpush1.msra.mxu0 0.0
        %1697 = vmatprep.subr.mxu0 0.0
        %1698 = vmatpush1.msra.mxu0 0.0
        %1699 = vmatprep.subr.mxu0 0.0
        %1700 = vmatpush1.msra.mxu0 0.0
        %1701 = vmatprep.subr.mxu0 0.0
        %1702 = vmatpush1.msra.mxu0 0.0
        %1703 = vmatprep.subr.mxu0 0.0
        %1704 = vmatpush1.msra.mxu0 0.0
        %1705 = vmatprep.subr.mxu0 0.0
        %1706 = vmatpush1.msra.mxu0 0.0
        %1707 = vmatprep.subr.mxu0 0.0
        %1708 = vmatpush1.msra.mxu0 0.0
        %1709 = vmatprep.subr.mxu0 0.0
        %1710 = vmatpush1.msra.mxu0 0.0
        %1711 = vmatprep.subr.mxu0 0.0
        %1712 = vmatpush1.msra.mxu0 0.0
        %1713 = vmatprep.subr.mxu0 0.0
        %1714 = vmatpush1.msra.mxu0 0.0
        %1715 = vmatprep.subr.mxu0 0.0
        %1716 = vmatpush1.msra.mxu0 0.0
        %1717 = vmatprep.subr.mxu0 0.0
        %1718 = vmatpush1.msra.mxu0 0.0
        %1719 = vmatprep.subr.mxu0 0.0
        %1720 = vmatpush1.msra.mxu0 0.0
        %1721 = vmatprep.mubr.f32.mxu0 0.0
        %1722 = vmatmul.mubr.f32.gmra.mrb[0].mxu0 %v1562
        %v1723 = vpop.f32.mrb[0].mxu0
        %v1724 = vadd.f32 0.0, %v1723
        %v1725 = vpop.f32.mrb[0].mxu0
        %1726 = vdwg.mxu0
        %v1727 = vadd.f32 %v1330, %v1724
        %s1728 = scalar_lea.vmem [#allocation2], 640
        %v1729 = vld [vmem:[%s1728] sm:$0xff]
        %v1730 = vld [vmem:[%s1728 + $0x8] sm:$0xff]
        %v1731 = vld [vmem:[%s1728 + $0x10] sm:$0xff]
        %v1732 = vld [vmem:[%s1728 + $0x18] sm:$0xff]
        %v1733 = vld [vmem:[%s1728 + $0x20] sm:$0xff]
        %v1734 = vld [vmem:[%s1728 + $0x28] sm:$0xff]
        %v1735 = vld [vmem:[%s1728 + $0x30] sm:$0xff]
        %v1736 = vld [vmem:[%s1728 + $0x38] sm:$0xff]
        %v1737 = vld [vmem:[%s1728 + $0x40] sm:$0xff]
        %v1738 = vld [vmem:[%s1728 + $0x48] sm:$0xff]
        %v1739 = vld [vmem:[%s1728 + $0x50] sm:$0xff]
        %v1740 = vld [vmem:[%s1728 + $0x58] sm:$0xff]
        %v1741 = vld [vmem:[%s1728 + $0x60] sm:$0xff]
        %v1742 = vld [vmem:[%s1728 + $0x68] sm:$0xff]
        %v1743 = vld [vmem:[%s1728 + $0x70] sm:$0xff]
        %v1744 = vld [vmem:[%s1728 + $0x78] sm:$0xff]
        %1745 = vmatprep.subr.mxu0 0.0
        %1746 = vmatpush1.msra.mxu0 %v1729
        %1747 = vmatprep.subr.mxu0 0.0
        %1748 = vmatpush1.msra.mxu0 %v1730
        %1749 = vmatprep.subr.mxu0 0.0
        %1750 = vmatpush1.msra.mxu0 %v1731
        %1751 = vmatprep.subr.mxu0 0.0
        %1752 = vmatpush1.msra.mxu0 %v1732
        %1753 = vmatprep.subr.mxu0 0.0
        %1754 = vmatpush1.msra.mxu0 %v1733
        %1755 = vmatprep.subr.mxu0 0.0
        %1756 = vmatpush1.msra.mxu0 %v1734
        %1757 = vmatprep.subr.mxu0 0.0
        %1758 = vmatpush1.msra.mxu0 %v1735
        %1759 = vmatprep.subr.mxu0 0.0
        %1760 = vmatpush1.msra.mxu0 %v1736
        %1761 = vmatprep.subr.mxu0 0.0
        %1762 = vmatpush1.msra.mxu0 %v1737
        %1763 = vmatprep.subr.mxu0 0.0
        %1764 = vmatpush1.msra.mxu0 %v1738
        %1765 = vmatprep.subr.mxu0 0.0
        %1766 = vmatpush1.msra.mxu0 %v1739
        %1767 = vmatprep.subr.mxu0 0.0
        %1768 = vmatpush1.msra.mxu0 %v1740
        %1769 = vmatprep.subr.mxu0 0.0
        %1770 = vmatpush1.msra.mxu0 %v1741
        %1771 = vmatprep.subr.mxu0 0.0
        %1772 = vmatpush1.msra.mxu0 %v1742
        %1773 = vmatprep.subr.mxu0 0.0
        %1774 = vmatpush1.msra.mxu0 %v1743
        %1775 = vmatprep.subr.mxu0 0.0
        %1776 = vmatpush1.msra.mxu0 %v1744
        %1777 = vmatprep.subr.mxu0 0.0
        %1778 = vmatpush1.msra.mxu0 0.0
        %1779 = vmatprep.subr.mxu0 0.0
        %1780 = vmatpush1.msra.mxu0 0.0
        %1781 = vmatprep.subr.mxu0 0.0
        %1782 = vmatpush1.msra.mxu0 0.0
        %1783 = vmatprep.subr.mxu0 0.0
        %1784 = vmatpush1.msra.mxu0 0.0
        %1785 = vmatprep.subr.mxu0 0.0
        %1786 = vmatpush1.msra.mxu0 0.0
        %1787 = vmatprep.subr.mxu0 0.0
        %1788 = vmatpush1.msra.mxu0 0.0
        %1789 = vmatprep.subr.mxu0 0.0
        %1790 = vmatpush1.msra.mxu0 0.0
        %1791 = vmatprep.subr.mxu0 0.0
        %1792 = vmatpush1.msra.mxu0 0.0
        %1793 = vmatprep.subr.mxu0 0.0
        %1794 = vmatpush1.msra.mxu0 0.0
        %1795 = vmatprep.subr.mxu0 0.0
        %1796 = vmatpush1.msra.mxu0 0.0
        %1797 = vmatprep.subr.mxu0 0.0
        %1798 = vmatpush1.msra.mxu0 0.0
        %1799 = vmatprep.subr.mxu0 0.0
        %1800 = vmatpush1.msra.mxu0 0.0
        %1801 = vmatprep.subr.mxu0 0.0
        %1802 = vmatpush1.msra.mxu0 0.0
        %1803 = vmatprep.subr.mxu0 0.0
        %1804 = vmatpush1.msra.mxu0 0.0
        %1805 = vmatprep.subr.mxu0 0.0
        %1806 = vmatpush1.msra.mxu0 0.0
        %1807 = vmatprep.subr.mxu0 0.0
        %1808 = vmatpush1.msra.mxu0 0.0
        %1809 = vmatprep.mubr.f32.mxu0 0.0
        %1810 = vmatmul.mubr.f32.gmra.mrb[0].mxu0 %v1637
        %v1811 = vpop.f32.mrb[0].mxu0
        %v1812 = vadd.f32 0.0, %v1811
        %v1813 = vpop.f32.mrb[0].mxu0
        %1814 = vdwg.mxu0
        %v1815 = vadd.f32 %v1487, %v1812
        %v1816 = vld [vmem:[%s4] sm:$0x1]
        %v1817 = vlaneseq
        %v1818 = vshrl.u32 %v1817, 7
        %v1819 = vsub.s32 0, %v1818
        %v1820 = vrot.slane %v1816, %v1819
        %v1821 = vadd.f32 %v1727, %v1820
        %v1822 = vmul.f32 %v1821, 0.5
        %v1823 = vmul.f32 %v1821, 0.044715
        %v1824 = vmul.f32 %v1823, %v1821
        %v1825 = vmul.f32 %v1824, %v1821
        %v1826 = vadd.f32 %v1821, %v1825
        %v1827 = vmul.f32 %v1826, 0.7978846
        %v1828 = vtanh.pop %v1827
        %v1829 = vadd.f32 %v1828, 1.0
        %v1830 = vmul.f32 %v1822, %v1829
        %v1831 = vld [vmem:[%s4 + $0x1] sm:$0x1]
        %v1832 = vlaneseq
        %v1833 = vshrl.u32 %v1832, 7
        %v1834 = vsub.s32 0, %v1833
        %v1835 = vrot.slane %v1831, %v1834
        %v1836 = vadd.f32 %v1815, %v1835
        %v1837 = vmul.f32 %v1836, 0.5
        %v1838 = vmul.f32 %v1836, 0.044715
        %v1839 = vmul.f32 %v1838, %v1836
        %v1840 = vmul.f32 %v1839, %v1836
        %v1841 = vadd.f32 %v1836, %v1840
        %v1842 = vmul.f32 %v1841, 0.7978846
        %v1843 = vtanh.pop %v1842
        %v1844 = vadd.f32 %v1843, 1.0
        %v1845 = vmul.f32 %v1837, %v1844
        %v1846 = vld [vmem:[%s2] sm:$0xff]
        %s1847 = scalar_lea.vmem %s2, 8
        %v1848 = vld [vmem:[%s1847] sm:$0xff]
        %vm1849 = vcmask 39936
        %v1851 = vsel %vm1849, %v1848, 0
        %vm1853 = vcmask 1044480
        %v1855 = vsel %vm1853, %v1845, 0
        %1857 = vmatprep.subr.mxu0 0.0
        %1858 = vmatpush1.msra.mxu0 %v1855
        %1859 = vmatprep.subr.mxu0 0.0
        %1860 = vmatpush1.msra.mxu0 0.0
        %1861 = vmatprep.subr.mxu0 0.0
        %1862 = vmatpush1.msra.mxu0 0.0
        %1863 = vmatprep.subr.mxu0 0.0
        %1864 = vmatpush1.msra.mxu0 0.0
        %1865 = vmatprep.subr.mxu0 0.0
        %1866 = vmatpush1.msra.mxu0 0.0
        %1867 = vmatprep.subr.mxu0 0.0
        %1868 = vmatpush1.msra.mxu0 0.0
        %1869 = vmatprep.subr.mxu0 0.0
        %1870 = vmatpush1.msra.mxu0 0.0
        %1871 = vmatprep.subr.mxu0 0.0
        %1872 = vmatpush1.msra.mxu0 0.0
        %1873 = vmatprep.subr.mxu0 0.0
        %1874 = vmatpush1.msra.mxu0 0.0
        %1875 = vmatprep.subr.mxu0 0.0
        %1876 = vmatpush1.msra.mxu0 0.0
        %1877 = vmatprep.subr.mxu0 0.0
        %1878 = vmatpush1.msra.mxu0 0.0
        %1879 = vmatprep.subr.mxu0 0.0
        %1880 = vmatpush1.msra.mxu0 0.0
        %1881 = vmatprep.subr.mxu0 0.0
        %1882 = vmatpush1.msra.mxu0 0.0
        %1883 = vmatprep.subr.mxu0 0.0
        %1884 = vmatpush1.msra.mxu0 0.0
        %1885 = vmatprep.subr.mxu0 0.0
        %1886 = vmatpush1.msra.mxu0 0.0
        %1887 = vmatprep.subr.mxu0 0.0
        %1888 = vmatpush1.msra.mxu0 0.0
        %1889 = vmatprep.subr.mxu0 0.0
        %1890 = vmatpush1.msra.mxu0 0.0
        %1891 = vmatprep.subr.mxu0 0.0
        %1892 = vmatpush1.msra.mxu0 0.0
        %1893 = vmatprep.subr.mxu0 0.0
        %1894 = vmatpush1.msra.mxu0 0.0
        %1895 = vmatprep.subr.mxu0 0.0
        %1896 = vmatpush1.msra.mxu0 0.0
        %1897 = vmatprep.subr.mxu0 0.0
        %1898 = vmatpush1.msra.mxu0 0.0
        %1899 = vmatprep.subr.mxu0 0.0
        %1900 = vmatpush1.msra.mxu0 0.0
        %1901 = vmatprep.subr.mxu0 0.0
        %1902 = vmatpush1.msra.mxu0 0.0
        %1903 = vmatprep.subr.mxu0 0.0
        %1904 = vmatpush1.msra.mxu0 0.0
        %1905 = vmatprep.subr.mxu0 0.0
        %1906 = vmatpush1.msra.mxu0 0.0
        %1907 = vmatprep.subr.mxu0 0.0
        %1908 = vmatpush1.msra.mxu0 0.0
        %1909 = vmatprep.subr.mxu0 0.0
        %1910 = vmatpush1.msra.mxu0 0.0
        %1911 = vmatprep.subr.mxu0 0.0
        %1912 = vmatpush1.msra.mxu0 0.0
        %1913 = vmatprep.subr.mxu0 0.0
        %1914 = vmatpush1.msra.mxu0 0.0
        %1915 = vmatprep.subr.mxu0 0.0
        %1916 = vmatpush1.msra.mxu0 0.0
        %1917 = vmatprep.subr.mxu0 0.0
        %1918 = vmatpush1.msra.mxu0 0.0
        %1919 = vmatprep.subr.mxu0 0.0
        %1920 = vmatpush1.msra.mxu0 0.0
        %1921 = vmatprep.mubr.f32.mxu0 0.0
        %1922 = vmatmul.mubr.f32.gmra.mrb[0].mxu0 %v1851
        %v1923 = vpop.f32.mrb[0].mxu0
        %v1924 = vadd.f32 0.0, %v1923
        %v1925 = vpop.f32.mrb[0].mxu0
        %1926 = vdwg.mxu0
        %v1928 = vsel %vm1849, %v1846, 0
        %v1931 = vsel %vm1853, %v1830, 0
        %1933 = vmatprep.subr.mxu0 0.0
        %1934 = vmatpush1.msra.mxu0 %v1931
        %1935 = vmatprep.subr.mxu0 0.0
        %1936 = vmatpush1.msra.mxu0 0.0
        %1937 = vmatprep.subr.mxu0 0.0
        %1938 = vmatpush1.msra.mxu0 0.0
        %1939 = vmatprep.subr.mxu0 0.0
        %1940 = vmatpush1.msra.mxu0 0.0
        %1941 = vmatprep.subr.mxu0 0.0
        %1942 = vmatpush1.msra.mxu0 0.0
        %1943 = vmatprep.subr.mxu0 0.0
        %1944 = vmatpush1.msra.mxu0 0.0
        %1945 = vmatprep.subr.mxu0 0.0
        %1946 = vmatpush1.msra.mxu0 0.0
        %1947 = vmatprep.subr.mxu0 0.0
        %1948 = vmatpush1.msra.mxu0 0.0
        %1949 = vmatprep.subr.mxu0 0.0
        %1950 = vmatpush1.msra.mxu0 0.0
        %1951 = vmatprep.subr.mxu0 0.0
        %1952 = vmatpush1.msra.mxu0 0.0
        %1953 = vmatprep.subr.mxu0 0.0
        %1954 = vmatpush1.msra.mxu0 0.0
        %1955 = vmatprep.subr.mxu0 0.0
        %1956 = vmatpush1.msra.mxu0 0.0
        %1957 = vmatprep.subr.mxu0 0.0
        %1958 = vmatpush1.msra.mxu0 0.0
        %1959 = vmatprep.subr.mxu0 0.0
        %1960 = vmatpush1.msra.mxu0 0.0
        %1961 = vmatprep.subr.mxu0 0.0
        %1962 = vmatpush1.msra.mxu0 0.0
        %1963 = vmatprep.subr.mxu0 0.0
        %1964 = vmatpush1.msra.mxu0 0.0
        %1965 = vmatprep.subr.mxu0 0.0
        %1966 = vmatpush1.msra.mxu0 0.0
        %1967 = vmatprep.subr.mxu0 0.0
        %1968 = vmatpush1.msra.mxu0 0.0
        %1969 = vmatprep.subr.mxu0 0.0
        %1970 = vmatpush1.msra.mxu0 0.0
        %1971 = vmatprep.subr.mxu0 0.0
        %1972 = vmatpush1.msra.mxu0 0.0
        %1973 = vmatprep.subr.mxu0 0.0
        %1974 = vmatpush1.msra.mxu0 0.0
        %1975 = vmatprep.subr.mxu0 0.0
        %1976 = vmatpush1.msra.mxu0 0.0
        %1977 = vmatprep.subr.mxu0 0.0
        %1978 = vmatpush1.msra.mxu0 0.0
        %1979 = vmatprep.subr.mxu0 0.0
        %1980 = vmatpush1.msra.mxu0 0.0
        %1981 = vmatprep.subr.mxu0 0.0
        %1982 = vmatpush1.msra.mxu0 0.0
        %1983 = vmatprep.subr.mxu0 0.0
        %1984 = vmatpush1.msra.mxu0 0.0
        %1985 = vmatprep.subr.mxu0 0.0
        %1986 = vmatpush1.msra.mxu0 0.0
        %1987 = vmatprep.subr.mxu0 0.0
        %1988 = vmatpush1.msra.mxu0 0.0
        %1989 = vmatprep.subr.mxu0 0.0
        %1990 = vmatpush1.msra.mxu0 0.0
        %1991 = vmatprep.subr.mxu0 0.0
        %1992 = vmatpush1.msra.mxu0 0.0
        %1993 = vmatprep.subr.mxu0 0.0
        %1994 = vmatpush1.msra.mxu0 0.0
        %1995 = vmatprep.subr.mxu0 0.0
        %1996 = vmatpush1.msra.mxu0 0.0
        %1997 = vmatprep.mubr.f32.mxu0 0.0
        %1998 = vmatmul.mubr.f32.gmra.mrb[0].mxu0 %v1928
        %v1999 = vpop.f32.mrb[0].mxu0
        %v2000 = vadd.f32 %v1924, %v1999
        %v2001 = vpop.f32.mrb[0].mxu0
        %2002 = vdwg.mxu0
        %v2003 = vld [vmem:[%s5] sm:$0x1]
        %v2004 = vld [vmem:[#allocation5] sm:$0x1]
        %2005 = vmatprep.subr.mxu0 0.0
        %2006 = vmatpush1.msra.mxu0 %v827
        %2007 = vmatprep.subr.mxu0 0.0
        %2008 = vmatpush1.msra.mxu0 %v828
        %2009 = vmatprep.subr.mxu0 0.0
        %2010 = vmatpush1.msra.mxu0 %v829
        %2011 = vmatprep.subr.mxu0 0.0
        %2012 = vmatpush1.msra.mxu0 %v830
        %2013 = vmatprep.subr.mxu0 0.0
        %2014 = vmatpush1.msra.mxu0 %v831
        %2015 = vmatprep.subr.mxu0 0.0
        %2016 = vmatpush1.msra.mxu0 %v832
        %2017 = vmatprep.subr.mxu0 0.0
        %2018 = vmatpush1.msra.mxu0 %v833
        %2019 = vmatprep.subr.mxu0 0.0
        %2020 = vmatpush1.msra.mxu0 %v834
        %2021 = vmatprep.subr.mxu0 0.0
        %2022 = vmatpush1.msra.mxu0 %v835
        %2023 = vmatprep.subr.mxu0 0.0
        %2024 = vmatpush1.msra.mxu0 %v836
        %2025 = vmatprep.subr.mxu0 0.0
        %2026 = vmatpush1.msra.mxu0 %v837
        %2027 = vmatprep.subr.mxu0 0.0
        %2028 = vmatpush1.msra.mxu0 %v838
        %2029 = vmatprep.subr.mxu0 0.0
        %2030 = vmatpush1.msra.mxu0 %v839
        %2031 = vmatprep.subr.mxu0 0.0
        %2032 = vmatpush1.msra.mxu0 %v840
        %2033 = vmatprep.subr.mxu0 0.0
        %2034 = vmatpush1.msra.mxu0 %v841
        %2035 = vmatprep.subr.mxu0 0.0
        %2036 = vmatpush1.msra.mxu0 %v842
        %2037 = vmatprep.subr.mxu0 0.0
        %2038 = vmatpush1.msra.mxu0 0.0
        %2039 = vmatprep.subr.mxu0 0.0
        %2040 = vmatpush1.msra.mxu0 0.0
        %2041 = vmatprep.subr.mxu0 0.0
        %2042 = vmatpush1.msra.mxu0 0.0
        %2043 = vmatprep.subr.mxu0 0.0
        %2044 = vmatpush1.msra.mxu0 0.0
        %2045 = vmatprep.subr.mxu0 0.0
        %2046 = vmatpush1.msra.mxu0 0.0
        %2047 = vmatprep.subr.mxu0 0.0
        %2048 = vmatpush1.msra.mxu0 0.0
        %2049 = vmatprep.subr.mxu0 0.0
        %2050 = vmatpush1.msra.mxu0 0.0
        %2051 = vmatprep.subr.mxu0 0.0
        %2052 = vmatpush1.msra.mxu0 0.0
        %2053 = vmatprep.subr.mxu0 0.0
        %2054 = vmatpush1.msra.mxu0 0.0
        %2055 = vmatprep.subr.mxu0 0.0
        %2056 = vmatpush1.msra.mxu0 0.0
        %2057 = vmatprep.subr.mxu0 0.0
        %2058 = vmatpush1.msra.mxu0 0.0
        %2059 = vmatprep.subr.mxu0 0.0
        %2060 = vmatpush1.msra.mxu0 0.0
        %2061 = vmatprep.subr.mxu0 0.0
        %2062 = vmatpush1.msra.mxu0 0.0
        %2063 = vmatprep.subr.mxu0 0.0
        %2064 = vmatpush1.msra.mxu0 0.0
        %2065 = vmatprep.subr.mxu0 0.0
        %2066 = vmatpush1.msra.mxu0 0.0
        %2067 = vmatprep.subr.mxu0 0.0
        %2068 = vmatpush1.msra.mxu0 0.0
        %2069 = vmatprep.mubr.f32.mxu0 0.0
        %2070 = vmatmul.mubr.f32.gmra.mrb[0].mxu0 %v2000
        %v2071 = vpop.f32.mrb[0].mxu0
        %v2072 = vadd.f32 0.0, %v2071
        %v2073 = vpop.f32.mrb[0].mxu0
        %2074 = vdwg.mxu0
        %v2075 = vsub.f32 %v2000, %v2072
        %v2076 = vmul.f32 %v2075, %v2075
        %2077 = vmatprep.subr.mxu0 0.0
        %2078 = vmatpush1.msra.mxu0 %v827
        %2079 = vmatprep.subr.mxu0 0.0
        %2080 = vmatpush1.msra.mxu0 %v828
        %2081 = vmatprep.subr.mxu0 0.0
        %2082 = vmatpush1.msra.mxu0 %v829
        %2083 = vmatprep.subr.mxu0 0.0
        %2084 = vmatpush1.msra.mxu0 %v830
        %2085 = vmatprep.subr.mxu0 0.0
        %2086 = vmatpush1.msra.mxu0 %v831
        %2087 = vmatprep.subr.mxu0 0.0
        %2088 = vmatpush1.msra.mxu0 %v832
        %2089 = vmatprep.subr.mxu0 0.0
        %2090 = vmatpush1.msra.mxu0 %v833
        %2091 = vmatprep.subr.mxu0 0.0
        %2092 = vmatpush1.msra.mxu0 %v834
        %2093 = vmatprep.subr.mxu0 0.0
        %2094 = vmatpush1.msra.mxu0 %v835
        %2095 = vmatprep.subr.mxu0 0.0
        %2096 = vmatpush1.msra.mxu0 %v836
        %2097 = vmatprep.subr.mxu0 0.0
        %2098 = vmatpush1.msra.mxu0 %v837
        %2099 = vmatprep.subr.mxu0 0.0
        %2100 = vmatpush1.msra.mxu0 %v838
        %2101 = vmatprep.subr.mxu0 0.0
        %2102 = vmatpush1.msra.mxu0 %v839
        %2103 = vmatprep.subr.mxu0 0.0
        %2104 = vmatpush1.msra.mxu0 %v840
        %2105 = vmatprep.subr.mxu0 0.0
        %2106 = vmatpush1.msra.mxu0 %v841
        %2107 = vmatprep.subr.mxu0 0.0
        %2108 = vmatpush1.msra.mxu0 %v842
        %2109 = vmatprep.subr.mxu0 0.0
        %2110 = vmatpush1.msra.mxu0 0.0
        %2111 = vmatprep.subr.mxu0 0.0
        %2112 = vmatpush1.msra.mxu0 0.0
        %2113 = vmatprep.subr.mxu0 0.0
        %2114 = vmatpush1.msra.mxu0 0.0
        %2115 = vmatprep.subr.mxu0 0.0
        %2116 = vmatpush1.msra.mxu0 0.0
        %2117 = vmatprep.subr.mxu0 0.0
        %2118 = vmatpush1.msra.mxu0 0.0
        %2119 = vmatprep.subr.mxu0 0.0
        %2120 = vmatpush1.msra.mxu0 0.0
        %2121 = vmatprep.subr.mxu0 0.0
        %2122 = vmatpush1.msra.mxu0 0.0
        %2123 = vmatprep.subr.mxu0 0.0
        %2124 = vmatpush1.msra.mxu0 0.0
        %2125 = vmatprep.subr.mxu0 0.0
        %2126 = vmatpush1.msra.mxu0 0.0
        %2127 = vmatprep.subr.mxu0 0.0
        %2128 = vmatpush1.msra.mxu0 0.0
        %2129 = vmatprep.subr.mxu0 0.0
        %2130 = vmatpush1.msra.mxu0 0.0
        %2131 = vmatprep.subr.mxu0 0.0
        %2132 = vmatpush1.msra.mxu0 0.0
        %2133 = vmatprep.subr.mxu0 0.0
        %2134 = vmatpush1.msra.mxu0 0.0
        %2135 = vmatprep.subr.mxu0 0.0
        %2136 = vmatpush1.msra.mxu0 0.0
        %2137 = vmatprep.subr.mxu0 0.0
        %2138 = vmatpush1.msra.mxu0 0.0
        %2139 = vmatprep.subr.mxu0 0.0
        %2140 = vmatpush1.msra.mxu0 0.0
        %2141 = vmatprep.mubr.f32.mxu0 0.0
        %2142 = vmatmul.mubr.f32.gmra.mrb[0].mxu0 %v2076
        %v2143 = vpop.f32.mrb[0].mxu0
        %v2144 = vadd.f32 1e-05, %v2143
        %v2145 = vpop.f32.mrb[0].mxu0
        %2146 = vdwg.mxu0
        %v2147 = vrsqrt.pop %v2144
        %v2148 = vmul.f32 %v2075, %v2147
        %v2149 = vlaneseq
        %v2150 = vshrl.u32 %v2149, 7
        %v2151 = vsub.s32 0, %v2150
        %v2152 = vrot.slane %v2003, %v2151
        %v2153 = vmul.f32 %v2148, %v2152
        %v2154 = vlaneseq
        %v2155 = vshrl.u32 %v2154, 7
        %v2156 = vsub.s32 0, %v2155
        %v2157 = vrot.slane %v2004, %v2156
        %v2158 = vadd.f32 %v2153, %v2157
        %v2159 = vrot.slane %v2158, 4
        %v2160 = vadd.f32 %v2158, %v2159
        %v2161 = vrot.slane %v2160, 2
        %v2162 = vadd.f32 %v2160, %v2161
        %v2163 = vrot.slane %v2162, 1
        %v2164 = vadd.f32 %v2162, %v2163
        %v2165 = vrcp.pop 8.0
        %v2166 = vmul.f32 %v2164, %v2165
        %2168 = vrot.lane.b32.xlu0 %v2166, 96
        %v2169 = vpop.permute.xlu0 %2168
        %2171 = vrot.lane.b32.xlu0 %v2166, 64
        %v2172 = vpop.permute.xlu0 %2171
        %2174 = vrot.lane.b32.xlu0 %v2166, 32
        %v2175 = vpop.permute.xlu0 %2174
        %vm2177 = vcmask 1040384
        %v2178 = vsel %vm2177, %v2166, %v2169
        %vm2179 = vcmask 1041408
        %v2180 = vsel %vm2179, %v2178, %v2172
        %vm2181 = vcmask 1042432
        %v2182 = vsel %vm2181, %v2180, %v2175
        %v2183 = vld [vmem:[%s8] sm:$0xff]
        %v2184 = vld [vmem:[%s8 + $0x8] sm:$0xff]
        %v2185 = vld [vmem:[%s8 + $0x10] sm:$0xff]
        %v2186 = vld [vmem:[%s8 + $0x18] sm:$0xff]
        %v2187 = vld [vmem:[#allocation8] sm:$0x1]
        %v2188 = vlaneseq
        %v2189 = vshrl.u32 %v2188, 7
        %v2190 = vsub.s32 0, %v2189
        %v2191 = vrot.slane %v2187, %v2190
        %vm2192 = vcmask 261120
        %v2194 = vsel %vm2192, %v2182, 0
        %2196 = vmatprep.subr.mxu0 0.0
        %2197 = vmatpush1.msra.mxu0 %v2183
        %2198 = vmatprep.subr.mxu0 0.0
        %2199 = vmatpush1.msra.mxu0 %v2184
        %2200 = vmatprep.subr.mxu0 0.0
        %2201 = vmatpush1.msra.mxu0 %v2185
        %2202 = vmatprep.subr.mxu0 0.0
        %2203 = vmatpush1.msra.mxu0 %v2186
        %2204 = vmatprep.subr.mxu0 0.0
        %2205 = vmatpush1.msra.mxu0 0.0
        %2206 = vmatprep.subr.mxu0 0.0
        %2207 = vmatpush1.msra.mxu0 0.0
        %2208 = vmatprep.subr.mxu0 0.0
        %2209 = vmatpush1.msra.mxu0 0.0
        %2210 = vmatprep.subr.mxu0 0.0
        %2211 = vmatpush1.msra.mxu0 0.0
        %2212 = vmatprep.subr.mxu0 0.0
        %2213 = vmatpush1.msra.mxu0 0.0
        %2214 = vmatprep.subr.mxu0 0.0
        %2215 = vmatpush1.msra.mxu0 0.0
        %2216 = vmatprep.subr.mxu0 0.0
        %2217 = vmatpush1.msra.mxu0 0.0
        %2218 = vmatprep.subr.mxu0 0.0
        %2219 = vmatpush1.msra.mxu0 0.0
        %2220 = vmatprep.subr.mxu0 0.0
        %2221 = vmatpush1.msra.mxu0 0.0
        %2222 = vmatprep.subr.mxu0 0.0
        %2223 = vmatpush1.msra.mxu0 0.0
        %2224 = vmatprep.subr.mxu0 0.0
        %2225 = vmatpush1.msra.mxu0 0.0
        %2226 = vmatprep.subr.mxu0 0.0
        %2227 = vmatpush1.msra.mxu0 0.0
        %2228 = vmatprep.subr.mxu0 0.0
        %2229 = vmatpush1.msra.mxu0 0.0
        %2230 = vmatprep.subr.mxu0 0.0
        %2231 = vmatpush1.msra.mxu0 0.0
        %2232 = vmatprep.subr.mxu0 0.0
        %2233 = vmatpush1.msra.mxu0 0.0
        %2234 = vmatprep.subr.mxu0 0.0
        %2235 = vmatpush1.msra.mxu0 0.0
        %2236 = vmatprep.subr.mxu0 0.0
        %2237 = vmatpush1.msra.mxu0 0.0
        %2238 = vmatprep.subr.mxu0 0.0
        %2239 = vmatpush1.msra.mxu0 0.0
        %2240 = vmatprep.subr.mxu0 0.0
        %2241 = vmatpush1.msra.mxu0 0.0
        %2242 = vmatprep.subr.mxu0 0.0
        %2243 = vmatpush1.msra.mxu0 0.0
        %2244 = vmatprep.subr.mxu0 0.0
        %2245 = vmatpush1.msra.mxu0 0.0
        %2246 = vmatprep.subr.mxu0 0.0
        %2247 = vmatpush1.msra.mxu0 0.0
        %2248 = vmatprep.subr.mxu0 0.0
        %2249 = vmatpush1.msra.mxu0 0.0
        %2250 = vmatprep.subr.mxu0 0.0
        %2251 = vmatpush1.msra.mxu0 0.0
        %2252 = vmatprep.subr.mxu0 0.0
        %2253 = vmatpush1.msra.mxu0 0.0
        %2254 = vmatprep.subr.mxu0 0.0
        %2255 = vmatpush1.msra.mxu0 0.0
        %2256 = vmatprep.subr.mxu0 0.0
        %2257 = vmatpush1.msra.mxu0 0.0
        %2258 = vmatprep.subr.mxu0 0.0
        %2259 = vmatpush1.msra.mxu0 0.0
        %2260 = vmatprep.mubr.f32.mxu0 0.0
        %2261 = vmatmul.mubr.f32.gmra.mrb[0].mxu0 %v2194
        %v2262 = vpop.f32.mrb[0].mxu0
        %v2263 = vadd.f32 %v2191, %v2262
        %v2264 = vpop.f32.mrb[0].mxu0
        %2265 = vdwg.mxu0
        %s2266 = scalar_lea.vmem %s8, 32
        %v2267 = vld [vmem:[%s2266] sm:$0xff]
        %v2268 = vld [vmem:[%s2266 + $0x8] sm:$0xff]
        %v2269 = vld [vmem:[%s2266 + $0x10] sm:$0xff]
        %v2270 = vld [vmem:[%s2266 + $0x18] sm:$0xff]
        %v2271 = vld [vmem:[#allocation8 + $0x1] sm:$0x1]
        %v2272 = vlaneseq
        %v2273 = vshrl.u32 %v2272, 7
        %v2274 = vsub.s32 0, %v2273
        %v2275 = vrot.slane %v2271, %v2274
        %2276 = vmatprep.subr.mxu0 0.0
        %2277 = vmatpush1.msra.mxu0 %v2267
        %2278 = vmatprep.subr.mxu0 0.0
        %2279 = vmatpush1.msra.mxu0 %v2268
        %2280 = vmatprep.subr.mxu0 0.0
        %2281 = vmatpush1.msra.mxu0 %v2269
        %2282 = vmatprep.subr.mxu0 0.0
        %2283 = vmatpush1.msra.mxu0 %v2270
        %2284 = vmatprep.subr.mxu0 0.0
        %2285 = vmatpush1.msra.mxu0 0.0
        %2286 = vmatprep.subr.mxu0 0.0
        %2287 = vmatpush1.msra.mxu0 0.0
        %2288 = vmatprep.subr.mxu0 0.0
        %2289 = vmatpush1.msra.mxu0 0.0
        %2290 = vmatprep.subr.mxu0 0.0
        %2291 = vmatpush1.msra.mxu0 0.0
        %2292 = vmatprep.subr.mxu0 0.0
        %2293 = vmatpush1.msra.mxu0 0.0
        %2294 = vmatprep.subr.mxu0 0.0
        %2295 = vmatpush1.msra.mxu0 0.0
        %2296 = vmatprep.subr.mxu0 0.0
        %2297 = vmatpush1.msra.mxu0 0.0
        %2298 = vmatprep.subr.mxu0 0.0
        %2299 = vmatpush1.msra.mxu0 0.0
        %2300 = vmatprep.subr.mxu0 0.0
        %2301 = vmatpush1.msra.mxu0 0.0
        %2302 = vmatprep.subr.mxu0 0.0
        %2303 = vmatpush1.msra.mxu0 0.0
        %2304 = vmatprep.subr.mxu0 0.0
        %2305 = vmatpush1.msra.mxu0 0.0
        %2306 = vmatprep.subr.mxu0 0.0
        %2307 = vmatpush1.msra.mxu0 0.0
        %2308 = vmatprep.subr.mxu0 0.0
        %2309 = vmatpush1.msra.mxu0 0.0
        %2310 = vmatprep.subr.mxu0 0.0
        %2311 = vmatpush1.msra.mxu0 0.0
        %2312 = vmatprep.subr.mxu0 0.0
        %2313 = vmatpush1.msra.mxu0 0.0
        %2314 = vmatprep.subr.mxu0 0.0
        %2315 = vmatpush1.msra.mxu0 0.0
        %2316 = vmatprep.subr.mxu0 0.0
        %2317 = vmatpush1.msra.mxu0 0.0
        %2318 = vmatprep.subr.mxu0 0.0
        %2319 = vmatpush1.msra.mxu0 0.0
        %2320 = vmatprep.subr.mxu0 0.0
        %2321 = vmatpush1.msra.mxu0 0.0
        %2322 = vmatprep.subr.mxu0 0.0
        %2323 = vmatpush1.msra.mxu0 0.0
        %2324 = vmatprep.subr.mxu0 0.0
        %2325 = vmatpush1.msra.mxu0 0.0
        %2326 = vmatprep.subr.mxu0 0.0
        %2327 = vmatpush1.msra.mxu0 0.0
        %2328 = vmatprep.subr.mxu0 0.0
        %2329 = vmatpush1.msra.mxu0 0.0
        %2330 = vmatprep.subr.mxu0 0.0
        %2331 = vmatpush1.msra.mxu0 0.0
        %2332 = vmatprep.subr.mxu0 0.0
        %2333 = vmatpush1.msra.mxu0 0.0
        %2334 = vmatprep.subr.mxu0 0.0
        %2335 = vmatpush1.msra.mxu0 0.0
        %2336 = vmatprep.subr.mxu0 0.0
        %2337 = vmatpush1.msra.mxu0 0.0
        %2338 = vmatprep.subr.mxu0 0.0
        %2339 = vmatpush1.msra.mxu0 0.0
        %2340 = vmatprep.mubr.f32.mxu0 0.0
        %2341 = vmatmul.mubr.f32.gmra.mrb[0].mxu0 %v2194
        %v2342 = vpop.f32.mrb[0].mxu0
        %v2343 = vadd.f32 %v2275, %v2342
        %v2344 = vpop.f32.mrb[0].mxu0
        %2345 = vdwg.mxu0
        %v2346 = vld [vmem:[%s10] sm:$0xff]
        %v2347 = vld [vmem:[%s10 + $0x8] sm:$0xff]
        %v2348 = vld [vmem:[%s10 + $0x10] sm:$0xff]
        %v2349 = vld [vmem:[%s10 + $0x18] sm:$0xff]
        %vm2350 = vcmask 31744
        %v2352 = vsel %vm2350, %v2346, 0
        %v2355 = vsel %vm2350, %v2347, 0
        %v2358 = vsel %vm2350, %v2348, 0
        %v2361 = vsel %vm2350, %v2349, 0
        %vm2363 = vcmask 1043456
        %v2365 = vsel %vm2363, %v2263, 0
        %2367 = vmatprep.subr.mxu0 0.0
        %2368 = vmatpush1.msra.mxu0 %v2365
        %2369 = vmatprep.subr.mxu0 0.0
        %2370 = vmatpush1.msra.mxu0 0.0
        %2371 = vmatprep.subr.mxu0 0.0
        %2372 = vmatpush1.msra.mxu0 0.0
        %2373 = vmatprep.subr.mxu0 0.0
        %2374 = vmatpush1.msra.mxu0 0.0
        %2375 = vmatprep.subr.mxu0 0.0
        %2376 = vmatpush1.msra.mxu0 0.0
        %2377 = vmatprep.subr.mxu0 0.0
        %2378 = vmatpush1.msra.mxu0 0.0
        %2379 = vmatprep.subr.mxu0 0.0
        %2380 = vmatpush1.msra.mxu0 0.0
        %2381 = vmatprep.subr.mxu0 0.0
        %2382 = vmatpush1.msra.mxu0 0.0
        %2383 = vmatprep.subr.mxu0 0.0
        %2384 = vmatpush1.msra.mxu0 0.0
        %2385 = vmatprep.subr.mxu0 0.0
        %2386 = vmatpush1.msra.mxu0 0.0
        %2387 = vmatprep.subr.mxu0 0.0
        %2388 = vmatpush1.msra.mxu0 0.0
        %2389 = vmatprep.subr.mxu0 0.0
        %2390 = vmatpush1.msra.mxu0 0.0
        %2391 = vmatprep.subr.mxu0 0.0
        %2392 = vmatpush1.msra.mxu0 0.0
        %2393 = vmatprep.subr.mxu0 0.0
        %2394 = vmatpush1.msra.mxu0 0.0
        %2395 = vmatprep.subr.mxu0 0.0
        %2396 = vmatpush1.msra.mxu0 0.0
        %2397 = vmatprep.subr.mxu0 0.0
        %2398 = vmatpush1.msra.mxu0 0.0
        %2399 = vmatprep.subr.mxu0 0.0
        %2400 = vmatpush1.msra.mxu0 0.0
        %2401 = vmatprep.subr.mxu0 0.0
        %2402 = vmatpush1.msra.mxu0 0.0
        %2403 = vmatprep.subr.mxu0 0.0
        %2404 = vmatpush1.msra.mxu0 0.0
        %2405 = vmatprep.subr.mxu0 0.0
        %2406 = vmatpush1.msra.mxu0 0.0
        %2407 = vmatprep.subr.mxu0 0.0
        %2408 = vmatpush1.msra.mxu0 0.0
        %2409 = vmatprep.subr.mxu0 0.0
        %2410 = vmatpush1.msra.mxu0 0.0
        %2411 = vmatprep.subr.mxu0 0.0
        %2412 = vmatpush1.msra.mxu0 0.0
        %2413 = vmatprep.subr.mxu0 0.0
        %2414 = vmatpush1.msra.mxu0 0.0
        %2415 = vmatprep.subr.mxu0 0.0
        %2416 = vmatpush1.msra.mxu0 0.0
        %2417 = vmatprep.subr.mxu0 0.0
        %2418 = vmatpush1.msra.mxu0 0.0
        %2419 = vmatprep.subr.mxu0 0.0
        %2420 = vmatpush1.msra.mxu0 0.0
        %2421 = vmatprep.subr.mxu0 0.0
        %2422 = vmatpush1.msra.mxu0 0.0
        %2423 = vmatprep.subr.mxu0 0.0
        %2424 = vmatpush1.msra.mxu0 0.0
        %2425 = vmatprep.subr.mxu0 0.0
        %2426 = vmatpush1.msra.mxu0 0.0
        %2427 = vmatprep.subr.mxu0 0.0
        %2428 = vmatpush1.msra.mxu0 0.0
        %2429 = vmatprep.subr.mxu0 0.0
        %2430 = vmatpush1.msra.mxu0 0.0
        %2431 = vmatprep.mubr.f32.mxu0 0.0
        %2432 = vmatmul.mubr.f32.gmra.mrb[0].mxu0 %v2352
        %v2433 = vpop.f32.mrb[0].mxu0
        %v2434 = vadd.f32 0.0, %v2433
        %v2435 = vpop.f32.mrb[0].mxu0
        %2436 = vmatprep.mubr.f32.mxu0 0.0
        %2437 = vmatmul.mubr.f32.gmra.mrb[0].mxu0 %v2355
        %v2438 = vpop.f32.mrb[0].mxu0
        %v2439 = vadd.f32 0.0, %v2438
        %v2440 = vpop.f32.mrb[0].mxu0
        %2441 = vmatprep.mubr.f32.mxu0 0.0
        %2442 = vmatmul.mubr.f32.gmra.mrb[0].mxu0 %v2358
        %v2443 = vpop.f32.mrb[0].mxu0
        %v2444 = vadd.f32 0.0, %v2443
        %v2445 = vpop.f32.mrb[0].mxu0
        %2446 = vmatprep.mubr.f32.mxu0 0.0
        %2447 = vmatmul.mubr.f32.gmra.mrb[0].mxu0 %v2361
        %v2448 = vpop.f32.mrb[0].mxu0
        %v2449 = vadd.f32 0.0, %v2448
        %v2450 = vpop.f32.mrb[0].mxu0
        %2451 = vdwg.mxu0
        %v2452 = vld [vmem:[#allocation10] sm:$0xff]
        %v2453 = vld [vmem:[#allocation10 + $0x8] sm:$0xff]
        %v2454 = vld [vmem:[#allocation10 + $0x10] sm:$0xff]
        %v2455 = vld [vmem:[#allocation10 + $0x18] sm:$0xff]
        %v2456 = vmul.f32 %v2434, %v2452
        %v2457 = vmul.f32 %v2439, %v2453
        %v2458 = vmul.f32 %v2444, %v2454
        %v2459 = vmul.f32 %v2449, %v2455
        %v2461 = vsel %vm2192, %v2456, 0
        %v2464 = vsel %vm2192, %v2457, 0
        %v2467 = vsel %vm2192, %v2458, 0
        %v2470 = vsel %vm2192, %v2459, 0
        %v2473 = vsel %vm2192, %v2343, 0
        %2475 = vmatprep.subr.mxu0 0.0
        %2476 = vmatpush1.xpose.msra.mxu0 %v2473
        %2477 = vmatprep.subr.mxu0 0.0
        %2478 = vmatpush1.xpose.msra.mxu0 0.0
        %2479 = vmatprep.subr.mxu0 0.0
        %2480 = vmatpush1.xpose.msra.mxu0 0.0
        %2481 = vmatprep.subr.mxu0 0.0
        %2482 = vmatpush1.xpose.msra.mxu0 0.0
        %2483 = vmatprep.subr.mxu0 0.0
        %2484 = vmatpush1.xpose.msra.mxu0 0.0
        %2485 = vmatprep.subr.mxu0 0.0
        %2486 = vmatpush1.xpose.msra.mxu0 0.0
        %2487 = vmatprep.subr.mxu0 0.0
        %2488 = vmatpush1.xpose.msra.mxu0 0.0
        %2489 = vmatprep.subr.mxu0 0.0
        %2490 = vmatpush1.xpose.msra.mxu0 0.0
        %2491 = vmatprep.subr.mxu0 0.0
        %2492 = vmatpush1.xpose.msra.mxu0 0.0
        %2493 = vmatprep.subr.mxu0 0.0
        %2494 = vmatpush1.xpose.msra.mxu0 0.0
        %2495 = vmatprep.subr.mxu0 0.0
        %2496 = vmatpush1.xpose.msra.mxu0 0.0
        %2497 = vmatprep.subr.mxu0 0.0
        %2498 = vmatpush1.xpose.msra.mxu0 0.0
        %2499 = vmatprep.subr.mxu0 0.0
        %2500 = vmatpush1.xpose.msra.mxu0 0.0
        %2501 = vmatprep.subr.mxu0 0.0
        %2502 = vmatpush1.xpose.msra.mxu0 0.0
        %2503 = vmatprep.subr.mxu0 0.0
        %2504 = vmatpush1.xpose.msra.mxu0 0.0
        %2505 = vmatprep.subr.mxu0 0.0
        %2506 = vmatpush1.xpose.msra.mxu0 0.0
        %2507 = vmatprep.subr.mxu0 0.0
        %2508 = vmatpush1.xpose.msra.mxu0 0.0
        %2509 = vmatprep.subr.mxu0 0.0
        %2510 = vmatpush1.xpose.msra.mxu0 0.0
        %2511 = vmatprep.subr.mxu0 0.0
        %2512 = vmatpush1.xpose.msra.mxu0 0.0
        %2513 = vmatprep.subr.mxu0 0.0
        %2514 = vmatpush1.xpose.msra.mxu0 0.0
        %2515 = vmatprep.subr.mxu0 0.0
        %2516 = vmatpush1.xpose.msra.mxu0 0.0
        %2517 = vmatprep.subr.mxu0 0.0
        %2518 = vmatpush1.xpose.msra.mxu0 0.0
        %2519 = vmatprep.subr.mxu0 0.0
        %2520 = vmatpush1.xpose.msra.mxu0 0.0
        %2521 = vmatprep.subr.mxu0 0.0
        %2522 = vmatpush1.xpose.msra.mxu0 0.0
        %2523 = vmatprep.subr.mxu0 0.0
        %2524 = vmatpush1.xpose.msra.mxu0 0.0
        %2525 = vmatprep.subr.mxu0 0.0
        %2526 = vmatpush1.xpose.msra.mxu0 0.0
        %2527 = vmatprep.subr.mxu0 0.0
        %2528 = vmatpush1.xpose.msra.mxu0 0.0
        %2529 = vmatprep.subr.mxu0 0.0
        %2530 = vmatpush1.xpose.msra.mxu0 0.0
        %2531 = vmatprep.subr.mxu0 0.0
        %2532 = vmatpush1.xpose.msra.mxu0 0.0
        %2533 = vmatprep.subr.mxu0 0.0
        %2534 = vmatpush1.xpose.msra.mxu0 0.0
        %2535 = vmatprep.subr.mxu0 0.0
        %2536 = vmatpush1.xpose.msra.mxu0 0.0
        %2537 = vmatprep.subr.mxu0 0.0
        %2538 = vmatpush1.xpose.msra.mxu0 0.0
        %2539 = vmatprep.mubr.f32.mxu0 0.0
        %2540 = vmatmul.mubr.f32.gmra.mrb[0].mxu0 %v2461
        %v2541 = vpop.f32.mrb[0].mxu0
        %v2542 = vadd.f32 0.0, %v2541
        %v2543 = vpop.f32.mrb[0].mxu0
        %2544 = vmatprep.mubr.f32.mxu0 0.0
        %2545 = vmatmul.mubr.f32.gmra.mrb[0].mxu0 %v2464
        %v2546 = vpop.f32.mrb[0].mxu0
        %v2547 = vadd.f32 0.0, %v2546
        %v2548 = vpop.f32.mrb[0].mxu0
        %2549 = vmatprep.mubr.f32.mxu0 0.0
        %2550 = vmatmul.mubr.f32.gmra.mrb[0].mxu0 %v2467
        %v2551 = vpop.f32.mrb[0].mxu0
        %v2552 = vadd.f32 0.0, %v2551
        %v2553 = vpop.f32.mrb[0].mxu0
        %2554 = vmatprep.mubr.f32.mxu0 0.0
        %2555 = vmatmul.mubr.f32.gmra.mrb[0].mxu0 %v2470
        %v2556 = vpop.f32.mrb[0].mxu0
        %v2557 = vadd.f32 0.0, %v2556
        %v2558 = vpop.f32.mrb[0].mxu0
        %2559 = vdwg.mxu0
        %v2560 = vsel %vm2350, %v2542, -inf
        %2561 = vmax.xlane.f32.xlu0 %v2560
        %v2562 = vpop.xlane.xlu0 %2561
        %v2563 = vsel %vm2350, %v2547, -inf
        %2564 = vmax.xlane.f32.xlu0 %v2563
        %v2565 = vpop.xlane.xlu0 %2564
        %v2566 = vsel %vm2350, %v2552, -inf
        %2567 = vmax.xlane.f32.xlu0 %v2566
        %v2568 = vpop.xlane.xlu0 %2567
        %v2569 = vsel %vm2350, %v2557, -inf
        %2570 = vmax.xlane.f32.xlu0 %v2569
        %v2571 = vpop.xlane.xlu0 %2570
        %v2572 = vsub.f32 %v2542, %v2562
        %v2573 = vsub.f32 %v2547, %v2565
        %v2574 = vsub.f32 %v2552, %v2568
        %v2575 = vsub.f32 %v2557, %v2571
        %v2576 = vmul.f32 %v2572, 1.442695
        %v2577 = vpow.pop %v2576
        %v2578 = vmul.f32 %v2573, 1.442695
        %v2579 = vpow.pop %v2578
        %v2580 = vmul.f32 %v2574, 1.442695
        %v2581 = vpow.pop %v2580
        %v2582 = vmul.f32 %v2575, 1.442695
        %v2583 = vpow.pop %v2582
        %v2584 = vsel %vm2350, %v2577, 0.0
        %2585 = vadd.xlane.f32.xlu0 %v2584
        %v2586 = vpop.xlane.xlu0 %2585
        %v2587 = vsel %vm2350, %v2579, 0.0
        %2588 = vadd.xlane.f32.xlu0 %v2587
        %v2589 = vpop.xlane.xlu0 %2588
        %v2590 = vsel %vm2350, %v2581, 0.0
        %2591 = vadd.xlane.f32.xlu0 %v2590
        %v2592 = vpop.xlane.xlu0 %2591
        %v2593 = vsel %vm2350, %v2583, 0.0
        %2594 = vadd.xlane.f32.xlu0 %v2593
        %v2595 = vpop.xlane.xlu0 %2594
        %v2596 = vrcp.pop %v2586
        %v2597 = vrcp.pop %v2589
        %v2598 = vrcp.pop %v2592
        %v2599 = vrcp.pop %v2595
        %v2600 = vmul.f32 %v2577, %v2596
        %v2601 = vmul.f32 %v2579, %v2597
        %v2602 = vmul.f32 %v2581, %v2598
        %v2603 = vmul.f32 %v2583, %v2599
        %v2604 = vld [vmem:[#allocation11] sm:$0xf]
        %v2606 = vsel %vm2192, %v2604, 0
        %2608 = vmatprep.subr.mxu0 0.0
        %2609 = vmatpush1.msra.mxu0 %v2600
        %2610 = vmatprep.subr.mxu0 0.0
        %2611 = vmatpush1.msra.mxu0 %v2601
        %2612 = vmatprep.subr.mxu0 0.0
        %2613 = vmatpush1.msra.mxu0 %v2602
        %2614 = vmatprep.subr.mxu0 0.0
        %2615 = vmatpush1.msra.mxu0 %v2603
        %2616 = vmatprep.subr.mxu0 0.0
        %2617 = vmatpush1.msra.mxu0 0.0
        %2618 = vmatprep.subr.mxu0 0.0
        %2619 = vmatpush1.msra.mxu0 0.0
        %2620 = vmatprep.subr.mxu0 0.0
        %2621 = vmatpush1.msra.mxu0 0.0
        %2622 = vmatprep.subr.mxu0 0.0
        %2623 = vmatpush1.msra.mxu0 0.0
        %2624 = vmatprep.subr.mxu0 0.0
        %2625 = vmatpush1.msra.mxu0 0.0
        %2626 = vmatprep.subr.mxu0 0.0
        %2627 = vmatpush1.msra.mxu0 0.0
        %2628 = vmatprep.subr.mxu0 0.0
        %2629 = vmatpush1.msra.mxu0 0.0
        %2630 = vmatprep.subr.mxu0 0.0
        %2631 = vmatpush1.msra.mxu0 0.0
        %2632 = vmatprep.subr.mxu0 0.0
        %2633 = vmatpush1.msra.mxu0 0.0
        %2634 = vmatprep.subr.mxu0 0.0
        %2635 = vmatpush1.msra.mxu0 0.0
        %2636 = vmatprep.subr.mxu0 0.0
        %2637 = vmatpush1.msra.mxu0 0.0
        %2638 = vmatprep.subr.mxu0 0.0
        %2639 = vmatpush1.msra.mxu0 0.0
        %2640 = vmatprep.subr.mxu0 0.0
        %2641 = vmatpush1.msra.mxu0 0.0
        %2642 = vmatprep.subr.mxu0 0.0
        %2643 = vmatpush1.msra.mxu0 0.0
        %2644 = vmatprep.subr.mxu0 0.0
        %2645 = vmatpush1.msra.mxu0 0.0
        %2646 = vmatprep.subr.mxu0 0.0
        %2647 = vmatpush1.msra.mxu0 0.0
        %2648 = vmatprep.subr.mxu0 0.0
        %2649 = vmatpush1.msra.mxu0 0.0
        %2650 = vmatprep.subr.mxu0 0.0
        %2651 = vmatpush1.msra.mxu0 0.0
        %2652 = vmatprep.subr.mxu0 0.0
        %2653 = vmatpush1.msra.mxu0 0.0
        %2654 = vmatprep.subr.mxu0 0.0
        %2655 = vmatpush1.msra.mxu0 0.0
        %2656 = vmatprep.subr.mxu0 0.0
        %2657 = vmatpush1.msra.mxu0 0.0
        %2658 = vmatprep.subr.mxu0 0.0
        %2659 = vmatpush1.msra.mxu0 0.0
        %2660 = vmatprep.subr.mxu0 0.0
        %2661 = vmatpush1.msra.mxu0 0.0
        %2662 = vmatprep.subr.mxu0 0.0
        %2663 = vmatpush1.msra.mxu0 0.0
        %2664 = vmatprep.subr.mxu0 0.0
        %2665 = vmatpush1.msra.mxu0 0.0
        %2666 = vmatprep.subr.mxu0 0.0
        %2667 = vmatpush1.msra.mxu0 0.0
        %2668 = vmatprep.subr.mxu0 0.0
        %2669 = vmatpush1.msra.mxu0 0.0
        %2670 = vmatprep.subr.mxu0 0.0
        %2671 = vmatpush1.msra.mxu0 0.0
        %2672 = vmatprep.mubr.f32.mxu0 0.0
        %2673 = vmatmul.mubr.f32.gmra.mrb[0].mxu0 %v2606
        %v2674 = vpop.f32.mrb[0].mxu0
        %v2675 = vadd.f32 0.0, %v2674
        %v2676 = vpop.f32.mrb[0].mxu0
        %2677 = vdwg.mxu0
        %vm2678 = vcmask 27648
        %2679 = vst.msk [vmem:[%s821] sm:$0xf] %vm2678, %v2675
        %v2680 = vld [vmem:[%s13] sm:$0xff]
        %v2681 = vld [vmem:[%s13 + $0x8] sm:$0xff]
        %v2682 = vld [vmem:[%s13 + $0x10] sm:$0xff]
        %v2683 = vld [vmem:[%s13 + $0x18] sm:$0xff]
        %v2684 = vld [vmem:[%s13 + $0x20] sm:$0xff]
        %v2685 = vld [vmem:[%s13 + $0x28] sm:$0xff]
        %v2686 = vld [vmem:[%s13 + $0x30] sm:$0xff]
        %v2687 = vld [vmem:[%s13 + $0x38] sm:$0xff]
        %v2688 = vld [vmem:[%s13 + $0x40] sm:$0xff]
        %v2689 = vld [vmem:[%s13 + $0x48] sm:$0xff]
        %v2690 = vld [vmem:[%s13 + $0x50] sm:$0xff]
        %v2691 = vld [vmem:[%s13 + $0x58] sm:$0xff]
        %v2692 = vld [vmem:[%s13 + $0x60] sm:$0xff]
        %v2693 = vld [vmem:[%s13 + $0x68] sm:$0xff]
        %v2694 = vld [vmem:[%s13 + $0x70] sm:$0xff]
        %v2695 = vld [vmem:[%s13 + $0x78] sm:$0xff]
        %v2697 = vsel %vm2350, %v2680, 0
        %v2700 = vsel %vm2350, %v2681, 0
        %v2703 = vsel %vm2350, %v2682, 0
        %v2706 = vsel %vm2350, %v2683, 0
        %v2709 = vsel %vm2350, %v2684, 0
        %v2712 = vsel %vm2350, %v2685, 0
        %v2715 = vsel %vm2350, %v2686, 0
        %v2718 = vsel %vm2350, %v2687, 0
        %v2721 = vsel %vm2350, %v2688, 0
        %v2724 = vsel %vm2350, %v2689, 0
        %v2727 = vsel %vm2350, %v2690, 0
        %v2730 = vsel %vm2350, %v2691, 0
        %v2733 = vsel %vm2350, %v2692, 0
        %v2736 = vsel %vm2350, %v2693, 0
        %v2739 = vsel %vm2350, %v2694, 0
        %v2742 = vsel %vm2350, %v2695, 0
        %v2745 = vsel %vm2350, %v2675, 0
        %2747 = vmatprep.subr.mxu0 0.0
        %2748 = vmatpush1.xpose.msra.mxu0 %v2745
        %2749 = vmatprep.subr.mxu0 0.0
        %2750 = vmatpush1.xpose.msra.mxu0 0.0
        %2751 = vmatprep.subr.mxu0 0.0
        %2752 = vmatpush1.xpose.msra.mxu0 0.0
        %2753 = vmatprep.subr.mxu0 0.0
        %2754 = vmatpush1.xpose.msra.mxu0 0.0
        %2755 = vmatprep.subr.mxu0 0.0
        %2756 = vmatpush1.xpose.msra.mxu0 0.0
        %2757 = vmatprep.subr.mxu0 0.0
        %2758 = vmatpush1.xpose.msra.mxu0 0.0
        %2759 = vmatprep.subr.mxu0 0.0
        %2760 = vmatpush1.xpose.msra.mxu0 0.0
        %2761 = vmatprep.subr.mxu0 0.0
        %2762 = vmatpush1.xpose.msra.mxu0 0.0
        %2763 = vmatprep.subr.mxu0 0.0
        %2764 = vmatpush1.xpose.msra.mxu0 0.0
        %2765 = vmatprep.subr.mxu0 0.0
        %2766 = vmatpush1.xpose.msra.mxu0 0.0
        %2767 = vmatprep.subr.mxu0 0.0
        %2768 = vmatpush1.xpose.msra.mxu0 0.0
        %2769 = vmatprep.subr.mxu0 0.0
        %2770 = vmatpush1.xpose.msra.mxu0 0.0
        %2771 = vmatprep.subr.mxu0 0.0
        %2772 = vmatpush1.xpose.msra.mxu0 0.0
        %2773 = vmatprep.subr.mxu0 0.0
        %2774 = vmatpush1.xpose.msra.mxu0 0.0
        %2775 = vmatprep.subr.mxu0 0.0
        %2776 = vmatpush1.xpose.msra.mxu0 0.0
        %2777 = vmatprep.subr.mxu0 0.0
        %2778 = vmatpush1.xpose.msra.mxu0 0.0
        %2779 = vmatprep.subr.mxu0 0.0
        %2780 = vmatpush1.xpose.msra.mxu0 0.0
        %2781 = vmatprep.subr.mxu0 0.0
        %2782 = vmatpush1.xpose.msra.mxu0 0.0
        %2783 = vmatprep.subr.mxu0 0.0
        %2784 = vmatpush1.xpose.msra.mxu0 0.0
        %2785 = vmatprep.subr.mxu0 0.0
        %2786 = vmatpush1.xpose.msra.mxu0 0.0
        %2787 = vmatprep.subr.mxu0 0.0
        %2788 = vmatpush1.xpose.msra.mxu0 0.0
        %2789 = vmatprep.subr.mxu0 0.0
        %2790 = vmatpush1.xpose.msra.mxu0 0.0
        %2791 = vmatprep.subr.mxu0 0.0
        %2792 = vmatpush1.xpose.msra.mxu0 0.0
        %2793 = vmatprep.subr.mxu0 0.0
        %2794 = vmatpush1.xpose.msra.mxu0 0.0
        %2795 = vmatprep.subr.mxu0 0.0
        %2796 = vmatpush1.xpose.msra.mxu0 0.0
        %2797 = vmatprep.subr.mxu0 0.0
        %2798 = vmatpush1.xpose.msra.mxu0 0.0
        %2799 = vmatprep.subr.mxu0 0.0
        %2800 = vmatpush1.xpose.msra.mxu0 0.0
        %2801 = vmatprep.subr.mxu0 0.0
        %2802 = vmatpush1.xpose.msra.mxu0 0.0
        %2803 = vmatprep.subr.mxu0 0.0
        %2804 = vmatpush1.xpose.msra.mxu0 0.0
        %2805 = vmatprep.subr.mxu0 0.0
        %2806 = vmatpush1.xpose.msra.mxu0 0.0
        %2807 = vmatprep.subr.mxu0 0.0
        %2808 = vmatpush1.xpose.msra.mxu0 0.0
        %2809 = vmatprep.subr.mxu0 0.0
        %2810 = vmatpush1.xpose.msra.mxu0 0.0
        %2811 = vmatprep.mubr.f32.mxu0 0.0
        %2812 = vmatmul.mubr.f32.gmra.mrb[0].mxu0 %v2697
        %v2813 = vpop.f32.mrb[0].mxu0
        %v2814 = vadd.f32 0.0, %v2813
        %v2815 = vpop.f32.mrb[0].mxu0
        %2816 = vmatprep.mubr.f32.mxu0 0.0
        %2817 = vmatmul.mubr.f32.gmra.mrb[0].mxu0 %v2700
        %v2818 = vpop.f32.mrb[0].mxu0
        %v2819 = vadd.f32 0.0, %v2818
        %v2820 = vpop.f32.mrb[0].mxu0
        %2821 = vmatprep.mubr.f32.mxu0 0.0
        %2822 = vmatmul.mubr.f32.gmra.mrb[0].mxu0 %v2703
        %v2823 = vpop.f32.mrb[0].mxu0
        %v2824 = vadd.f32 0.0, %v2823
        %v2825 = vpop.f32.mrb[0].mxu0
        %2826 = vmatprep.mubr.f32.mxu0 0.0
        %2827 = vmatmul.mubr.f32.gmra.mrb[0].mxu0 %v2706
        %v2828 = vpop.f32.mrb[0].mxu0
        %v2829 = vadd.f32 0.0, %v2828
        %v2830 = vpop.f32.mrb[0].mxu0
        %2831 = vmatprep.mubr.f32.mxu0 0.0
        %2832 = vmatmul.mubr.f32.gmra.mrb[0].mxu0 %v2709
        %v2833 = vpop.f32.mrb[0].mxu0
        %v2834 = vadd.f32 0.0, %v2833
        %v2835 = vpop.f32.mrb[0].mxu0
        %2836 = vmatprep.mubr.f32.mxu0 0.0
        %2837 = vmatmul.mubr.f32.gmra.mrb[0].mxu0 %v2712
        %v2838 = vpop.f32.mrb[0].mxu0
        %v2839 = vadd.f32 0.0, %v2838
        %v2840 = vpop.f32.mrb[0].mxu0
        %2841 = vmatprep.mubr.f32.mxu0 0.0
        %2842 = vmatmul.mubr.f32.gmra.mrb[0].mxu0 %v2715
        %v2843 = vpop.f32.mrb[0].mxu0
        %v2844 = vadd.f32 0.0, %v2843
        %v2845 = vpop.f32.mrb[0].mxu0
        %2846 = vmatprep.mubr.f32.mxu0 0.0
        %2847 = vmatmul.mubr.f32.gmra.mrb[0].mxu0 %v2718
        %v2848 = vpop.f32.mrb[0].mxu0
        %v2849 = vadd.f32 0.0, %v2848
        %v2850 = vpop.f32.mrb[0].mxu0
        %2851 = vmatprep.mubr.f32.mxu0 0.0
        %2852 = vmatmul.mubr.f32.gmra.mrb[0].mxu0 %v2721
        %v2853 = vpop.f32.mrb[0].mxu0
        %v2854 = vadd.f32 0.0, %v2853
        %v2855 = vpop.f32.mrb[0].mxu0
        %2856 = vmatprep.mubr.f32.mxu0 0.0
        %2857 = vmatmul.mubr.f32.gmra.mrb[0].mxu0 %v2724
        %v2858 = vpop.f32.mrb[0].mxu0
        %v2859 = vadd.f32 0.0, %v2858
        %v2860 = vpop.f32.mrb[0].mxu0
        %2861 = vmatprep.mubr.f32.mxu0 0.0
        %2862 = vmatmul.mubr.f32.gmra.mrb[0].mxu0 %v2727
        %v2863 = vpop.f32.mrb[0].mxu0
        %v2864 = vadd.f32 0.0, %v2863
        %v2865 = vpop.f32.mrb[0].mxu0
        %2866 = vmatprep.mubr.f32.mxu0 0.0
        %2867 = vmatmul.mubr.f32.gmra.mrb[0].mxu0 %v2730
        %v2868 = vpop.f32.mrb[0].mxu0
        %v2869 = vadd.f32 0.0, %v2868
        %v2870 = vpop.f32.mrb[0].mxu0
        %2871 = vmatprep.mubr.f32.mxu0 0.0
        %2872 = vmatmul.mubr.f32.gmra.mrb[0].mxu0 %v2733
        %v2873 = vpop.f32.mrb[0].mxu0
        %v2874 = vadd.f32 0.0, %v2873
        %v2875 = vpop.f32.mrb[0].mxu0
        %2876 = vmatprep.mubr.f32.mxu0 0.0
        %2877 = vmatmul.mubr.f32.gmra.mrb[0].mxu0 %v2736
        %v2878 = vpop.f32.mrb[0].mxu0
        %v2879 = vadd.f32 0.0, %v2878
        %v2880 = vpop.f32.mrb[0].mxu0
        %2881 = vmatprep.mubr.f32.mxu0 0.0
        %2882 = vmatmul.mubr.f32.gmra.mrb[0].mxu0 %v2739
        %v2883 = vpop.f32.mrb[0].mxu0
        %v2884 = vadd.f32 0.0, %v2883
        %v2885 = vpop.f32.mrb[0].mxu0
        %2886 = vmatprep.mubr.f32.mxu0 0.0
        %2887 = vmatmul.mubr.f32.gmra.mrb[0].mxu0 %v2742
        %v2888 = vpop.f32.mrb[0].mxu0
        %v2889 = vadd.f32 0.0, %v2888
        %v2890 = vpop.f32.mrb[0].mxu0
        %2891 = vdwg.mxu0
        %v2892 = vld [vmem:[#allocation13] sm:$0xf]
        %v2894 = vsel %vm2350, %v2814, 0
        %v2897 = vsel %vm2350, %v2819, 0
        %v2900 = vsel %vm2350, %v2824, 0
        %v2903 = vsel %vm2350, %v2829, 0
        %v2906 = vsel %vm2350, %v2834, 0
        %v2909 = vsel %vm2350, %v2839, 0
        %v2912 = vsel %vm2350, %v2844, 0
        %v2915 = vsel %vm2350, %v2849, 0
        %v2918 = vsel %vm2350, %v2854, 0
        %v2921 = vsel %vm2350, %v2859, 0
        %v2924 = vsel %vm2350, %v2864, 0
        %v2927 = vsel %vm2350, %v2869, 0
        %v2930 = vsel %vm2350, %v2874, 0
        %v2933 = vsel %vm2350, %v2879, 0
        %v2936 = vsel %vm2350, %v2884, 0
        %v2939 = vsel %vm2350, %v2889, 0
        %v2942 = vsel %vm2363, %v2892, 0
        %2944 = vmatprep.subr.mxu0 0.0
        %2945 = vmatpush1.msra.mxu0 %v2942
        %2946 = vmatprep.subr.mxu0 0.0
        %2947 = vmatpush1.msra.mxu0 0.0
        %2948 = vmatprep.subr.mxu0 0.0
        %2949 = vmatpush1.msra.mxu0 0.0
        %2950 = vmatprep.subr.mxu0 0.0
        %2951 = vmatpush1.msra.mxu0 0.0
        %2952 = vmatprep.subr.mxu0 0.0
        %2953 = vmatpush1.msra.mxu0 0.0
        %2954 = vmatprep.subr.mxu0 0.0
        %2955 = vmatpush1.msra.mxu0 0.0
        %2956 = vmatprep.subr.mxu0 0.0
        %2957 = vmatpush1.msra.mxu0 0.0
        %2958 = vmatprep.subr.mxu0 0.0
        %2959 = vmatpush1.msra.mxu0 0.0
        %2960 = vmatprep.subr.mxu0 0.0
        %2961 = vmatpush1.msra.mxu0 0.0
        %2962 = vmatprep.subr.mxu0 0.0
        %2963 = vmatpush1.msra.mxu0 0.0
        %2964 = vmatprep.subr.mxu0 0.0
        %2965 = vmatpush1.msra.mxu0 0.0
        %2966 = vmatprep.subr.mxu0 0.0
        %2967 = vmatpush1.msra.mxu0 0.0
        %2968 = vmatprep.subr.mxu0 0.0
        %2969 = vmatpush1.msra.mxu0 0.0
        %2970 = vmatprep.subr.mxu0 0.0
        %2971 = vmatpush1.msra.mxu0 0.0
        %2972 = vmatprep.subr.mxu0 0.0
        %2973 = vmatpush1.msra.mxu0 0.0
        %2974 = vmatprep.subr.mxu0 0.0
        %2975 = vmatpush1.msra.mxu0 0.0
        %2976 = vmatprep.subr.mxu0 0.0
        %2977 = vmatpush1.msra.mxu0 0.0
        %2978 = vmatprep.subr.mxu0 0.0
        %2979 = vmatpush1.msra.mxu0 0.0
        %2980 = vmatprep.subr.mxu0 0.0
        %2981 = vmatpush1.msra.mxu0 0.0
        %2982 = vmatprep.subr.mxu0 0.0
        %2983 = vmatpush1.msra.mxu0 0.0
        %2984 = vmatprep.subr.mxu0 0.0
        %2985 = vmatpush1.msra.mxu0 0.0
        %2986 = vmatprep.subr.mxu0 0.0
        %2987 = vmatpush1.msra.mxu0 0.0
        %2988 = vmatprep.subr.mxu0 0.0
        %2989 = vmatpush1.msra.mxu0 0.0
        %2990 = vmatprep.subr.mxu0 0.0
        %2991 = vmatpush1.msra.mxu0 0.0
        %2992 = vmatprep.subr.mxu0 0.0
        %2993 = vmatpush1.msra.mxu0 0.0
        %2994 = vmatprep.subr.mxu0 0.0
        %2995 = vmatpush1.msra.mxu0 0.0
        %2996 = vmatprep.subr.mxu0 0.0
        %2997 = vmatpush1.msra.mxu0 0.0
        %2998 = vmatprep.subr.mxu0 0.0
        %2999 = vmatpush1.msra.mxu0 0.0
        %3000 = vmatprep.subr.mxu0 0.0
        %3001 = vmatpush1.msra.mxu0 0.0
        %3002 = vmatprep.subr.mxu0 0.0
        %3003 = vmatpush1.msra.mxu0 0.0
        %3004 = vmatprep.subr.mxu0 0.0
        %3005 = vmatpush1.msra.mxu0 0.0
        %3006 = vmatprep.subr.mxu0 0.0
        %3007 = vmatpush1.msra.mxu0 0.0
        %3008 = vmatprep.mubr.f32.mxu0 0.0
        %3009 = vmatmul.mubr.f32.gmra.mrb[0].mxu0 %v2894
        %v3010 = vpop.f32.mrb[0].mxu0
        %v3011 = vadd.f32 0.0, %v3010
        %v3012 = vpop.f32.mrb[0].mxu0
        %3013 = vmatprep.mubr.f32.mxu0 0.0
        %3014 = vmatmul.mubr.f32.gmra.mrb[0].mxu0 %v2897
        %v3015 = vpop.f32.mrb[0].mxu0
        %v3016 = vadd.f32 0.0, %v3015
        %v3017 = vpop.f32.mrb[0].mxu0
        %3018 = vmatprep.mubr.f32.mxu0 0.0
        %3019 = vmatmul.mubr.f32.gmra.mrb[0].mxu0 %v2900
        %v3020 = vpop.f32.mrb[0].mxu0
        %v3021 = vadd.f32 0.0, %v3020
        %v3022 = vpop.f32.mrb[0].mxu0
        %3023 = vmatprep.mubr.f32.mxu0 0.0
        %3024 = vmatmul.mubr.f32.gmra.mrb[0].mxu0 %v2903
        %v3025 = vpop.f32.mrb[0].mxu0
        %v3026 = vadd.f32 0.0, %v3025
        %v3027 = vpop.f32.mrb[0].mxu0
        %3028 = vmatprep.mubr.f32.mxu0 0.0
        %3029 = vmatmul.mubr.f32.gmra.mrb[0].mxu0 %v2906
        %v3030 = vpop.f32.mrb[0].mxu0
        %v3031 = vadd.f32 0.0, %v3030
        %v3032 = vpop.f32.mrb[0].mxu0
        %3033 = vmatprep.mubr.f32.mxu0 0.0
        %3034 = vmatmul.mubr.f32.gmra.mrb[0].mxu0 %v2909
        %v3035 = vpop.f32.mrb[0].mxu0
        %v3036 = vadd.f32 0.0, %v3035
        %v3037 = vpop.f32.mrb[0].mxu0
        %3038 = vmatprep.mubr.f32.mxu0 0.0
        %3039 = vmatmul.mubr.f32.gmra.mrb[0].mxu0 %v2912
        %v3040 = vpop.f32.mrb[0].mxu0
        %v3041 = vadd.f32 0.0, %v3040
        %v3042 = vpop.f32.mrb[0].mxu0
        %3043 = vmatprep.mubr.f32.mxu0 0.0
        %3044 = vmatmul.mubr.f32.gmra.mrb[0].mxu0 %v2915
        %v3045 = vpop.f32.mrb[0].mxu0
        %v3046 = vadd.f32 0.0, %v3045
        %v3047 = vpop.f32.mrb[0].mxu0
        %3048 = vmatprep.mubr.f32.mxu0 0.0
        %3049 = vmatmul.mubr.f32.gmra.mrb[0].mxu0 %v2918
        %v3050 = vpop.f32.mrb[0].mxu0
        %v3051 = vadd.f32 0.0, %v3050
        %v3052 = vpop.f32.mrb[0].mxu0
        %3053 = vmatprep.mubr.f32.mxu0 0.0
        %3054 = vmatmul.mubr.f32.gmra.mrb[0].mxu0 %v2921
        %v3055 = vpop.f32.mrb[0].mxu0
        %v3056 = vadd.f32 0.0, %v3055
        %v3057 = vpop.f32.mrb[0].mxu0
        %3058 = vmatprep.mubr.f32.mxu0 0.0
        %3059 = vmatmul.mubr.f32.gmra.mrb[0].mxu0 %v2924
        %v3060 = vpop.f32.mrb[0].mxu0
        %v3061 = vadd.f32 0.0, %v3060
        %v3062 = vpop.f32.mrb[0].mxu0
        %3063 = vmatprep.mubr.f32.mxu0 0.0
        %3064 = vmatmul.mubr.f32.gmra.mrb[0].mxu0 %v2927
        %v3065 = vpop.f32.mrb[0].mxu0
        %v3066 = vadd.f32 0.0, %v3065
        %v3067 = vpop.f32.mrb[0].mxu0
        %3068 = vmatprep.mubr.f32.mxu0 0.0
        %3069 = vmatmul.mubr.f32.gmra.mrb[0].mxu0 %v2930
        %v3070 = vpop.f32.mrb[0].mxu0
        %v3071 = vadd.f32 0.0, %v3070
        %v3072 = vpop.f32.mrb[0].mxu0
        %3073 = vmatprep.mubr.f32.mxu0 0.0
        %3074 = vmatmul.mubr.f32.gmra.mrb[0].mxu0 %v2933
        %v3075 = vpop.f32.mrb[0].mxu0
        %v3076 = vadd.f32 0.0, %v3075
        %v3077 = vpop.f32.mrb[0].mxu0
        %3078 = vmatprep.mubr.f32.mxu0 0.0
        %3079 = vmatmul.mubr.f32.gmra.mrb[0].mxu0 %v2936
        %v3080 = vpop.f32.mrb[0].mxu0
        %v3081 = vadd.f32 0.0, %v3080
        %v3082 = vpop.f32.mrb[0].mxu0
        %3083 = vmatprep.mubr.f32.mxu0 0.0
        %3084 = vmatmul.mubr.f32.gmra.mrb[0].mxu0 %v2939
        %v3085 = vpop.f32.mrb[0].mxu0
        %v3086 = vadd.f32 0.0, %v3085
        %v3087 = vpop.f32.mrb[0].mxu0
        %3088 = vdwg.mxu0
        %v3089 = vld [vmem:[#allocation14] sm:$0xff]
        %v3090 = vld [vmem:[#allocation14 + $0x8] sm:$0xff]
        %v3091 = vld [vmem:[#allocation14 + $0x10] sm:$0xff]
        %v3092 = vld [vmem:[#allocation14 + $0x18] sm:$0xff]
        %v3093 = vld [vmem:[#allocation14 + $0x20] sm:$0xff]
        %v3094 = vld [vmem:[#allocation14 + $0x28] sm:$0xff]
        %v3095 = vld [vmem:[#allocation14 + $0x30] sm:$0xff]
        %v3096 = vld [vmem:[#allocation14 + $0x38] sm:$0xff]
        %v3097 = vld [vmem:[#allocation14 + $0x40] sm:$0xff]
        %v3098 = vld [vmem:[#allocation14 + $0x48] sm:$0xff]
        %v3099 = vld [vmem:[#allocation14 + $0x50] sm:$0xff]
        %v3100 = vld [vmem:[#allocation14 + $0x58] sm:$0xff]
        %v3101 = vld [vmem:[#allocation14 + $0x60] sm:$0xff]
        %v3102 = vld [vmem:[#allocation14 + $0x68] sm:$0xff]
        %v3103 = vld [vmem:[#allocation14 + $0x70] sm:$0xff]
        %v3104 = vld [vmem:[#allocation14 + $0x78] sm:$0xff]
        %v3105 = vmul.f32 %v3011, %v3089
        %v3106 = vmul.f32 %v3016, %v3090
        %v3107 = vmul.f32 %v3021, %v3091
        %v3108 = vmul.f32 %v3026, %v3092
        %v3109 = vmul.f32 %v3031, %v3093
        %v3110 = vmul.f32 %v3036, %v3094
        %v3111 = vmul.f32 %v3041, %v3095
        %v3112 = vmul.f32 %v3046, %v3096
        %v3113 = vmul.f32 %v3051, %v3097
        %v3114 = vmul.f32 %v3056, %v3098
        %v3115 = vmul.f32 %v3061, %v3099
        %v3116 = vmul.f32 %v3066, %v3100
        %v3117 = vmul.f32 %v3071, %v3101
        %v3118 = vmul.f32 %v3076, %v3102
        %v3119 = vmul.f32 %v3081, %v3103
        %v3120 = vmul.f32 %v3086, %v3104
        %3121 = vmatprep.subr.mxu0 0.0
        %3122 = vmatpush1.msra.mxu0 %v3105
        %3123 = vmatprep.subr.mxu0 0.0
        %3124 = vmatpush1.msra.mxu0 %v3106
        %3125 = vmatprep.subr.mxu0 0.0
        %3126 = vmatpush1.msra.mxu0 %v3107
        %3127 = vmatprep.subr.mxu0 0.0
        %3128 = vmatpush1.msra.mxu0 %v3108
        %3129 = vmatprep.subr.mxu0 0.0
        %3130 = vmatpush1.msra.mxu0 %v3109
        %3131 = vmatprep.subr.mxu0 0.0
        %3132 = vmatpush1.msra.mxu0 %v3110
        %3133 = vmatprep.subr.mxu0 0.0
        %3134 = vmatpush1.msra.mxu0 %v3111
        %3135 = vmatprep.subr.mxu0 0.0
        %3136 = vmatpush1.msra.mxu0 %v3112
        %3137 = vmatprep.subr.mxu0 0.0
        %3138 = vmatpush1.msra.mxu0 %v3113
        %3139 = vmatprep.subr.mxu0 0.0
        %3140 = vmatpush1.msra.mxu0 %v3114
        %3141 = vmatprep.subr.mxu0 0.0
        %3142 = vmatpush1.msra.mxu0 %v3115
        %3143 = vmatprep.subr.mxu0 0.0
        %3144 = vmatpush1.msra.mxu0 %v3116
        %3145 = vmatprep.subr.mxu0 0.0
        %3146 = vmatpush1.msra.mxu0 %v3117
        %3147 = vmatprep.subr.mxu0 0.0
        %3148 = vmatpush1.msra.mxu0 %v3118
        %3149 = vmatprep.subr.mxu0 0.0
        %3150 = vmatpush1.msra.mxu0 %v3119
        %3151 = vmatprep.subr.mxu0 0.0
        %3152 = vmatpush1.msra.mxu0 %v3120
        %3153 = vmatprep.subr.mxu0 0.0
        %3154 = vmatpush1.msra.mxu0 0.0
        %3155 = vmatprep.subr.mxu0 0.0
        %3156 = vmatpush1.msra.mxu0 0.0
        %3157 = vmatprep.subr.mxu0 0.0
        %3158 = vmatpush1.msra.mxu0 0.0
        %3159 = vmatprep.subr.mxu0 0.0
        %3160 = vmatpush1.msra.mxu0 0.0
        %3161 = vmatprep.subr.mxu0 0.0
        %3162 = vmatpush1.msra.mxu0 0.0
        %3163 = vmatprep.subr.mxu0 0.0
        %3164 = vmatpush1.msra.mxu0 0.0
        %3165 = vmatprep.subr.mxu0 0.0
        %3166 = vmatpush1.msra.mxu0 0.0
        %3167 = vmatprep.subr.mxu0 0.0
        %3168 = vmatpush1.msra.mxu0 0.0
        %3169 = vmatprep.subr.mxu0 0.0
        %3170 = vmatpush1.msra.mxu0 0.0
        %3171 = vmatprep.subr.mxu0 0.0
        %3172 = vmatpush1.msra.mxu0 0.0
        %3173 = vmatprep.subr.mxu0 0.0
        %3174 = vmatpush1.msra.mxu0 0.0
        %3175 = vmatprep.subr.mxu0 0.0
        %3176 = vmatpush1.msra.mxu0 0.0
        %3177 = vmatprep.subr.mxu0 0.0
        %3178 = vmatpush1.msra.mxu0 0.0
        %3179 = vmatprep.subr.mxu0 0.0
        %3180 = vmatpush1.msra.mxu0 0.0
        %3181 = vmatprep.subr.mxu0 0.0
        %3182 = vmatpush1.msra.mxu0 0.0
        %3183 = vmatprep.subr.mxu0 0.0
        %3184 = vmatpush1.msra.mxu0 0.0
        %3185 = vmatprep.mubr.f32.mxu0 0.0
        %3186 = vmatmul.mubr.f32.gmra.mrb[0].mxu0 %v2158
        %v3187 = vpop.f32.mrb[0].mxu0
        %v3188 = vadd.f32 0.0, %v3187
        %v3189 = vpop.f32.mrb[0].mxu0
        %3190 = vdwg.mxu0
        %v3191 = vadd.f32 %v2158, %v3188
        %v3192 = vld [vmem:[%s5 + $0x1] sm:$0x1]
        %v3193 = vld [vmem:[#allocation5 + $0x1] sm:$0x1]
        %3194 = vmatprep.subr.mxu0 0.0
        %3195 = vmatpush1.msra.mxu0 %v827
        %3196 = vmatprep.subr.mxu0 0.0
        %3197 = vmatpush1.msra.mxu0 %v828
        %3198 = vmatprep.subr.mxu0 0.0
        %3199 = vmatpush1.msra.mxu0 %v829
        %3200 = vmatprep.subr.mxu0 0.0
        %3201 = vmatpush1.msra.mxu0 %v830
        %3202 = vmatprep.subr.mxu0 0.0
        %3203 = vmatpush1.msra.mxu0 %v831
        %3204 = vmatprep.subr.mxu0 0.0
        %3205 = vmatpush1.msra.mxu0 %v832
        %3206 = vmatprep.subr.mxu0 0.0
        %3207 = vmatpush1.msra.mxu0 %v833
        %3208 = vmatprep.subr.mxu0 0.0
        %3209 = vmatpush1.msra.mxu0 %v834
        %3210 = vmatprep.subr.mxu0 0.0
        %3211 = vmatpush1.msra.mxu0 %v835
        %3212 = vmatprep.subr.mxu0 0.0
        %3213 = vmatpush1.msra.mxu0 %v836
        %3214 = vmatprep.subr.mxu0 0.0
        %3215 = vmatpush1.msra.mxu0 %v837
        %3216 = vmatprep.subr.mxu0 0.0
        %3217 = vmatpush1.msra.mxu0 %v838
        %3218 = vmatprep.subr.mxu0 0.0
        %3219 = vmatpush1.msra.mxu0 %v839
        %3220 = vmatprep.subr.mxu0 0.0
        %3221 = vmatpush1.msra.mxu0 %v840
        %3222 = vmatprep.subr.mxu0 0.0
        %3223 = vmatpush1.msra.mxu0 %v841
        %3224 = vmatprep.subr.mxu0 0.0
        %3225 = vmatpush1.msra.mxu0 %v842
        %3226 = vmatprep.subr.mxu0 0.0
        %3227 = vmatpush1.msra.mxu0 0.0
        %3228 = vmatprep.subr.mxu0 0.0
        %3229 = vmatpush1.msra.mxu0 0.0
        %3230 = vmatprep.subr.mxu0 0.0
        %3231 = vmatpush1.msra.mxu0 0.0
        %3232 = vmatprep.subr.mxu0 0.0
        %3233 = vmatpush1.msra.mxu0 0.0
        %3234 = vmatprep.subr.mxu0 0.0
        %3235 = vmatpush1.msra.mxu0 0.0
        %3236 = vmatprep.subr.mxu0 0.0
        %3237 = vmatpush1.msra.mxu0 0.0
        %3238 = vmatprep.subr.mxu0 0.0
        %3239 = vmatpush1.msra.mxu0 0.0
        %3240 = vmatprep.subr.mxu0 0.0
        %3241 = vmatpush1.msra.mxu0 0.0
        %3242 = vmatprep.subr.mxu0 0.0
        %3243 = vmatpush1.msra.mxu0 0.0
        %3244 = vmatprep.subr.mxu0 0.0
        %3245 = vmatpush1.msra.mxu0 0.0
        %3246 = vmatprep.subr.mxu0 0.0
        %3247 = vmatpush1.msra.mxu0 0.0
        %3248 = vmatprep.subr.mxu0 0.0
        %3249 = vmatpush1.msra.mxu0 0.0
        %3250 = vmatprep.subr.mxu0 0.0
        %3251 = vmatpush1.msra.mxu0 0.0
        %3252 = vmatprep.subr.mxu0 0.0
        %3253 = vmatpush1.msra.mxu0 0.0
        %3254 = vmatprep.subr.mxu0 0.0
        %3255 = vmatpush1.msra.mxu0 0.0
        %3256 = vmatprep.subr.mxu0 0.0
        %3257 = vmatpush1.msra.mxu0 0.0
        %3258 = vmatprep.mubr.f32.mxu0 0.0
        %3259 = vmatmul.mubr.f32.gmra.mrb[0].mxu0 %v3191
        %v3260 = vpop.f32.mrb[0].mxu0
        %v3261 = vadd.f32 0.0, %v3260
        %v3262 = vpop.f32.mrb[0].mxu0
        %3263 = vdwg.mxu0
        %v3264 = vsub.f32 %v3191, %v3261
        %v3265 = vmul.f32 %v3264, %v3264
        %3266 = vmatprep.subr.mxu0 0.0
        %3267 = vmatpush1.msra.mxu0 %v827
        %3268 = vmatprep.subr.mxu0 0.0
        %3269 = vmatpush1.msra.mxu0 %v828
        %3270 = vmatprep.subr.mxu0 0.0
        %3271 = vmatpush1.msra.mxu0 %v829
        %3272 = vmatprep.subr.mxu0 0.0
        %3273 = vmatpush1.msra.mxu0 %v830
        %3274 = vmatprep.subr.mxu0 0.0
        %3275 = vmatpush1.msra.mxu0 %v831
        %3276 = vmatprep.subr.mxu0 0.0
        %3277 = vmatpush1.msra.mxu0 %v832
        %3278 = vmatprep.subr.mxu0 0.0
        %3279 = vmatpush1.msra.mxu0 %v833
        %3280 = vmatprep.subr.mxu0 0.0
        %3281 = vmatpush1.msra.mxu0 %v834
        %3282 = vmatprep.subr.mxu0 0.0
        %3283 = vmatpush1.msra.mxu0 %v835
        %3284 = vmatprep.subr.mxu0 0.0
        %3285 = vmatpush1.msra.mxu0 %v836
        %3286 = vmatprep.subr.mxu0 0.0
        %3287 = vmatpush1.msra.mxu0 %v837
        %3288 = vmatprep.subr.mxu0 0.0
        %3289 = vmatpush1.msra.mxu0 %v838
        %3290 = vmatprep.subr.mxu0 0.0
        %3291 = vmatpush1.msra.mxu0 %v839
        %3292 = vmatprep.subr.mxu0 0.0
        %3293 = vmatpush1.msra.mxu0 %v840
        %3294 = vmatprep.subr.mxu0 0.0
        %3295 = vmatpush1.msra.mxu0 %v841
        %3296 = vmatprep.subr.mxu0 0.0
        %3297 = vmatpush1.msra.mxu0 %v842
        %3298 = vmatprep.subr.mxu0 0.0
        %3299 = vmatpush1.msra.mxu0 0.0
        %3300 = vmatprep.subr.mxu0 0.0
        %3301 = vmatpush1.msra.mxu0 0.0
        %3302 = vmatprep.subr.mxu0 0.0
        %3303 = vmatpush1.msra.mxu0 0.0
        %3304 = vmatprep.subr.mxu0 0.0
        %3305 = vmatpush1.msra.mxu0 0.0
        %3306 = vmatprep.subr.mxu0 0.0
        %3307 = vmatpush1.msra.mxu0 0.0
        %3308 = vmatprep.subr.mxu0 0.0
        %3309 = vmatpush1.msra.mxu0 0.0
        %3310 = vmatprep.subr.mxu0 0.0
        %3311 = vmatpush1.msra.mxu0 0.0
        %3312 = vmatprep.subr.mxu0 0.0
        %3313 = vmatpush1.msra.mxu0 0.0
        %3314 = vmatprep.subr.mxu0 0.0
        %3315 = vmatpush1.msra.mxu0 0.0
        %3316 = vmatprep.subr.mxu0 0.0
        %3317 = vmatpush1.msra.mxu0 0.0
        %3318 = vmatprep.subr.mxu0 0.0
        %3319 = vmatpush1.msra.mxu0 0.0
        %3320 = vmatprep.subr.mxu0 0.0
        %3321 = vmatpush1.msra.mxu0 0.0
        %3322 = vmatprep.subr.mxu0 0.0
        %3323 = vmatpush1.msra.mxu0 0.0
        %3324 = vmatprep.subr.mxu0 0.0
        %3325 = vmatpush1.msra.mxu0 0.0
        %3326 = vmatprep.subr.mxu0 0.0
        %3327 = vmatpush1.msra.mxu0 0.0
        %3328 = vmatprep.subr.mxu0 0.0
        %3329 = vmatpush1.msra.mxu0 0.0
        %3330 = vmatprep.mubr.f32.mxu0 0.0
        %3331 = vmatmul.mubr.f32.gmra.mrb[0].mxu0 %v3265
        %v3332 = vpop.f32.mrb[0].mxu0
        %v3333 = vadd.f32 1e-05, %v3332
        %v3334 = vpop.f32.mrb[0].mxu0
        %3335 = vdwg.mxu0
        %v3336 = vrsqrt.pop %v3333
        %v3337 = vmul.f32 %v3264, %v3336
        %v3338 = vlaneseq
        %v3339 = vshrl.u32 %v3338, 7
        %v3340 = vsub.s32 0, %v3339
        %v3341 = vrot.slane %v3192, %v3340
        %v3342 = vmul.f32 %v3337, %v3341
        %v3343 = vlaneseq
        %v3344 = vshrl.u32 %v3343, 7
        %v3345 = vsub.s32 0, %v3344
        %v3346 = vrot.slane %v3193, %v3345
        %v3347 = vadd.f32 %v3342, %v3346
        %v3348 = vld [vmem:[#allocation16] sm:$0xff]
        %v3350 = vsel %vm844, %v3348, 0
        %3352 = vmatprep.subr.mxu0 0.0
        %3353 = vmatpush1.msra.mxu0 %v3347
        %3354 = vmatprep.subr.mxu0 0.0
        %3355 = vmatpush1.msra.mxu0 0.0
        %3356 = vmatprep.subr.mxu0 0.0
        %3357 = vmatpush1.msra.mxu0 0.0
        %3358 = vmatprep.subr.mxu0 0.0
        %3359 = vmatpush1.msra.mxu0 0.0
        %3360 = vmatprep.subr.mxu0 0.0
        %3361 = vmatpush1.msra.mxu0 0.0
        %3362 = vmatprep.subr.mxu0 0.0
        %3363 = vmatpush1.msra.mxu0 0.0
        %3364 = vmatprep.subr.mxu0 0.0
        %3365 = vmatpush1.msra.mxu0 0.0
        %3366 = vmatprep.subr.mxu0 0.0
        %3367 = vmatpush1.msra.mxu0 0.0
        %3368 = vmatprep.subr.mxu0 0.0
        %3369 = vmatpush1.msra.mxu0 0.0
        %3370 = vmatprep.subr.mxu0 0.0
        %3371 = vmatpush1.msra.mxu0 0.0
        %3372 = vmatprep.subr.mxu0 0.0
        %3373 = vmatpush1.msra.mxu0 0.0
        %3374 = vmatprep.subr.mxu0 0.0
        %3375 = vmatpush1.msra.mxu0 0.0
        %3376 = vmatprep.subr.mxu0 0.0
        %3377 = vmatpush1.msra.mxu0 0.0
        %3378 = vmatprep.subr.mxu0 0.0
        %3379 = vmatpush1.msra.mxu0 0.0
        %3380 = vmatprep.subr.mxu0 0.0
        %3381 = vmatpush1.msra.mxu0 0.0
        %3382 = vmatprep.subr.mxu0 0.0
        %3383 = vmatpush1.msra.mxu0 0.0
        %3384 = vmatprep.subr.mxu0 0.0
        %3385 = vmatpush1.msra.mxu0 0.0
        %3386 = vmatprep.subr.mxu0 0.0
        %3387 = vmatpush1.msra.mxu0 0.0
        %3388 = vmatprep.subr.mxu0 0.0
        %3389 = vmatpush1.msra.mxu0 0.0
        %3390 = vmatprep.subr.mxu0 0.0
        %3391 = vmatpush1.msra.mxu0 0.0
        %3392 = vmatprep.subr.mxu0 0.0
        %3393 = vmatpush1.msra.mxu0 0.0
        %3394 = vmatprep.subr.mxu0 0.0
        %3395 = vmatpush1.msra.mxu0 0.0
        %3396 = vmatprep.subr.mxu0 0.0
        %3397 = vmatpush1.msra.mxu0 0.0
        %3398 = vmatprep.subr.mxu0 0.0
        %3399 = vmatpush1.msra.mxu0 0.0
        %3400 = vmatprep.subr.mxu0 0.0
        %3401 = vmatpush1.msra.mxu0 0.0
        %3402 = vmatprep.subr.mxu0 0.0
        %3403 = vmatpush1.msra.mxu0 0.0
        %3404 = vmatprep.subr.mxu0 0.0
        %3405 = vmatpush1.msra.mxu0 0.0
        %3406 = vmatprep.subr.mxu0 0.0
        %3407 = vmatpush1.msra.mxu0 0.0
        %3408 = vmatprep.subr.mxu0 0.0
        %3409 = vmatpush1.msra.mxu0 0.0
        %3410 = vmatprep.subr.mxu0 0.0
        %3411 = vmatpush1.msra.mxu0 0.0
        %3412 = vmatprep.subr.mxu0 0.0
        %3413 = vmatpush1.msra.mxu0 0.0
        %3414 = vmatprep.subr.mxu0 0.0
        %3415 = vmatpush1.msra.mxu0 0.0
        %3416 = vmatprep.mubr.f32.mxu0 0.0
        %3417 = vmatmul.mubr.f32.gmra.mrb[0].mxu0 %v3350
        %v3418 = vpop.f32.mrb[0].mxu0
        %v3419 = vadd.f32 0.0, %v3418
        %v3420 = vpop.f32.mrb[0].mxu0
        %3421 = vdwg.mxu0
        %v3422 = vld [vmem:[#allocation17] sm:$0x1]
        %v3423 = vlaneseq
        %v3424 = vshrl.u32 %v3423, 7
        %v3425 = vsub.s32 0, %v3424
        %v3426 = vrot.slane %v3422, %v3425
        %v3427 = vmul.f32 %v3419, %v3426
        %v3428 = vadd.f32 %v3427, 0.0
        %s3429 = scalar_lea.vmem [#allocation16], 8
        %v3430 = vld [vmem:[%s3429] sm:$0xff]
        %v3432 = vsel %vm844, %v3430, 0
        %3434 = vmatprep.subr.mxu0 0.0
        %3435 = vmatpush1.msra.mxu0 %v3347
        %3436 = vmatprep.subr.mxu0 0.0
        %3437 = vmatpush1.msra.mxu0 0.0
        %3438 = vmatprep.subr.mxu0 0.0
        %3439 = vmatpush1.msra.mxu0 0.0
        %3440 = vmatprep.subr.mxu0 0.0
        %3441 = vmatpush1.msra.mxu0 0.0
        %3442 = vmatprep.subr.mxu0 0.0
        %3443 = vmatpush1.msra.mxu0 0.0
        %3444 = vmatprep.subr.mxu0 0.0
        %3445 = vmatpush1.msra.mxu0 0.0
        %3446 = vmatprep.subr.mxu0 0.0
        %3447 = vmatpush1.msra.mxu0 0.0
        %3448 = vmatprep.subr.mxu0 0.0
        %3449 = vmatpush1.msra.mxu0 0.0
        %3450 = vmatprep.subr.mxu0 0.0
        %3451 = vmatpush1.msra.mxu0 0.0
        %3452 = vmatprep.subr.mxu0 0.0
        %3453 = vmatpush1.msra.mxu0 0.0
        %3454 = vmatprep.subr.mxu0 0.0
        %3455 = vmatpush1.msra.mxu0 0.0
        %3456 = vmatprep.subr.mxu0 0.0
        %3457 = vmatpush1.msra.mxu0 0.0
        %3458 = vmatprep.subr.mxu0 0.0
        %3459 = vmatpush1.msra.mxu0 0.0
        %3460 = vmatprep.subr.mxu0 0.0
        %3461 = vmatpush1.msra.mxu0 0.0
        %3462 = vmatprep.subr.mxu0 0.0
        %3463 = vmatpush1.msra.mxu0 0.0
        %3464 = vmatprep.subr.mxu0 0.0
        %3465 = vmatpush1.msra.mxu0 0.0
        %3466 = vmatprep.subr.mxu0 0.0
        %3467 = vmatpush1.msra.mxu0 0.0
        %3468 = vmatprep.subr.mxu0 0.0
        %3469 = vmatpush1.msra.mxu0 0.0
        %3470 = vmatprep.subr.mxu0 0.0
        %3471 = vmatpush1.msra.mxu0 0.0
        %3472 = vmatprep.subr.mxu0 0.0
        %3473 = vmatpush1.msra.mxu0 0.0
        %3474 = vmatprep.subr.mxu0 0.0
        %3475 = vmatpush1.msra.mxu0 0.0
        %3476 = vmatprep.subr.mxu0 0.0
        %3477 = vmatpush1.msra.mxu0 0.0
        %3478 = vmatprep.subr.mxu0 0.0
        %3479 = vmatpush1.msra.mxu0 0.0
        %3480 = vmatprep.subr.mxu0 0.0
        %3481 = vmatpush1.msra.mxu0 0.0
        %3482 = vmatprep.subr.mxu0 0.0
        %3483 = vmatpush1.msra.mxu0 0.0
        %3484 = vmatprep.subr.mxu0 0.0
        %3485 = vmatpush1.msra.mxu0 0.0
        %3486 = vmatprep.subr.mxu0 0.0
        %3487 = vmatpush1.msra.mxu0 0.0
        %3488 = vmatprep.subr.mxu0 0.0
        %3489 = vmatpush1.msra.mxu0 0.0
        %3490 = vmatprep.subr.mxu0 0.0
        %3491 = vmatpush1.msra.mxu0 0.0
        %3492 = vmatprep.subr.mxu0 0.0
        %3493 = vmatpush1.msra.mxu0 0.0
        %3494 = vmatprep.subr.mxu0 0.0
        %3495 = vmatpush1.msra.mxu0 0.0
        %3496 = vmatprep.subr.mxu0 0.0
        %3497 = vmatpush1.msra.mxu0 0.0
        %3498 = vmatprep.mubr.f32.mxu0 0.0
        %3499 = vmatmul.mubr.f32.gmra.mrb[0].mxu0 %v3432
        %v3500 = vpop.f32.mrb[0].mxu0
        %v3501 = vadd.f32 0.0, %v3500
        %v3502 = vpop.f32.mrb[0].mxu0
        %3503 = vdwg.mxu0
        %v3504 = vld [vmem:[#allocation17 + $0x1] sm:$0x1]
        %v3505 = vlaneseq
        %v3506 = vshrl.u32 %v3505, 7
        %v3507 = vsub.s32 0, %v3506
        %v3508 = vrot.slane %v3504, %v3507
        %v3509 = vmul.f32 %v3501, %v3508
        %v3510 = vadd.f32 %v3428, %v3509
        %s3511 = scalar_lea.vmem [#allocation16], 16
        %v3512 = vld [vmem:[%s3511] sm:$0xff]
        %v3514 = vsel %vm844, %v3512, 0
        %3516 = vmatprep.subr.mxu0 0.0
        %3517 = vmatpush1.msra.mxu0 %v3347
        %3518 = vmatprep.subr.mxu0 0.0
        %3519 = vmatpush1.msra.mxu0 0.0
        %3520 = vmatprep.subr.mxu0 0.0
        %3521 = vmatpush1.msra.mxu0 0.0
        %3522 = vmatprep.subr.mxu0 0.0
        %3523 = vmatpush1.msra.mxu0 0.0
        %3524 = vmatprep.subr.mxu0 0.0
        %3525 = vmatpush1.msra.mxu0 0.0
        %3526 = vmatprep.subr.mxu0 0.0
        %3527 = vmatpush1.msra.mxu0 0.0
        %3528 = vmatprep.subr.mxu0 0.0
        %3529 = vmatpush1.msra.mxu0 0.0
        %3530 = vmatprep.subr.mxu0 0.0
        %3531 = vmatpush1.msra.mxu0 0.0
        %3532 = vmatprep.subr.mxu0 0.0
        %3533 = vmatpush1.msra.mxu0 0.0
        %3534 = vmatprep.subr.mxu0 0.0
        %3535 = vmatpush1.msra.mxu0 0.0
        %3536 = vmatprep.subr.mxu0 0.0
        %3537 = vmatpush1.msra.mxu0 0.0
        %3538 = vmatprep.subr.mxu0 0.0
        %3539 = vmatpush1.msra.mxu0 0.0
        %3540 = vmatprep.subr.mxu0 0.0
        %3541 = vmatpush1.msra.mxu0 0.0
        %3542 = vmatprep.subr.mxu0 0.0
        %3543 = vmatpush1.msra.mxu0 0.0
        %3544 = vmatprep.subr.mxu0 0.0
        %3545 = vmatpush1.msra.mxu0 0.0
        %3546 = vmatprep.subr.mxu0 0.0
        %3547 = vmatpush1.msra.mxu0 0.0
        %3548 = vmatprep.subr.mxu0 0.0
        %3549 = vmatpush1.msra.mxu0 0.0
        %3550 = vmatprep.subr.mxu0 0.0
        %3551 = vmatpush1.msra.mxu0 0.0
        %3552 = vmatprep.subr.mxu0 0.0
        %3553 = vmatpush1.msra.mxu0 0.0
        %3554 = vmatprep.subr.mxu0 0.0
        %3555 = vmatpush1.msra.mxu0 0.0
        %3556 = vmatprep.subr.mxu0 0.0
        %3557 = vmatpush1.msra.mxu0 0.0
        %3558 = vmatprep.subr.mxu0 0.0
        %3559 = vmatpush1.msra.mxu0 0.0
        %3560 = vmatprep.subr.mxu0 0.0
        %3561 = vmatpush1.msra.mxu0 0.0
        %3562 = vmatprep.subr.mxu0 0.0
        %3563 = vmatpush1.msra.mxu0 0.0
        %3564 = vmatprep.subr.mxu0 0.0
        %3565 = vmatpush1.msra.mxu0 0.0
        %3566 = vmatprep.subr.mxu0 0.0
        %3567 = vmatpush1.msra.mxu0 0.0
        %3568 = vmatprep.subr.mxu0 0.0
        %3569 = vmatpush1.msra.mxu0 0.0
        %3570 = vmatprep.subr.mxu0 0.0
        %3571 = vmatpush1.msra.mxu0 0.0
        %3572 = vmatprep.subr.mxu0 0.0
        %3573 = vmatpush1.msra.mxu0 0.0
        %3574 = vmatprep.subr.mxu0 0.0
        %3575 = vmatpush1.msra.mxu0 0.0
        %3576 = vmatprep.subr.mxu0 0.0
        %3577 = vmatpush1.msra.mxu0 0.0
        %3578 = vmatprep.subr.mxu0 0.0
        %3579 = vmatpush1.msra.mxu0 0.0
        %3580 = vmatprep.mubr.f32.mxu0 0.0
        %3581 = vmatmul.mubr.f32.gmra.mrb[0].mxu0 %v3514
        %v3582 = vpop.f32.mrb[0].mxu0
        %v3583 = vadd.f32 0.0, %v3582
        %v3584 = vpop.f32.mrb[0].mxu0
        %3585 = vdwg.mxu0
        %v3586 = vld [vmem:[#allocation17 + $0x2] sm:$0x1]
        %v3587 = vlaneseq
        %v3588 = vshrl.u32 %v3587, 7
        %v3589 = vsub.s32 0, %v3588
        %v3590 = vrot.slane %v3586, %v3589
        %v3591 = vmul.f32 %v3583, %v3590
        %v3592 = vadd.f32 %v3510, %v3591
        %v3593 = vld [vmem:[%s18] sm:$0x1]
        %v3595 = vlaneseq
        %v3596 = vshrl.u32 %v3595, 7
        %v3597 = vsub.s32 0, %v3596
        %v3598 = vrot.slane %v3593, %v3597
        %v3600 = vadd.f32 %v3592, %v3598
        %v3601 = vld [vmem:[%s19] sm:$0xff]
        %v3602 = vld [vmem:[%s19 + $0x8] sm:$0xff]
        %v3603 = vld [vmem:[%s19 + $0x10] sm:$0xff]
        %v3604 = vld [vmem:[%s19 + $0x18] sm:$0xff]
        %v3605 = vld [vmem:[%s19 + $0x20] sm:$0xff]
        %v3606 = vld [vmem:[%s19 + $0x28] sm:$0xff]
        %v3607 = vld [vmem:[%s19 + $0x30] sm:$0xff]
        %v3608 = vld [vmem:[%s19 + $0x38] sm:$0xff]
        %v3609 = vld [vmem:[%s19 + $0x40] sm:$0xff]
        %v3610 = vld [vmem:[%s19 + $0x48] sm:$0xff]
        %v3611 = vld [vmem:[%s19 + $0x50] sm:$0xff]
        %v3612 = vld [vmem:[%s19 + $0x58] sm:$0xff]
        %v3613 = vld [vmem:[%s19 + $0x60] sm:$0xff]
        %v3614 = vld [vmem:[%s19 + $0x68] sm:$0xff]
        %v3615 = vld [vmem:[%s19 + $0x70] sm:$0xff]
        %v3616 = vld [vmem:[%s19 + $0x78] sm:$0xff]
        %v3617 = vld [vmem:[%s20] sm:$0x1]
        %v3618 = vlaneseq
        %v3619 = vshrl.u32 %v3618, 7
        %v3620 = vsub.s32 0, %v3619
        %v3621 = vrot.slane %v3617, %v3620
        %3622 = vmatprep.subr.mxu0 0.0
        %3623 = vmatpush1.msra.mxu0 %v3601
        %3624 = vmatprep.subr.mxu0 0.0
        %3625 = vmatpush1.msra.mxu0 %v3602
        %3626 = vmatprep.subr.mxu0 0.0
        %3627 = vmatpush1.msra.mxu0 %v3603
        %3628 = vmatprep.subr.mxu0 0.0
        %3629 = vmatpush1.msra.mxu0 %v3604
        %3630 = vmatprep.subr.mxu0 0.0
        %3631 = vmatpush1.msra.mxu0 %v3605
        %3632 = vmatprep.subr.mxu0 0.0
        %3633 = vmatpush1.msra.mxu0 %v3606
        %3634 = vmatprep.subr.mxu0 0.0
        %3635 = vmatpush1.msra.mxu0 %v3607
        %3636 = vmatprep.subr.mxu0 0.0
        %3637 = vmatpush1.msra.mxu0 %v3608
        %3638 = vmatprep.subr.mxu0 0.0
        %3639 = vmatpush1.msra.mxu0 %v3609
        %3640 = vmatprep.subr.mxu0 0.0
        %3641 = vmatpush1.msra.mxu0 %v3610
        %3642 = vmatprep.subr.mxu0 0.0
        %3643 = vmatpush1.msra.mxu0 %v3611
        %3644 = vmatprep.subr.mxu0 0.0
        %3645 = vmatpush1.msra.mxu0 %v3612
        %3646 = vmatprep.subr.mxu0 0.0
        %3647 = vmatpush1.msra.mxu0 %v3613
        %3648 = vmatprep.subr.mxu0 0.0
        %3649 = vmatpush1.msra.mxu0 %v3614
        %3650 = vmatprep.subr.mxu0 0.0
        %3651 = vmatpush1.msra.mxu0 %v3615
        %3652 = vmatprep.subr.mxu0 0.0
        %3653 = vmatpush1.msra.mxu0 %v3616
        %3654 = vmatprep.subr.mxu0 0.0
        %3655 = vmatpush1.msra.mxu0 0.0
        %3656 = vmatprep.subr.mxu0 0.0
        %3657 = vmatpush1.msra.mxu0 0.0
        %3658 = vmatprep.subr.mxu0 0.0
        %3659 = vmatpush1.msra.mxu0 0.0
        %3660 = vmatprep.subr.mxu0 0.0
        %3661 = vmatpush1.msra.mxu0 0.0
        %3662 = vmatprep.subr.mxu0 0.0
        %3663 = vmatpush1.msra.mxu0 0.0
        %3664 = vmatprep.subr.mxu0 0.0
        %3665 = vmatpush1.msra.mxu0 0.0
        %3666 = vmatprep.subr.mxu0 0.0
        %3667 = vmatpush1.msra.mxu0 0.0
        %3668 = vmatprep.subr.mxu0 0.0
        %3669 = vmatpush1.msra.mxu0 0.0
        %3670 = vmatprep.subr.mxu0 0.0
        %3671 = vmatpush1.msra.mxu0 0.0
        %3672 = vmatprep.subr.mxu0 0.0
        %3673 = vmatpush1.msra.mxu0 0.0
        %3674 = vmatprep.subr.mxu0 0.0
        %3675 = vmatpush1.msra.mxu0 0.0
        %3676 = vmatprep.subr.mxu0 0.0
        %3677 = vmatpush1.msra.mxu0 0.0
        %3678 = vmatprep.subr.mxu0 0.0
        %3679 = vmatpush1.msra.mxu0 0.0
        %3680 = vmatprep.subr.mxu0 0.0
        %3681 = vmatpush1.msra.mxu0 0.0
        %3682 = vmatprep.subr.mxu0 0.0
        %3683 = vmatpush1.msra.mxu0 0.0
        %3684 = vmatprep.subr.mxu0 0.0
        %3685 = vmatpush1.msra.mxu0 0.0
        %3686 = vmatprep.mubr.f32.mxu0 0.0
        %3687 = vmatmul.mubr.f32.gmra.mrb[0].mxu0 %v3600
        %v3688 = vpop.f32.mrb[0].mxu0
        %v3689 = vadd.f32 %v3621, %v3688
        %v3690 = vpop.f32.mrb[0].mxu0
        %3691 = vdwg.mxu0
        %s3692 = scalar_lea.vmem %s19, 128
        %v3693 = vld [vmem:[%s3692] sm:$0xff]
        %v3694 = vld [vmem:[%s3692 + $0x8] sm:$0xff]
        %v3695 = vld [vmem:[%s3692 + $0x10] sm:$0xff]
        %v3696 = vld [vmem:[%s3692 + $0x18] sm:$0xff]
        %v3697 = vld [vmem:[%s3692 + $0x20] sm:$0xff]
        %v3698 = vld [vmem:[%s3692 + $0x28] sm:$0xff]
        %v3699 = vld [vmem:[%s3692 + $0x30] sm:$0xff]
        %v3700 = vld [vmem:[%s3692 + $0x38] sm:$0xff]
        %v3701 = vld [vmem:[%s3692 + $0x40] sm:$0xff]
        %v3702 = vld [vmem:[%s3692 + $0x48] sm:$0xff]
        %v3703 = vld [vmem:[%s3692 + $0x50] sm:$0xff]
        %v3704 = vld [vmem:[%s3692 + $0x58] sm:$0xff]
        %v3705 = vld [vmem:[%s3692 + $0x60] sm:$0xff]
        %v3706 = vld [vmem:[%s3692 + $0x68] sm:$0xff]
        %v3707 = vld [vmem:[%s3692 + $0x70] sm:$0xff]
        %v3708 = vld [vmem:[%s3692 + $0x78] sm:$0xff]
        %v3709 = vld [vmem:[%s20 + $0x1] sm:$0x1]
        %v3710 = vlaneseq
        %v3711 = vshrl.u32 %v3710, 7
        %v3712 = vsub.s32 0, %v3711
        %v3713 = vrot.slane %v3709, %v3712
        %3714 = vmatprep.subr.mxu0 0.0
        %3715 = vmatpush1.msra.mxu0 %v3693
        %3716 = vmatprep.subr.mxu0 0.0
        %3717 = vmatpush1.msra.mxu0 %v3694
        %3718 = vmatprep.subr.mxu0 0.0
        %3719 = vmatpush1.msra.mxu0 %v3695
        %3720 = vmatprep.subr.mxu0 0.0
        %3721 = vmatpush1.msra.mxu0 %v3696
        %3722 = vmatprep.subr.mxu0 0.0
        %3723 = vmatpush1.msra.mxu0 %v3697
        %3724 = vmatprep.subr.mxu0 0.0
        %3725 = vmatpush1.msra.mxu0 %v3698
        %3726 = vmatprep.subr.mxu0 0.0
        %3727 = vmatpush1.msra.mxu0 %v3699
        %3728 = vmatprep.subr.mxu0 0.0
        %3729 = vmatpush1.msra.mxu0 %v3700
        %3730 = vmatprep.subr.mxu0 0.0
        %3731 = vmatpush1.msra.mxu0 %v3701
        %3732 = vmatprep.subr.mxu0 0.0
        %3733 = vmatpush1.msra.mxu0 %v3702
        %3734 = vmatprep.subr.mxu0 0.0
        %3735 = vmatpush1.msra.mxu0 %v3703
        %3736 = vmatprep.subr.mxu0 0.0
        %3737 = vmatpush1.msra.mxu0 %v3704
        %3738 = vmatprep.subr.mxu0 0.0
        %3739 = vmatpush1.msra.mxu0 %v3705
        %3740 = vmatprep.subr.mxu0 0.0
        %3741 = vmatpush1.msra.mxu0 %v3706
        %3742 = vmatprep.subr.mxu0 0.0
        %3743 = vmatpush1.msra.mxu0 %v3707
        %3744 = vmatprep.subr.mxu0 0.0
        %3745 = vmatpush1.msra.mxu0 %v3708
        %3746 = vmatprep.subr.mxu0 0.0
        %3747 = vmatpush1.msra.mxu0 0.0
        %3748 = vmatprep.subr.mxu0 0.0
        %3749 = vmatpush1.msra.mxu0 0.0
        %3750 = vmatprep.subr.mxu0 0.0
        %3751 = vmatpush1.msra.mxu0 0.0
        %3752 = vmatprep.subr.mxu0 0.0
        %3753 = vmatpush1.msra.mxu0 0.0
        %3754 = vmatprep.subr.mxu0 0.0
        %3755 = vmatpush1.msra.mxu0 0.0
        %3756 = vmatprep.subr.mxu0 0.0
        %3757 = vmatpush1.msra.mxu0 0.0
        %3758 = vmatprep.subr.mxu0 0.0
        %3759 = vmatpush1.msra.mxu0 0.0
        %3760 = vmatprep.subr.mxu0 0.0
        %3761 = vmatpush1.msra.mxu0 0.0
        %3762 = vmatprep.subr.mxu0 0.0
        %3763 = vmatpush1.msra.mxu0 0.0
        %3764 = vmatprep.subr.mxu0 0.0
        %3765 = vmatpush1.msra.mxu0 0.0
        %3766 = vmatprep.subr.mxu0 0.0
        %3767 = vmatpush1.msra.mxu0 0.0
        %3768 = vmatprep.subr.mxu0 0.0
        %3769 = vmatpush1.msra.mxu0 0.0
        %3770 = vmatprep.subr.mxu0 0.0
        %3771 = vmatpush1.msra.mxu0 0.0
        %3772 = vmatprep.subr.mxu0 0.0
        %3773 = vmatpush1.msra.mxu0 0.0
        %3774 = vmatprep.subr.mxu0 0.0
        %3775 = vmatpush1.msra.mxu0 0.0
        %3776 = vmatprep.subr.mxu0 0.0
        %3777 = vmatpush1.msra.mxu0 0.0
        %3778 = vmatprep.mubr.f32.mxu0 0.0
        %3779 = vmatmul.mubr.f32.gmra.mrb[0].mxu0 %v3600
        %v3780 = vpop.f32.mrb[0].mxu0
        %v3781 = vadd.f32 %v3713, %v3780
        %v3782 = vpop.f32.mrb[0].mxu0
        %3783 = vdwg.mxu0
        %v3784 = vxor.u32 %v3781, 2147483648
        %v3785 = vmul.f32 %v3784, 1.442695
        %v3786 = vpow.pop %v3785
        %v3787 = vadd.f32 %v3786, 1.0
        %v3788 = vrcp.pop %v3787
        %v3789 = vmul.f32 1.0, %v3788
        %v3790 = vmul.f32 %v3689, %v3789
        %v3791 = vadd.f32 %v826, %v3790
        %v3792 = vld [vmem:[%s5 + $0x2] sm:$0x1]
        %v3793 = vld [vmem:[#allocation5 + $0x2] sm:$0x1]
        %3794 = vmatprep.subr.mxu0 0.0
        %3795 = vmatpush1.msra.mxu0 %v827
        %3796 = vmatprep.subr.mxu0 0.0
        %3797 = vmatpush1.msra.mxu0 %v828
        %3798 = vmatprep.subr.mxu0 0.0
        %3799 = vmatpush1.msra.mxu0 %v829
        %3800 = vmatprep.subr.mxu0 0.0
        %3801 = vmatpush1.msra.mxu0 %v830
        %3802 = vmatprep.subr.mxu0 0.0
        %3803 = vmatpush1.msra.mxu0 %v831
        %3804 = vmatprep.subr.mxu0 0.0
        %3805 = vmatpush1.msra.mxu0 %v832
        %3806 = vmatprep.subr.mxu0 0.0
        %3807 = vmatpush1.msra.mxu0 %v833
        %3808 = vmatprep.subr.mxu0 0.0
        %3809 = vmatpush1.msra.mxu0 %v834
        %3810 = vmatprep.subr.mxu0 0.0
        %3811 = vmatpush1.msra.mxu0 %v835
        %3812 = vmatprep.subr.mxu0 0.0
        %3813 = vmatpush1.msra.mxu0 %v836
        %3814 = vmatprep.subr.mxu0 0.0
        %3815 = vmatpush1.msra.mxu0 %v837
        %3816 = vmatprep.subr.mxu0 0.0
        %3817 = vmatpush1.msra.mxu0 %v838
        %3818 = vmatprep.subr.mxu0 0.0
        %3819 = vmatpush1.msra.mxu0 %v839
        %3820 = vmatprep.subr.mxu0 0.0
        %3821 = vmatpush1.msra.mxu0 %v840
        %3822 = vmatprep.subr.mxu0 0.0
        %3823 = vmatpush1.msra.mxu0 %v841
        %3824 = vmatprep.subr.mxu0 0.0
        %3825 = vmatpush1.msra.mxu0 %v842
        %3826 = vmatprep.subr.mxu0 0.0
        %3827 = vmatpush1.msra.mxu0 0.0
        %3828 = vmatprep.subr.mxu0 0.0
        %3829 = vmatpush1.msra.mxu0 0.0
        %3830 = vmatprep.subr.mxu0 0.0
        %3831 = vmatpush1.msra.mxu0 0.0
        %3832 = vmatprep.subr.mxu0 0.0
        %3833 = vmatpush1.msra.mxu0 0.0
        %3834 = vmatprep.subr.mxu0 0.0
        %3835 = vmatpush1.msra.mxu0 0.0
        %3836 = vmatprep.subr.mxu0 0.0
        %3837 = vmatpush1.msra.mxu0 0.0
        %3838 = vmatprep.subr.mxu0 0.0
        %3839 = vmatpush1.msra.mxu0 0.0
        %3840 = vmatprep.subr.mxu0 0.0
        %3841 = vmatpush1.msra.mxu0 0.0
        %3842 = vmatprep.subr.mxu0 0.0
        %3843 = vmatpush1.msra.mxu0 0.0
        %3844 = vmatprep.subr.mxu0 0.0
        %3845 = vmatpush1.msra.mxu0 0.0
        %3846 = vmatprep.subr.mxu0 0.0
        %3847 = vmatpush1.msra.mxu0 0.0
        %3848 = vmatprep.subr.mxu0 0.0
        %3849 = vmatpush1.msra.mxu0 0.0
        %3850 = vmatprep.subr.mxu0 0.0
        %3851 = vmatpush1.msra.mxu0 0.0
        %3852 = vmatprep.subr.mxu0 0.0
        %3853 = vmatpush1.msra.mxu0 0.0
        %3854 = vmatprep.subr.mxu0 0.0
        %3855 = vmatpush1.msra.mxu0 0.0
        %3856 = vmatprep.subr.mxu0 0.0
        %3857 = vmatpush1.msra.mxu0 0.0
        %3858 = vmatprep.mubr.f32.mxu0 0.0
        %3859 = vmatmul.mubr.f32.gmra.mrb[0].mxu0 %v3791
        %v3860 = vpop.f32.mrb[0].mxu0
        %v3861 = vadd.f32 0.0, %v3860
        %v3862 = vpop.f32.mrb[0].mxu0
        %3863 = vdwg.mxu0
        %v3864 = vsub.f32 %v3791, %v3861
        %v3865 = vmul.f32 %v3864, %v3864
        %3866 = vmatprep.subr.mxu0 0.0
        %3867 = vmatpush1.msra.mxu0 %v827
        %3868 = vmatprep.subr.mxu0 0.0
        %3869 = vmatpush1.msra.mxu0 %v828
        %3870 = vmatprep.subr.mxu0 0.0
        %3871 = vmatpush1.msra.mxu0 %v829
        %3872 = vmatprep.subr.mxu0 0.0
        %3873 = vmatpush1.msra.mxu0 %v830
        %3874 = vmatprep.subr.mxu0 0.0
        %3875 = vmatpush1.msra.mxu0 %v831
        %3876 = vmatprep.subr.mxu0 0.0
        %3877 = vmatpush1.msra.mxu0 %v832
        %3878 = vmatprep.subr.mxu0 0.0
        %3879 = vmatpush1.msra.mxu0 %v833
        %3880 = vmatprep.subr.mxu0 0.0
        %3881 = vmatpush1.msra.mxu0 %v834
        %3882 = vmatprep.subr.mxu0 0.0
        %3883 = vmatpush1.msra.mxu0 %v835
        %3884 = vmatprep.subr.mxu0 0.0
        %3885 = vmatpush1.msra.mxu0 %v836
        %3886 = vmatprep.subr.mxu0 0.0
        %3887 = vmatpush1.msra.mxu0 %v837
        %3888 = vmatprep.subr.mxu0 0.0
        %3889 = vmatpush1.msra.mxu0 %v838
        %3890 = vmatprep.subr.mxu0 0.0
        %3891 = vmatpush1.msra.mxu0 %v839
        %3892 = vmatprep.subr.mxu0 0.0
        %3893 = vmatpush1.msra.mxu0 %v840
        %3894 = vmatprep.subr.mxu0 0.0
        %3895 = vmatpush1.msra.mxu0 %v841
        %3896 = vmatprep.subr.mxu0 0.0
        %3897 = vmatpush1.msra.mxu0 %v842
        %3898 = vmatprep.subr.mxu0 0.0
        %3899 = vmatpush1.msra.mxu0 0.0
        %3900 = vmatprep.subr.mxu0 0.0
        %3901 = vmatpush1.msra.mxu0 0.0
        %3902 = vmatprep.subr.mxu0 0.0
        %3903 = vmatpush1.msra.mxu0 0.0
        %3904 = vmatprep.subr.mxu0 0.0
        %3905 = vmatpush1.msra.mxu0 0.0
        %3906 = vmatprep.subr.mxu0 0.0
        %3907 = vmatpush1.msra.mxu0 0.0
        %3908 = vmatprep.subr.mxu0 0.0
        %3909 = vmatpush1.msra.mxu0 0.0
        %3910 = vmatprep.subr.mxu0 0.0
        %3911 = vmatpush1.msra.mxu0 0.0
        %3912 = vmatprep.subr.mxu0 0.0
        %3913 = vmatpush1.msra.mxu0 0.0
        %3914 = vmatprep.subr.mxu0 0.0
        %3915 = vmatpush1.msra.mxu0 0.0
        %3916 = vmatprep.subr.mxu0 0.0
        %3917 = vmatpush1.msra.mxu0 0.0
        %3918 = vmatprep.subr.mxu0 0.0
        %3919 = vmatpush1.msra.mxu0 0.0
        %3920 = vmatprep.subr.mxu0 0.0
        %3921 = vmatpush1.msra.mxu0 0.0
        %3922 = vmatprep.subr.mxu0 0.0
        %3923 = vmatpush1.msra.mxu0 0.0
        %3924 = vmatprep.subr.mxu0 0.0
        %3925 = vmatpush1.msra.mxu0 0.0
        %3926 = vmatprep.subr.mxu0 0.0
        %3927 = vmatpush1.msra.mxu0 0.0
        %3928 = vmatprep.subr.mxu0 0.0
        %3929 = vmatpush1.msra.mxu0 0.0
        %3930 = vmatprep.mubr.f32.mxu0 0.0
        %3931 = vmatmul.mubr.f32.gmra.mrb[0].mxu0 %v3865
        %v3932 = vpop.f32.mrb[0].mxu0
        %v3933 = vadd.f32 1e-05, %v3932
        %v3934 = vpop.f32.mrb[0].mxu0
        %3935 = vdwg.mxu0
        %v3936 = vrsqrt.pop %v3933
        %v3937 = vmul.f32 %v3864, %v3936
        %v3938 = vlaneseq
        %v3939 = vshrl.u32 %v3938, 7
        %v3940 = vsub.s32 0, %v3939
        %v3941 = vrot.slane %v3792, %v3940
        %v3942 = vmul.f32 %v3937, %v3941
        %v3943 = vlaneseq
        %v3944 = vshrl.u32 %v3943, 7
        %v3945 = vsub.s32 0, %v3944
        %v3946 = vrot.slane %v3793, %v3945
        %v3947 = vadd.f32 %v3942, %v3946
        %3948 = vst [vmem:[%s814] sm:$0xff] %v3947
        %s3949 = sand.u32 %s500, 1
        %s3950 = scalar_lea.sflag [#allocation4], %s3949
        %s3951 = sand.u32 %s500, 1
        %s3952 = smul.addr %s3951, 8
        %s3953 = scalar_lea.vmem [#allocation19], %s3952
        %s3954 = sand.u32 %s526, 1
        %s3955 = scalar_lea.sflag [#allocation21], %s3954
        %s3956 = sand.u32 %s526, 1
        %s3957 = smul.addr %s3956, 4
        %s3958 = scalar_lea.vmem [#allocation20], %s3957
        // Predicated region
        $region145: #{tpu_custom_call.1} parent=103 // pred_check
          %p3959 = pneg %p510
        $region146: #{tpu_custom_call.1} parent=103 // pred_check_branch
          %3961 = sbr.rel (%p3959) target = $region148
        $region147: #{tpu_custom_call.1} parent=103 // pred_region
          %s3963 = ssub.s32 128, 128
          %3964 = vsyncadd %s3950, %s3963
          %s3965 = smul.addr %s46, 128
          %s3966 = scalar_lea.hbm %s21, %s3965
          %s3968 = sshll.u32 %s3953, 4
          %s3969 = int_to_ptr.vmem [resolvable:$true] %s3968
          %3971 = dma.vmem_to_hbm [thread:$0]  %s3969, 128, %s3966, %s3950
        $region148: #{tpu_custom_call.1} parent=103 // pred_fallthru
          _
        // Predicated region
        $region149: #{tpu_custom_call.1} parent=103 // pred_check
          %p3972 = pneg %p536
        $region150: #{tpu_custom_call.1} parent=103 // pred_check_branch
          %3974 = sbr.rel (%p3972) target = $region152
        $region151: #{tpu_custom_call.1} parent=103 // pred_region
          %s3976 = ssub.s32 64, 64
          %3977 = vsyncadd %s3955, %s3976
          %s3978 = smul.addr %s46, 64
          %s3979 = scalar_lea.hbm %s22, %s3978
          %s3981 = sshll.u32 %s3958, 4
          %s3982 = int_to_ptr.vmem [resolvable:$true] %s3981
          %3984 = dma.vmem_to_hbm [thread:$0]  %s3982, 64, %s3979, %s3955
        $region152: #{tpu_custom_call.1} parent=103 // pred_fallthru
          _
      $region104: #{tpu_custom_call.1} parent=5 // pred_fallthru
        _
      %p3985 = scmp.le.s32.totalorder 2, %s41
      // Predicated region
      $region153: #{tpu_custom_call.1} parent=5 // pred_check
        %p3986 = pneg %p3985
      $region154: #{tpu_custom_call.1} parent=5 // pred_check_branch
        %3988 = sbr.rel (%p3986) target = $region156
      $region155: #{tpu_custom_call.1} parent=5 // pred_region
        %s3989 = ssub.s32 %s41, 2
        // Predicated region
        $region157: #{tpu_custom_call.1} parent=155 // pred_check
          %p3990 = pneg %p516
        $region158: #{tpu_custom_call.1} parent=155 // pred_check_branch
          %3992 = sbr.rel (%p3990) target = $region160
        $region159: #{tpu_custom_call.1} parent=155 // pred_region
          %s3993 = sand.u32 %s501, 1
          %s3994 = scalar_lea.sflag [#allocation4], %s3993
          %s3995 = sand.u32 %s501, 1
          %s3996 = smul.addr %s3995, 8
          %s3997 = scalar_lea.vmem [#allocation19], %s3996
          %3998 = dma.done %s3994, 128
        $region160: #{tpu_custom_call.1} parent=155 // pred_fallthru
          _
        // Predicated region
        $region161: #{tpu_custom_call.1} parent=155 // pred_check
          %p3999 = pneg %p542
        $region162: #{tpu_custom_call.1} parent=155 // pred_check_branch
          %4001 = sbr.rel (%p3999) target = $region164
        $region163: #{tpu_custom_call.1} parent=155 // pred_region
          %s4002 = sand.u32 %s527, 1
          %s4003 = scalar_lea.sflag [#allocation21], %s4002
          %s4004 = sand.u32 %s527, 1
          %s4005 = smul.addr %s4004, 4
          %s4006 = scalar_lea.vmem [#allocation20], %s4005
          %4007 = dma.done %s4003, 64
        $region164: #{tpu_custom_call.1} parent=155 // pred_fallthru
          _
      $region156: #{tpu_custom_call.1} parent=5 // pred_fallthru
        _
    $region6: #{tpu_custom_call.1} parent=1 // loop_footer
      %s45 = sadd.s32 1, %s41
    $region7: #{tpu_custom_call.1} parent=1 // loop_footer_branch
      %40 = sbr.rel target = $region3
    $region8: #{tpu_custom_call.1} parent=1 // loop_exit
      _
    %4008 = vsyncpa [#allocation3], 1
    %s4009 = scalar_lea.sflag [#allocation3], 1
    %4010 = vsyncpa %s4009, 1
    %4011 = vsyncpa [#allocation6], 1
    %4012 = vsyncpa [#allocation9], 1
    %4013 = vsyncpa [#allocation12], 1
    %4014 = vsyncpa [#allocation15], 1
    %4015 = vsyncpa [#allocation18], 1
    %4016 = vsyncpa [#allocation4], 1
    %s4017 = scalar_lea.sflag [#allocation4], 1
    %4018 = vsyncpa %s4017, 1
    %4019 = vsyncpa [#allocation21], 1
    %s4020 = scalar_lea.sflag [#allocation21], 1
    %4021 = vsyncpa %s4020, 1

</llo_original>
